<compile_context>
chip_gen: v7x
topology: tpu7x:2x2x1
jax: 0.10.0
libtpu: 0.0.40
codegen_flags: <defaults>
</compile_context>

<pallas_src>
import jax
import jax.numpy as jnp
from jax.experimental import pallas as pl
from jax.experimental.pallas import tpu as pltpu

RATIO = 0.8          # TopKPooling ratio (module default)
GAT_SLOPE = 0.2      # GATv2Conv negative_slope default
NEG_BIG = -1e30


# ---------------------------------------------------------------------------
# Fused forward kernel
# ---------------------------------------------------------------------------
def _deep_hgnn_kernel(x_ref, adj_ref, onehot_ref, onehot_t_ref, same_ref,
                      invcnt_ref, ksched_ref,
                      w_gcn0_ref, b_gcn0_ref, w_gcn_ref, b_gcn_ref,
                      w_lr_ref, b_lr_ref, attbd_ref, b_gat_ref, w_pool_ref,
                      w_fc1_ref, b_fc1_ref, w_fc2_ref, b_fc2_ref,
                      y_ref):
    n = x_ref.shape[0]
    nb = onehot_ref.shape[0]
    hd = attbd_ref.shape[1]              # heads * per-head dim (packed lanes)
    heads = attbd_ref.shape[2]
    d = hd // heads                      # per-head output dim == hidden_dim
    num_pools = w_gcn_ref.shape[0]       # = num_layers - 1
    f32 = jnp.float32
    bf16 = jnp.bfloat16

    def eye_mat():
        r = jax.lax.broadcasted_iota(jnp.int32, (n, n), 0)
        c = jax.lax.broadcasted_iota(jnp.int32, (n, n), 1)
        return (r == c).astype(f32)

    def lt_mat():
        r = jax.lax.broadcasted_iota(jnp.int32, (n, n), 0)
        c = jax.lax.broadcasted_iota(jnp.int32, (n, n), 1)
        return (c < r).astype(f32)

    def to_row(col, eye):
        # Exact [n,1] -> [1,n]: each column of eye*col has a single nonzero,
        # so the sublane reduce reproduces col bit-exactly (needed for ties).
        return jnp.sum(eye * col, axis=0, keepdims=True)

    def gcn_relu(x_in, adj_in, w, bias, eye):
        # GCNConv (add_self_loops=True, symmetric norm) + ReLU:
        #   relu( D^-1/2 (A + I) D^-1/2 X W + b )
        adj_sl = adj_in + eye
        dinv = jax.lax.rsqrt(jnp.sum(adj_sl, axis=1, keepdims=True))
        h = jnp.dot(x_in.astype(bf16), w.astype(bf16),
                    preferred_element_type=f32)
        h = dinv * jnp.dot(adj_sl.astype(bf16), (dinv * h).astype(bf16),
                           preferred_element_type=f32) + bias
        return jnp.maximum(h, 0.0)

    # ----- convs[0] -----
    x0 = gcn_relu(x_ref[...], adj_ref[...], w_gcn0_ref[...], b_gcn0_ref[...],
                  eye_mat())

    def layer_body(li, carry):
        x, adj, valid_c, valid_r = carry
        eye = eye_mat()

        # ----- TopKPooling(hidden, ratio=0.8)  (f32 score / rank path) -----
        sc = jnp.tanh(jnp.sum(x * w_pool_ref[li], axis=1, keepdims=True))   # [n,1]
        sc_row = to_row(sc, eye)                                            # [1,n]
        gt = (sc_row > sc).astype(f32)                                      # sc[j] > sc[i]
        tie = (sc_row == sc).astype(f32) * lt_mat()                         # ties: smaller idx wins
        rank = jnp.sum(same_ref[...] * valid_r * (gt + tie),
                       axis=1, keepdims=True)                               # [n,1]
        keep_c = valid_c * (rank < ksched_ref[li]).astype(f32)              # top-k per graph
        keep_r = to_row(keep_c, eye)                                        # [1,n]
        x = x * sc * keep_c                                                 # x[perm] * tanh(score)
        adj = adj * keep_c * keep_r                                         # filter_adj

        # ----- GATv2Conv(hidden, hidden, heads, concat=False) + ReLU -----
        adj_sl = adj + eye                                                  # add_self_loops=True
        xlr = jnp.dot(x.astype(bf16), w_lr_ref[li].astype(bf16),
                      preferred_element_type=f32) + b_lr_ref[li]
        xl = xlr[:, :hd]                                                    # lin_l(x) (sources)
        xr = xlr[:, hd:]                                                    # lin_r(x) (targets)

        # packed heads: one [n, n, heads*d] slab at full lane width
        s = xr[:, None, :] + xl[None, :, :]                                 # [dst, src, hd]
        s = jnp.where(s >= 0, s, GAT_SLOPE * s)                             # LeakyReLU
        logit3 = jnp.dot(s.reshape(n * n, hd).astype(bf16),
                         attbd_ref[li].astype(bf16),
                         preferred_element_type=f32).reshape(n, n, heads)

        alphas, xls = [], []
        for h in range(heads):
            logit = jnp.sum(logit3[:, :, h:h + 1], axis=-1)                 # [n,n]
            masked = jnp.where(adj_sl > 0, logit, f32(NEG_BIG))
            m = jnp.max(masked, axis=1, keepdims=True)
            e = jnp.exp(masked - m) * adj_sl                                # exact zeros off-graph
            alpha = e * pl.reciprocal(jnp.sum(e, axis=1, keepdims=True),
                                      approx=True)
            alphas.append(alpha)
            xls.append(xl[:, h * d:(h + 1) * d])
        # fused head aggregation: one MXU matmul with K = heads*n
        alpha_cat = jnp.concatenate(alphas, axis=1)                         # [n, heads*n]
        xl_stack = jnp.concatenate(xls, axis=0)                             # [heads*n, d]
        acc = jnp.dot(alpha_cat.astype(bf16), xl_stack.astype(bf16),
                      preferred_element_type=f32)                           # sum over heads
        x = jnp.maximum(acc * (1.0 / heads) + b_gat_ref[li], 0.0)           # head mean + bias, ReLU

        # ----- convs[li + 1] -----
        x = gcn_relu(x, adj, w_gcn_ref[li], b_gcn_ref[li], eye)
        return (x, adj, keep_c, keep_r)

    init = (x0, adj_ref[...], jnp.ones((n, 1), f32), jnp.ones((1, n), f32))
    x, adj, valid_c, valid_r = jax.lax.fori_loop(0, num_pools, layer_body, init)

    # ----- readout: global mean + max + add pooling over surviving nodes -----
    oh_valid = onehot_ref[...] * valid_r                                    # [nb,n]
    add_pool = jnp.dot(oh_valid, x, preferred_element_type=f32)             # [nb,hid]
    mean_pool = add_pool * invcnt_ref[...]
    oh_t = onehot_t_ref[...]
    gmax = []
    for g in range(nb):
        mask_g = valid_c * oh_t[:, g:g + 1]                                 # [n,1]
        xg = jnp.where(mask_g > 0, x, f32(NEG_BIG))
        gmax.append(jnp.max(xg, axis=0, keepdims=True))                     # [1,hid]
    max_pool = jnp.concatenate(gmax, axis=0)                                # [nb,hid]
    pooled = mean_pool + max_pool + add_pool

    h1 = jnp.maximum(
        jnp.dot(pooled, w_fc1_ref[...], preferred_element_type=f32) + b_fc1_ref[...],
        0.0)
    y_ref[...] = jnp.dot(h1, w_fc2_ref[...], preferred_element_type=f32) + b_fc2_ref[...]


# ---------------------------------------------------------------------------
# Wrapper: precompute layer-invariant data, launch the single fused kernel
# ---------------------------------------------------------------------------
def deep_hgnn_forward(x, adj, onehot, params):
    """x: [N, in_dim]; adj: [N, N] dense symmetric 0/1 (no self loops);
    onehot: [B, N] graph-membership one-hot; params from make_params."""
    n = x.shape[0]
    nb = onehot.shape[0]
    assert n % 8 == 0, "node count must be a multiple of 8 (sublane tiling)"
    num_pools = params["w_gcn"].shape[0]
    out_dim = params["w_fc2"].shape[1]
    heads, hid = params["att"].shape[1], params["att"].shape[2]
    hd = heads * hid

    onehot_t = onehot.T                                        # [N,B]
    same = onehot_t @ onehot                                   # [N,N] 1 iff same graph

    # TopK keep-counts per graph are data independent: k_{t+1} = ceil(0.8 * k_t)
    counts = jnp.sum(onehot, axis=1)                           # [B]
    ks, c = [], counts
    for _ in range(num_pools):
        c = jnp.ceil(RATIO * c)
        ks.append(c)
    k_sched = jnp.stack(ks, axis=0)                            # [P,B]
    batch_idx = jnp.argmax(onehot, axis=0)                     # [N] graph id per node
    k_node_sched = k_sched[:, batch_idx][:, :, None]           # [P,N,1]
    inv_counts_final = (1.0 / jnp.maximum(c, 1.0))[:, None]    # [B,1]

    # Block-diagonal attention matrix for the packed-heads logit matmul:
    # att_bd[p, h*hid + d', h2] = att[p, h, d'] if h == h2 else 0.
    head_mask = (jnp.arange(hd)[:, None] // hid ==
                 jnp.arange(heads)[None, :]).astype(jnp.float32)            # [hd,heads]
    att_bd = params["att"].reshape(num_pools, hd)[:, :, None] * head_mask[None, :, :]

    args = (x, adj, onehot, onehot_t, same, inv_counts_final, k_node_sched,
            params["w_gcn0"], params["b_gcn0"], params["w_gcn"], params["b_gcn"],
            params["w_lr"], params["b_lr"], att_bd, params["b_gat"],
            params["w_pool"],
            params["w_fc1"], params["b_fc1"], params["w_fc2"], params["b_fc2"])

    return pl.pallas_call(
        _deep_hgnn_kernel,
        out_shape=jax.ShapeDtypeStruct((nb, out_dim), jnp.float32),
        in_specs=[pl.BlockSpec(memory_space=pltpu.MemorySpace.VMEM)] * len(args),
        out_specs=pl.BlockSpec(memory_space=pltpu.MemorySpace.VMEM),
        compiler_params=pltpu.CompilerParams(
            vmem_limit_bytes=56 * 1024 * 1024),
    )(*args)


forward = jax.jit(deep_hgnn_forward)


# ---------------------------------------------------------------------------
# Deterministic parameters matching DeepHGNN(input_dim, hidden_dim, output_dim)
# ---------------------------------------------------------------------------
def _glorot(key, shape):
    fan_in, fan_out = shape[-2], shape[-1]
    limit = (6.0 / (fan_in + fan_out)) ** 0.5
    return jax.random.uniform(key, shape, jnp.float32, -limit, limit)


def make_params(key, in_dim, hidden, out_dim, heads=4, num_layers=6):
    n_att = num_layers - 1
    keys = jax.random.split(key, 10)
    p = {}
    # GCNConv stack: convs[0]: in_dim -> hidden, convs[1..]: hidden -> hidden
    p["w_gcn0"] = _glorot(keys[0], (in_dim, hidden))
    p["b_gcn0"] = jnp.zeros((1, hidden), jnp.float32)
    p["w_gcn"] = _glorot(keys[1], (n_att, hidden, hidden))
    p["b_gcn"] = jnp.zeros((n_att, 1, hidden), jnp.float32)
    # GATv2Conv stack (heads, concat=False): merged lin_l | lin_r -> [hid, 2*heads*hid]
    wl = _glorot(keys[2], (n_att, hidden, heads * hidden))
    wr = _glorot(keys[3], (n_att, hidden, heads * hidden))
    p["w_lr"] = jnp.concatenate([wl, wr], axis=2)
    p["b_lr"] = jnp.zeros((n_att, 1, 2 * heads * hidden), jnp.float32)
    p["att"] = _glorot(keys[4], (n_att, heads, hidden))
    p["b_gat"] = jnp.zeros((n_att, 1, hidden), jnp.float32)
    # TopKPooling score vectors, pre-normalized (score = tanh(x . w / ||w||))
    w_pool = jax.random.normal(keys[5], (n_att, 1, hidden), jnp.float32)
    p["w_pool"] = w_pool / jnp.linalg.norm(w_pool, axis=-1, keepdims=True)
    # readout MLP: fc1 (hid -> hid//2), fc2 (hid//2 -> out)
    p["w_fc1"] = _glorot(keys[6], (hidden, hidden // 2))
    p["b_fc1"] = jnp.zeros((1, hidden // 2), jnp.float32)
    p["w_fc2"] = _glorot(keys[7], (hidden // 2, out_dim))
    p["b_fc2"] = jnp.zeros((1, out_dim), jnp.float32)
    return p


# TODO(synk): edge_attr is only threaded through TopKPooling in the reference
# module and never consumed by GCNConv/GATv2Conv (no edge_dim), so it is omitted.

if __name__ == "__main__":
    N, B = 16, 2                          # 16 nodes, 2 graphs of 8 nodes each
    IN_DIM, HID, OUT, HEADS, LAYERS = 16, 32, 4, 4, 6

    root = jax.random.PRNGKey(0)
    k_x, k_adj, k_par = jax.random.split(root, 3)

    x = jax.random.normal(k_x, (N, IN_DIM), jnp.float32)
    batch = jnp.concatenate([jnp.zeros(N // B, jnp.int32),
                             jnp.ones(N - N // B, jnp.int32)])
    onehot = (batch[None, :] == jnp.arange(B)[:, None]).astype(jnp.float32)  # [B,N]

    same_graph = batch[:, None] == batch[None, :]
    upper = jnp.triu(jax.random.uniform(k_adj, (N, N)) < 0.35, k=1)
    adj = ((upper | upper.T) & same_graph).astype(jnp.float32)               # symmetric, no self loops

    params = make_params(k_par, IN_DIM, HID, OUT, HEADS, LAYERS)

    y = forward(x, adj, onehot, params)
    jax.block_until_ready(y)
    assert y.shape == (B, OUT)
    assert bool(jnp.all(jnp.isfinite(y)))
    print("KERNEL_OK")
</pallas_src>

<mosaic_0001>
module attributes {stable_mosaic.version = 11 : i64} {
  func.func @_deep_hgnn_kernel(%arg0: memref<16x16xf32, #tpu.memory_space<vmem>>, %arg1: memref<16x16xf32, #tpu.memory_space<vmem>>, %arg2: memref<2x16xf32, #tpu.memory_space<vmem>>, %arg3: memref<16x2xf32, #tpu.memory_space<vmem>>, %arg4: memref<16x16xf32, #tpu.memory_space<vmem>>, %arg5: memref<2x1xf32, #tpu.memory_space<vmem>>, %arg6: memref<5x16x1xf32, #tpu.memory_space<vmem>>, %arg7: memref<16x32xf32, #tpu.memory_space<vmem>>, %arg8: memref<1x32xf32, #tpu.memory_space<vmem>>, %arg9: memref<5x32x32xf32, #tpu.memory_space<vmem>>, %arg10: memref<5x1x32xf32, #tpu.memory_space<vmem>>, %arg11: memref<5x32x256xf32, #tpu.memory_space<vmem>>, %arg12: memref<5x1x256xf32, #tpu.memory_space<vmem>>, %arg13: memref<5x128x4xf32, #tpu.memory_space<vmem>>, %arg14: memref<5x1x32xf32, #tpu.memory_space<vmem>>, %arg15: memref<5x1x32xf32, #tpu.memory_space<vmem>>, %arg16: memref<32x16xf32, #tpu.memory_space<vmem>>, %arg17: memref<1x16xf32, #tpu.memory_space<vmem>>, %arg18: memref<16x4xf32, #tpu.memory_space<vmem>>, %arg19: memref<1x4xf32, #tpu.memory_space<vmem>>, %arg20: memref<2x4xf32, #tpu.memory_space<vmem>>) attributes {dimension_semantics = [], scalar_prefetch = 0 : i64, scratch_operands = 0 : i64, tpu.core_type = #tpu.core_type<tc>} {
    %c0 = arith.constant 0 : index
    %c0_0 = arith.constant 0 : index
    %0 = vector.load %arg0[%c0, %c0_0] : memref<16x16xf32, #tpu.memory_space<vmem>>, vector<16x16xf32>
    %c0_1 = arith.constant 0 : index
    %c0_2 = arith.constant 0 : index
    %1 = vector.load %arg1[%c0_1, %c0_2] : memref<16x16xf32, #tpu.memory_space<vmem>>, vector<16x16xf32>
    %c0_3 = arith.constant 0 : index
    %c0_4 = arith.constant 0 : index
    %2 = vector.load %arg7[%c0_3, %c0_4] : memref<16x32xf32, #tpu.memory_space<vmem>>, vector<16x32xf32>
    %c0_5 = arith.constant 0 : index
    %c0_6 = arith.constant 0 : index
    %3 = vector.load %arg8[%c0_5, %c0_6] : memref<1x32xf32, #tpu.memory_space<vmem>>, vector<1x32xf32>
    %4 = tpu.iota {dimensions = array<i32: 0>} : vector<16x16xi32>
    %5 = tpu.iota {dimensions = array<i32: 1>} : vector<16x16xi32>
    %6 = arith.cmpi eq, %4, %5 : vector<16x16xi32>
    %7 = arith.extui %6 : vector<16x16xi1> to vector<16x16xi32>
    %8 = arith.sitofp %7 : vector<16x16xi32> to vector<16x16xf32>
    %9 = arith.addf %1, %8 : vector<16x16xf32>
    %cst = arith.constant dense<0.000000e+00> : vector<16xf32>
    %10 = vector.multi_reduction <add>, %9, %cst [1] : vector<16x16xf32> to vector<16xf32>
    %11 = vector.shape_cast %10 : vector<16xf32> to vector<16x1xf32>
    %12 = math.rsqrt %11 : vector<16x1xf32>
    %13 = arith.truncf %0 : vector<16x16xf32> to vector<16x16xbf16>
    %14 = arith.truncf %2 : vector<16x32xf32> to vector<16x32xbf16>
    %cst_7 = arith.constant dense<0.000000e+00> : vector<16x32xf32>
    %15 = tpu.matmul %13, %14, %cst_7 {dimension_numbers = #tpu.dot_dimension_numbers<[1], [0], [0], [1], [0, 0, 1, 1], [], []>} : vector<16x16xbf16>, vector<16x32xbf16>, vector<16x32xf32> -> vector<16x32xf32>
    %16 = arith.truncf %9 : vector<16x16xf32> to vector<16x16xbf16>
    %17 = vector.broadcast %12 : vector<16x1xf32> to vector<16x32xf32>
    %18 = arith.mulf %17, %15 : vector<16x32xf32>
    %19 = arith.truncf %18 : vector<16x32xf32> to vector<16x32xbf16>
    %cst_8 = arith.constant dense<0.000000e+00> : vector<16x32xf32>
    %20 = tpu.matmul %16, %19, %cst_8 {dimension_numbers = #tpu.dot_dimension_numbers<[1], [0], [0], [1], [0, 0, 1, 1], [], []>} : vector<16x16xbf16>, vector<16x32xbf16>, vector<16x32xf32> -> vector<16x32xf32>
    %21 = vector.broadcast %12 : vector<16x1xf32> to vector<16x32xf32>
    %22 = arith.mulf %21, %20 : vector<16x32xf32>
    %23 = vector.broadcast %3 : vector<1x32xf32> to vector<16x32xf32>
    %24 = arith.addf %22, %23 : vector<16x32xf32>
    %cst_9 = arith.constant 0.000000e+00 : f32
    %25 = vector.broadcast %cst_9 : f32 to vector<16x32xf32>
    %26 = arith.maximumf %24, %25 : vector<16x32xf32>
    %c0_10 = arith.constant 0 : index
    %c0_11 = arith.constant 0 : index
    %27 = vector.load %arg1[%c0_10, %c0_11] : memref<16x16xf32, #tpu.memory_space<vmem>>, vector<16x16xf32>
    %cst_12 = arith.constant 1.000000e+00 : f32
    %28 = vector.broadcast %cst_12 : f32 to vector<16x1xf32>
    %cst_13 = arith.constant 1.000000e+00 : f32
    %29 = vector.broadcast %cst_13 : f32 to vector<1x16xf32>
    %c0_i32 = arith.constant 0 : i32
    %c5_i32 = arith.constant 5 : i32
    %30 = arith.addi %c0_i32, %c5_i32 : i32
    %c1_i32 = arith.constant 1 : i32
    %31:4 = scf.for %arg21 = %c0_i32 to %30 step %c1_i32 iter_args(%arg22 = %26, %arg23 = %27, %arg24 = %28, %arg25 = %29) -> (vector<16x32xf32>, vector<16x16xf32>, vector<16x1xf32>, vector<1x16xf32>)  : i32 {
      %76 = tpu.iota {dimensions = array<i32: 0>} : vector<16x16xi32>
      %77 = tpu.iota {dimensions = array<i32: 1>} : vector<16x16xi32>
      %78 = arith.cmpi eq, %76, %77 : vector<16x16xi32>
      %79 = arith.extui %78 : vector<16x16xi1> to vector<16x16xi32>
      %80 = arith.sitofp %79 : vector<16x16xi32> to vector<16x16xf32>
      %81 = arith.index_cast %arg21 : i32 to index
      %c0_41 = arith.constant 0 : index
      %c0_42 = arith.constant 0 : index
      %82 = vector.load %arg15[%81, %c0_41, %c0_42] : memref<5x1x32xf32, #tpu.memory_space<vmem>>, vector<1x1x32xf32>
      %83 = vector.shape_cast %82 : vector<1x1x32xf32> to vector<1x32xf32>
      %84 = vector.broadcast %83 : vector<1x32xf32> to vector<16x32xf32>
      %85 = arith.mulf %arg22, %84 : vector<16x32xf32>
      %cst_43 = arith.constant dense<0.000000e+00> : vector<16xf32>
      %86 = vector.multi_reduction <add>, %85, %cst_43 [1] : vector<16x32xf32> to vector<16xf32>
      %87 = vector.shape_cast %86 : vector<16xf32> to vector<16x1xf32>
      %88 = math.tanh %87 : vector<16x1xf32>
      %89 = vector.broadcast %88 : vector<16x1xf32> to vector<16x16xf32>
      %90 = arith.mulf %80, %89 : vector<16x16xf32>
      %cst_44 = arith.constant dense<0.000000e+00> : vector<16xf32>
      %91 = vector.multi_reduction <add>, %90, %cst_44 [0] : vector<16x16xf32> to vector<16xf32>
      %92 = vector.shape_cast %91 : vector<16xf32> to vector<1x16xf32>
      %93 = vector.broadcast %92 : vector<1x16xf32> to vector<16x16xf32>
      %94 = vector.broadcast %88 : vector<16x1xf32> to vector<16x16xf32>
      %95 = arith.cmpf ogt, %93, %94 : vector<16x16xf32>
      %96 = arith.extui %95 : vector<16x16xi1> to vector<16x16xi32>
      %97 = arith.sitofp %96 : vector<16x16xi32> to vector<16x16xf32>
      %98 = vector.broadcast %92 : vector<1x16xf32> to vector<16x16xf32>
      %99 = vector.broadcast %88 : vector<16x1xf32> to vector<16x16xf32>
      %100 = arith.cmpf oeq, %98, %99 : vector<16x16xf32>
      %101 = arith.extui %100 : vector<16x16xi1> to vector<16x16xi32>
      %102 = arith.sitofp %101 : vector<16x16xi32> to vector<16x16xf32>
      %103 = tpu.iota {dimensions = array<i32: 0>} : vector<16x16xi32>
      %104 = tpu.iota {dimensions = array<i32: 1>} : vector<16x16xi32>
      %105 = arith.cmpi slt, %104, %103 : vector<16x16xi32>
      %106 = arith.extui %105 : vector<16x16xi1> to vector<16x16xi32>
      %107 = arith.sitofp %106 : vector<16x16xi32> to vector<16x16xf32>
      %108 = arith.mulf %102, %107 : vector<16x16xf32>
      %c0_45 = arith.constant 0 : index
      %c0_46 = arith.constant 0 : index
      %109 = vector.load %arg4[%c0_45, %c0_46] : memref<16x16xf32, #tpu.memory_space<vmem>>, vector<16x16xf32>
      %110 = vector.broadcast %arg25 : vector<1x16xf32> to vector<16x16xf32>
      %111 = arith.mulf %109, %110 : vector<16x16xf32>
      %112 = arith.addf %97, %108 : vector<16x16xf32>
      %113 = arith.mulf %111, %112 : vector<16x16xf32>
      %cst_47 = arith.constant dense<0.000000e+00> : vector<16xf32>
      %114 = vector.multi_reduction <add>, %113, %cst_47 [1] : vector<16x16xf32> to vector<16xf32>
      %115 = vector.shape_cast %114 : vector<16xf32> to vector<16x1xf32>
      %116 = arith.index_cast %arg21 : i32 to index
      %c0_48 = arith.constant 0 : index
      %c0_49 = arith.constant 0 : index
      %117 = vector.load %arg6[%116, %c0_48, %c0_49] : memref<5x16x1xf32, #tpu.memory_space<vmem>>, vector<1x16x1xf32>
      %118 = vector.shape_cast %117 : vector<1x16x1xf32> to vector<16x1xf32>
      %119 = arith.cmpf olt, %115, %118 : vector<16x1xf32>
      %120 = arith.extui %119 : vector<16x1xi1> to vector<16x1xi32>
      %121 = arith.sitofp %120 : vector<16x1xi32> to vector<16x1xf32>
      %122 = arith.mulf %arg24, %121 : vector<16x1xf32>
      %123 = vector.broadcast %122 : vector<16x1xf32> to vector<16x16xf32>
      %124 = arith.mulf %80, %123 : vector<16x16xf32>
      %cst_50 = arith.constant dense<0.000000e+00> : vector<16xf32>
      %125 = vector.multi_reduction <add>, %124, %cst_50 [0] : vector<16x16xf32> to vector<16xf32>
      %126 = vector.shape_cast %125 : vector<16xf32> to vector<1x16xf32>
      %127 = vector.broadcast %88 : vector<16x1xf32> to vector<16x32xf32>
      %128 = arith.mulf %arg22, %127 : vector<16x32xf32>
      %129 = vector.broadcast %122 : vector<16x1xf32> to vector<16x32xf32>
      %130 = arith.mulf %128, %129 : vector<16x32xf32>
      %131 = vector.broadcast %122 : vector<16x1xf32> to vector<16x16xf32>
      %132 = arith.mulf %arg23, %131 : vector<16x16xf32>
      %133 = vector.broadcast %126 : vector<1x16xf32> to vector<16x16xf32>
      %134 = arith.mulf %132, %133 : vector<16x16xf32>
      %135 = arith.addf %134, %80 : vector<16x16xf32>
      %136 = arith.truncf %130 : vector<16x32xf32> to vector<16x32xbf16>
      %137 = arith.index_cast %arg21 : i32 to index
      %c0_51 = arith.constant 0 : index
      %c0_52 = arith.constant 0 : index
      %138 = vector.load %arg11[%137, %c0_51, %c0_52] : memref<5x32x256xf32, #tpu.memory_space<vmem>>, vector<1x32x256xf32>
      %139 = vector.shape_cast %138 : vector<1x32x256xf32> to vector<32x256xf32>
      %140 = arith.truncf %139 : vector<32x256xf32> to vector<32x256xbf16>
      %cst_53 = arith.constant dense<0.000000e+00> : vector<16x256xf32>
      %141 = tpu.matmul %136, %140, %cst_53 {dimension_numbers = #tpu.dot_dimension_numbers<[1], [0], [0], [1], [0, 0, 1, 1], [], []>} : vector<16x32xbf16>, vector<32x256xbf16>, vector<16x256xf32> -> vector<16x256xf32>
      %142 = arith.index_cast %arg21 : i32 to index
      %c0_54 = arith.constant 0 : index
      %c0_55 = arith.constant 0 : index
      %143 = vector.load %arg12[%142, %c0_54, %c0_55] : memref<5x1x256xf32, #tpu.memory_space<vmem>>, vector<1x1x256xf32>
      %144 = vector.shape_cast %143 : vector<1x1x256xf32> to vector<1x256xf32>
      %145 = vector.broadcast %144 : vector<1x256xf32> to vector<16x256xf32>
      %146 = arith.addf %141, %145 : vector<16x256xf32>
      %147 = vector.extract_strided_slice %146 {offsets = [0, 0], sizes = [16, 128], strides = [1, 1]} : vector<16x256xf32> to vector<16x128xf32>
      %148 = vector.extract_strided_slice %146 {offsets = [0, 128], sizes = [16, 128], strides = [1, 1]} : vector<16x256xf32> to vector<16x128xf32>
      %149 = vector.shape_cast %148 : vector<16x128xf32> to vector<16x1x128xf32>
      %150 = vector.shape_cast %147 : vector<16x128xf32> to vector<1x16x128xf32>
      %151 = vector.broadcast %149 : vector<16x1x128xf32> to vector<16x16x128xf32>
      %152 = vector.broadcast %150 : vector<1x16x128xf32> to vector<16x16x128xf32>
      %153 = arith.addf %151, %152 : vector<16x16x128xf32>
      %cst_56 = arith.constant 0.000000e+00 : f32
      %154 = vector.broadcast %cst_56 : f32 to vector<16x16x128xf32>
      %155 = arith.cmpf oge, %153, %154 : vector<16x16x128xf32>
      %cst_57 = arith.constant 2.000000e-01 : f32
      %156 = vector.broadcast %cst_57 : f32 to vector<16x16x128xf32>
      %157 = arith.mulf %156, %153 : vector<16x16x128xf32>
      %158 = arith.select %155, %153, %157 : vector<16x16x128xi1>, vector<16x16x128xf32>
      %159 = vector.shape_cast %158 : vector<16x16x128xf32> to vector<256x128xf32>
      %160 = arith.truncf %159 : vector<256x128xf32> to vector<256x128xbf16>
      %161 = arith.index_cast %arg21 : i32 to index
      %c0_58 = arith.constant 0 : index
      %c0_59 = arith.constant 0 : index
      %162 = vector.load %arg13[%161, %c0_58, %c0_59] : memref<5x128x4xf32, #tpu.memory_space<vmem>>, vector<1x128x4xf32>
      %163 = vector.shape_cast %162 : vector<1x128x4xf32> to vector<128x4xf32>
      %164 = arith.truncf %163 : vector<128x4xf32> to vector<128x4xbf16>
      %cst_60 = arith.constant dense<0.000000e+00> : vector<256x4xf32>
      %165 = tpu.matmul %160, %164, %cst_60 {dimension_numbers = #tpu.dot_dimension_numbers<[1], [0], [0], [1], [0, 0, 1, 1], [], []>} : vector<256x128xbf16>, vector<128x4xbf16>, vector<256x4xf32> -> vector<256x4xf32>
      %166 = vector.shape_cast %165 : vector<256x4xf32> to vector<16x16x4xf32>
      %167 = vector.extract_strided_slice %166 {offsets = [0, 0, 0], sizes = [16, 16, 1], strides = [1, 1, 1]} : vector<16x16x4xf32> to vector<16x16x1xf32>
      %cst_61 = arith.constant dense<0.000000e+00> : vector<16x16xf32>
      %168 = vector.multi_reduction <add>, %167, %cst_61 [2] : vector<16x16x1xf32> to vector<16x16xf32>
      %cst_62 = arith.constant 0.000000e+00 : f32
      %169 = vector.broadcast %cst_62 : f32 to vector<16x16xf32>
      %170 = arith.cmpf ogt, %135, %169 : vector<16x16xf32>
      %cst_63 = arith.constant -1.000000e+30 : f32
      %171 = vector.broadcast %cst_63 : f32 to vector<16x16xf32>
      %172 = arith.select %170, %168, %171 : vector<16x16xi1>, vector<16x16xf32>
      %cst_64 = arith.constant dense<0xFF800000> : vector<16xf32>
      %173 = vector.multi_reduction <maximumf>, %172, %cst_64 [1] : vector<16x16xf32> to vector<16xf32>
      %174 = vector.shape_cast %173 : vector<16xf32> to vector<16x1xf32>
      %175 = vector.broadcast %174 : vector<16x1xf32> to vector<16x16xf32>
      %176 = arith.subf %172, %175 : vector<16x16xf32>
      %177 = math.exp %176 : vector<16x16xf32>
      %178 = arith.mulf %177, %135 : vector<16x16xf32>
      %cst_65 = arith.constant dense<0.000000e+00> : vector<16xf32>
      %179 = vector.multi_reduction <add>, %178, %cst_65 [1] : vector<16x16xf32> to vector<16xf32>
      %180 = vector.shape_cast %179 : vector<16xf32> to vector<16x1xf32>
      %181 = tpu.reciprocal %180 {approx = true} : vector<16x1xf32> -> vector<16x1xf32>
      %182 = vector.broadcast %181 : vector<16x1xf32> to vector<16x16xf32>
      %183 = arith.mulf %178, %182 : vector<16x16xf32>
      %184 = vector.extract_strided_slice %147 {offsets = [0, 0], sizes = [16, 32], strides = [1, 1]} : vector<16x128xf32> to vector<16x32xf32>
      %185 = vector.extract_strided_slice %166 {offsets = [0, 0, 1], sizes = [16, 16, 1], strides = [1, 1, 1]} : vector<16x16x4xf32> to vector<16x16x1xf32>
      %cst_66 = arith.constant dense<0.000000e+00> : vector<16x16xf32>
      %186 = vector.multi_reduction <add>, %185, %cst_66 [2] : vector<16x16x1xf32> to vector<16x16xf32>
      %cst_67 = arith.constant 0.000000e+00 : f32
      %187 = vector.broadcast %cst_67 : f32 to vector<16x16xf32>
      %188 = arith.cmpf ogt, %135, %187 : vector<16x16xf32>
      %cst_68 = arith.constant -1.000000e+30 : f32
      %189 = vector.broadcast %cst_68 : f32 to vector<16x16xf32>
      %190 = arith.select %188, %186, %189 : vector<16x16xi1>, vector<16x16xf32>
      %cst_69 = arith.constant dense<0xFF800000> : vector<16xf32>
      %191 = vector.multi_reduction <maximumf>, %190, %cst_69 [1] : vector<16x16xf32> to vector<16xf32>
      %192 = vector.shape_cast %191 : vector<16xf32> to vector<16x1xf32>
      %193 = vector.broadcast %192 : vector<16x1xf32> to vector<16x16xf32>
      %194 = arith.subf %190, %193 : vector<16x16xf32>
      %195 = math.exp %194 : vector<16x16xf32>
      %196 = arith.mulf %195, %135 : vector<16x16xf32>
      %cst_70 = arith.constant dense<0.000000e+00> : vector<16xf32>
      %197 = vector.multi_reduction <add>, %196, %cst_70 [1] : vector<16x16xf32> to vector<16xf32>
      %198 = vector.shape_cast %197 : vector<16xf32> to vector<16x1xf32>
      %199 = tpu.reciprocal %198 {approx = true} : vector<16x1xf32> -> vector<16x1xf32>
      %200 = vector.broadcast %199 : vector<16x1xf32> to vector<16x16xf32>
      %201 = arith.mulf %196, %200 : vector<16x16xf32>
      %202 = vector.extract_strided_slice %147 {offsets = [0, 32], sizes = [16, 32], strides = [1, 1]} : vector<16x128xf32> to vector<16x32xf32>
      %203 = vector.extract_strided_slice %166 {offsets = [0, 0, 2], sizes = [16, 16, 1], strides = [1, 1, 1]} : vector<16x16x4xf32> to vector<16x16x1xf32>
      %cst_71 = arith.constant dense<0.000000e+00> : vector<16x16xf32>
      %204 = vector.multi_reduction <add>, %203, %cst_71 [2] : vector<16x16x1xf32> to vector<16x16xf32>
      %cst_72 = arith.constant 0.000000e+00 : f32
      %205 = vector.broadcast %cst_72 : f32 to vector<16x16xf32>
      %206 = arith.cmpf ogt, %135, %205 : vector<16x16xf32>
      %cst_73 = arith.constant -1.000000e+30 : f32
      %207 = vector.broadcast %cst_73 : f32 to vector<16x16xf32>
      %208 = arith.select %206, %204, %207 : vector<16x16xi1>, vector<16x16xf32>
      %cst_74 = arith.constant dense<0xFF800000> : vector<16xf32>
      %209 = vector.multi_reduction <maximumf>, %208, %cst_74 [1] : vector<16x16xf32> to vector<16xf32>
      %210 = vector.shape_cast %209 : vector<16xf32> to vector<16x1xf32>
      %211 = vector.broadcast %210 : vector<16x1xf32> to vector<16x16xf32>
      %212 = arith.subf %208, %211 : vector<16x16xf32>
      %213 = math.exp %212 : vector<16x16xf32>
      %214 = arith.mulf %213, %135 : vector<16x16xf32>
      %cst_75 = arith.constant dense<0.000000e+00> : vector<16xf32>
      %215 = vector.multi_reduction <add>, %214, %cst_75 [1] : vector<16x16xf32> to vector<16xf32>
      %216 = vector.shape_cast %215 : vector<16xf32> to vector<16x1xf32>
      %217 = tpu.reciprocal %216 {approx = true} : vector<16x1xf32> -> vector<16x1xf32>
      %218 = vector.broadcast %217 : vector<16x1xf32> to vector<16x16xf32>
      %219 = arith.mulf %214, %218 : vector<16x16xf32>
      %220 = vector.extract_strided_slice %147 {offsets = [0, 64], sizes = [16, 32], strides = [1, 1]} : vector<16x128xf32> to vector<16x32xf32>
      %221 = vector.extract_strided_slice %166 {offsets = [0, 0, 3], sizes = [16, 16, 1], strides = [1, 1, 1]} : vector<16x16x4xf32> to vector<16x16x1xf32>
      %cst_76 = arith.constant dense<0.000000e+00> : vector<16x16xf32>
      %222 = vector.multi_reduction <add>, %221, %cst_76 [2] : vector<16x16x1xf32> to vector<16x16xf32>
      %cst_77 = arith.constant 0.000000e+00 : f32
      %223 = vector.broadcast %cst_77 : f32 to vector<16x16xf32>
      %224 = arith.cmpf ogt, %135, %223 : vector<16x16xf32>
      %cst_78 = arith.constant -1.000000e+30 : f32
      %225 = vector.broadcast %cst_78 : f32 to vector<16x16xf32>
      %226 = arith.select %224, %222, %225 : vector<16x16xi1>, vector<16x16xf32>
      %cst_79 = arith.constant dense<0xFF800000> : vector<16xf32>
      %227 = vector.multi_reduction <maximumf>, %226, %cst_79 [1] : vector<16x16xf32> to vector<16xf32>
      %228 = vector.shape_cast %227 : vector<16xf32> to vector<16x1xf32>
      %229 = vector.broadcast %228 : vector<16x1xf32> to vector<16x16xf32>
      %230 = arith.subf %226, %229 : vector<16x16xf32>
      %231 = math.exp %230 : vector<16x16xf32>
      %232 = arith.mulf %231, %135 : vector<16x16xf32>
      %cst_80 = arith.constant dense<0.000000e+00> : vector<16xf32>
      %233 = vector.multi_reduction <add>, %232, %cst_80 [1] : vector<16x16xf32> to vector<16xf32>
      %234 = vector.shape_cast %233 : vector<16xf32> to vector<16x1xf32>
      %235 = tpu.reciprocal %234 {approx = true} : vector<16x1xf32> -> vector<16x1xf32>
      %236 = vector.broadcast %235 : vector<16x1xf32> to vector<16x16xf32>
      %237 = arith.mulf %232, %236 : vector<16x16xf32>
      %238 = vector.extract_strided_slice %147 {offsets = [0, 96], sizes = [16, 32], strides = [1, 1]} : vector<16x128xf32> to vector<16x32xf32>
      %239 = tpu.concatenate %183, %201, %219, %237 in 1 : vector<16x16xf32>, vector<16x16xf32>, vector<16x16xf32>, vector<16x16xf32> -> vector<16x64xf32>
      %240 = tpu.concatenate %184, %202, %220, %238 in 0 : vector<16x32xf32>, vector<16x32xf32>, vector<16x32xf32>, vector<16x32xf32> -> vector<64x32xf32>
      %241 = arith.truncf %239 : vector<16x64xf32> to vector<16x64xbf16>
      %242 = arith.truncf %240 : vector<64x32xf32> to vector<64x32xbf16>
      %cst_81 = arith.constant dense<0.000000e+00> : vector<16x32xf32>
      %243 = tpu.matmul %241, %242, %cst_81 {dimension_numbers = #tpu.dot_dimension_numbers<[1], [0], [0], [1], [0, 0, 1, 1], [], []>} : vector<16x64xbf16>, vector<64x32xbf16>, vector<16x32xf32> -> vector<16x32xf32>
      %cst_82 = arith.constant 2.500000e-01 : f32
      %244 = vector.broadcast %cst_82 : f32 to vector<16x32xf32>
      %245 = arith.mulf %243, %244 : vector<16x32xf32>
      %246 = arith.index_cast %arg21 : i32 to index
      %c0_83 = arith.constant 0 : index
      %c0_84 = arith.constant 0 : index
      %247 = vector.load %arg14[%246, %c0_83, %c0_84] : memref<5x1x32xf32, #tpu.memory_space<vmem>>, vector<1x1x32xf32>
      %248 = vector.shape_cast %247 : vector<1x1x32xf32> to vector<1x32xf32>
      %249 = vector.broadcast %248 : vector<1x32xf32> to vector<16x32xf32>
      %250 = arith.addf %245, %249 : vector<16x32xf32>
      %cst_85 = arith.constant 0.000000e+00 : f32
      %251 = vector.broadcast %cst_85 : f32 to vector<16x32xf32>
      %252 = arith.maximumf %250, %251 : vector<16x32xf32>
      %253 = arith.index_cast %arg21 : i32 to index
      %c0_86 = arith.constant 0 : index
      %c0_87 = arith.constant 0 : index
      %254 = vector.load %arg9[%253, %c0_86, %c0_87] : memref<5x32x32xf32, #tpu.memory_space<vmem>>, vector<1x32x32xf32>
      %255 = vector.shape_cast %254 : vector<1x32x32xf32> to vector<32x32xf32>
      %256 = arith.index_cast %arg21 : i32 to index
      %c0_88 = arith.constant 0 : index
      %c0_89 = arith.constant 0 : index
      %257 = vector.load %arg10[%256, %c0_88, %c0_89] : memref<5x1x32xf32, #tpu.memory_space<vmem>>, vector<1x1x32xf32>
      %258 = vector.shape_cast %257 : vector<1x1x32xf32> to vector<1x32xf32>
      %259 = arith.addf %134, %80 : vector<16x16xf32>
      %cst_90 = arith.constant dense<0.000000e+00> : vector<16xf32>
      %260 = vector.multi_reduction <add>, %259, %cst_90 [1] : vector<16x16xf32> to vector<16xf32>
      %261 = vector.shape_cast %260 : vector<16xf32> to vector<16x1xf32>
      %262 = math.rsqrt %261 : vector<16x1xf32>
      %263 = arith.truncf %252 : vector<16x32xf32> to vector<16x32xbf16>
      %264 = arith.truncf %255 : vector<32x32xf32> to vector<32x32xbf16>
      %cst_91 = arith.constant dense<0.000000e+00> : vector<16x32xf32>
      %265 = tpu.matmul %263, %264, %cst_91 {dimension_numbers = #tpu.dot_dimension_numbers<[1], [0], [0], [1], [0, 0, 1, 1], [], []>} : vector<16x32xbf16>, vector<32x32xbf16>, vector<16x32xf32> -> vector<16x32xf32>
      %266 = arith.truncf %259 : vector<16x16xf32> to vector<16x16xbf16>
      %267 = vector.broadcast %262 : vector<16x1xf32> to vector<16x32xf32>
      %268 = arith.mulf %267, %265 : vector<16x32xf32>
      %269 = arith.truncf %268 : vector<16x32xf32> to vector<16x32xbf16>
      %cst_92 = arith.constant dense<0.000000e+00> : vector<16x32xf32>
      %270 = tpu.matmul %266, %269, %cst_92 {dimension_numbers = #tpu.dot_dimension_numbers<[1], [0], [0], [1], [0, 0, 1, 1], [], []>} : vector<16x16xbf16>, vector<16x32xbf16>, vector<16x32xf32> -> vector<16x32xf32>
      %271 = vector.broadcast %262 : vector<16x1xf32> to vector<16x32xf32>
      %272 = arith.mulf %271, %270 : vector<16x32xf32>
      %273 = vector.broadcast %258 : vector<1x32xf32> to vector<16x32xf32>
      %274 = arith.addf %272, %273 : vector<16x32xf32>
      %cst_93 = arith.constant 0.000000e+00 : f32
      %275 = vector.broadcast %cst_93 : f32 to vector<16x32xf32>
      %276 = arith.maximumf %274, %275 : vector<16x32xf32>
      scf.yield %276, %134, %122, %126 : vector<16x32xf32>, vector<16x16xf32>, vector<16x1xf32>, vector<1x16xf32>
    }
    %c5_i32_14 = arith.constant 5 : i32
    %c0_15 = arith.constant 0 : index
    %c0_16 = arith.constant 0 : index
    %32 = vector.load %arg2[%c0_15, %c0_16] : memref<2x16xf32, #tpu.memory_space<vmem>>, vector<2x16xf32>
    %33 = vector.broadcast %31#3 : vector<1x16xf32> to vector<2x16xf32>
    %34 = arith.mulf %32, %33 : vector<2x16xf32>
    %cst_17 = arith.constant dense<0.000000e+00> : vector<2x32xf32>
    %35 = tpu.matmul %34, %31#0, %cst_17 {dimension_numbers = #tpu.dot_dimension_numbers<[1], [0], [0], [1], [0, 0, 1, 1], [], []>} : vector<2x16xf32>, vector<16x32xf32>, vector<2x32xf32> -> vector<2x32xf32>
    %c0_18 = arith.constant 0 : index
    %c0_19 = arith.constant 0 : index
    %36 = vector.load %arg5[%c0_18, %c0_19] : memref<2x1xf32, #tpu.memory_space<vmem>>, vector<2x1xf32>
    %37 = vector.broadcast %36 : vector<2x1xf32> to vector<2x32xf32>
    %38 = arith.mulf %35, %37 : vector<2x32xf32>
    %c0_20 = arith.constant 0 : index
    %c0_21 = arith.constant 0 : index
    %39 = vector.load %arg3[%c0_20, %c0_21] : memref<16x2xf32, #tpu.memory_space<vmem>>, vector<16x2xf32>
    %40 = vector.extract_strided_slice %39 {offsets = [0, 0], sizes = [16, 1], strides = [1, 1]} : vector<16x2xf32> to vector<16x1xf32>
    %41 = arith.mulf %31#2, %40 : vector<16x1xf32>
    %cst_22 = arith.constant 0.000000e+00 : f32
    %42 = vector.broadcast %cst_22 : f32 to vector<16x1xf32>
    %43 = arith.cmpf ogt, %41, %42 : vector<16x1xf32>
    %cst_23 = arith.constant -1.000000e+30 : f32
    %44 = vector.shape_cast %43 : vector<16x1xi1> to vector<16x1xi1>
    %45 = vector.broadcast %44 : vector<16x1xi1> to vector<16x32xi1>
    %46 = vector.broadcast %cst_23 : f32 to vector<16x32xf32>
    %47 = arith.select %45, %31#0, %46 : vector<16x32xi1>, vector<16x32xf32>
    %cst_24 = arith.constant dense<0xFF800000> : vector<32xf32>
    %48 = vector.multi_reduction <maximumf>, %47, %cst_24 [0] : vector<16x32xf32> to vector<32xf32>
    %49 = vector.shape_cast %48 : vector<32xf32> to vector<1x32xf32>
    %50 = vector.extract_strided_slice %39 {offsets = [0, 1], sizes = [16, 1], strides = [1, 1]} : vector<16x2xf32> to vector<16x1xf32>
    %51 = arith.mulf %31#2, %50 : vector<16x1xf32>
    %cst_25 = arith.constant 0.000000e+00 : f32
    %52 = vector.broadcast %cst_25 : f32 to vector<16x1xf32>
    %53 = arith.cmpf ogt, %51, %52 : vector<16x1xf32>
    %cst_26 = arith.constant -1.000000e+30 : f32
    %54 = vector.shape_cast %53 : vector<16x1xi1> to vector<16x1xi1>
    %55 = vector.broadcast %54 : vector<16x1xi1> to vector<16x32xi1>
    %56 = vector.broadcast %cst_26 : f32 to vector<16x32xf32>
    %57 = arith.select %55, %31#0, %56 : vector<16x32xi1>, vector<16x32xf32>
    %cst_27 = arith.constant dense<0xFF800000> : vector<32xf32>
    %58 = vector.multi_reduction <maximumf>, %57, %cst_27 [0] : vector<16x32xf32> to vector<32xf32>
    %59 = vector.shape_cast %58 : vector<32xf32> to vector<1x32xf32>
    %60 = tpu.concatenate %49, %59 in 0 : vector<1x32xf32>, vector<1x32xf32> -> vector<2x32xf32>
    %61 = arith.addf %38, %60 : vector<2x32xf32>
    %62 = arith.addf %61, %35 : vector<2x32xf32>
    %c0_28 = arith.constant 0 : index
    %c0_29 = arith.constant 0 : index
    %63 = vector.load %arg16[%c0_28, %c0_29] : memref<32x16xf32, #tpu.memory_space<vmem>>, vector<32x16xf32>
    %cst_30 = arith.constant dense<0.000000e+00> : vector<2x16xf32>
    %64 = tpu.matmul %62, %63, %cst_30 {dimension_numbers = #tpu.dot_dimension_numbers<[1], [0], [0], [1], [0, 0, 1, 1], [], []>} : vector<2x32xf32>, vector<32x16xf32>, vector<2x16xf32> -> vector<2x16xf32>
    %c0_31 = arith.constant 0 : index
    %c0_32 = arith.constant 0 : index
    %65 = vector.load %arg17[%c0_31, %c0_32] : memref<1x16xf32, #tpu.memory_space<vmem>>, vector<1x16xf32>
    %66 = vector.broadcast %65 : vector<1x16xf32> to vector<2x16xf32>
    %67 = arith.addf %64, %66 : vector<2x16xf32>
    %cst_33 = arith.constant 0.000000e+00 : f32
    %68 = vector.broadcast %cst_33 : f32 to vector<2x16xf32>
    %69 = arith.maximumf %67, %68 : vector<2x16xf32>
    %c0_34 = arith.constant 0 : index
    %c0_35 = arith.constant 0 : index
    %70 = vector.load %arg18[%c0_34, %c0_35] : memref<16x4xf32, #tpu.memory_space<vmem>>, vector<16x4xf32>
    %cst_36 = arith.constant dense<0.000000e+00> : vector<2x4xf32>
    %71 = tpu.matmul %69, %70, %cst_36 {dimension_numbers = #tpu.dot_dimension_numbers<[1], [0], [0], [1], [0, 0, 1, 1], [], []>} : vector<2x16xf32>, vector<16x4xf32>, vector<2x4xf32> -> vector<2x4xf32>
    %c0_37 = arith.constant 0 : index
    %c0_38 = arith.constant 0 : index
    %72 = vector.load %arg19[%c0_37, %c0_38] : memref<1x4xf32, #tpu.memory_space<vmem>>, vector<1x4xf32>
    %73 = vector.broadcast %72 : vector<1x4xf32> to vector<2x4xf32>
    %74 = arith.addf %71, %73 : vector<2x4xf32>
    %c0_39 = arith.constant 0 : index
    %c0_40 = arith.constant 0 : index
    %75 = vector.load %arg20[%c0_39, %c0_40] : memref<2x4xf32, #tpu.memory_space<vmem>>, vector<2x4xf32>
    tpu.vector_store %arg20[%c0_39, %c0_40], %74 {strides = array<i32>} : memref<2x4xf32, #tpu.memory_space<vmem>>, vector<2x4xf32>,
    return
  }
}

</mosaic_0001>

<llo_original>
// kernel: mul.18
$region0: #{mul.18}
  %s0 = inlined_call_operand.vmem [shape: f32[5,4,32], index: 0, kind: input, shape index: {}]
  %s1 = inlined_call_operand.vmem [shape: f32[5,128], index: 1, kind: output, shape index: {}]
  $region1: #{mul.18} parent=0
    #allocation0 [shape = 'u8[20480]{0}', space=vmem, size = 0x5000, scoped, tag = 'scoped mem for input reshape']
    %s3 = sshllo.u32 0, 4
    %s4 = smul.addr 4, 4
    %s5 = scalar_lea.vmem %s0, %s4
    %v6 = vld [vmem:[%s5] sm:%s3]
    %s7 = scalar_lea.vmem [#allocation0], 32
    %8 = vst [vmem:[%s7] sm:%s3] %v6
    %s9 = smul.addr 4, 3
    %s10 = scalar_lea.vmem %s0, %s9
    %v11 = vld [vmem:[%s10] sm:%s3]
    %s12 = scalar_lea.vmem [#allocation0], 24
    %13 = vst [vmem:[%s12] sm:%s3] %v11
    %s14 = smul.addr 4, 2
    %s15 = scalar_lea.vmem %s0, %s14
    %v16 = vld [vmem:[%s15] sm:%s3]
    %s17 = scalar_lea.vmem [#allocation0], 16
    %18 = vst [vmem:[%s17] sm:%s3] %v16
    %s19 = scalar_lea.vmem %s0, 4
    %v20 = vld [vmem:[%s19] sm:%s3]
    %s21 = scalar_lea.vmem [#allocation0], 8
    %22 = vst [vmem:[%s21] sm:%s3] %v20
    %v23 = vld [vmem:[%s0] sm:%s3]
    %24 = vst [vmem:[#allocation0] sm:%s3] %v23
    %v25 = vld [vmem:[#allocation0] ss:$8 sm:$0xf]
    %s26 = scalar_lea.vmem [#allocation0], 28
    %v27 = vld [vmem:[%s26] sm:$0x10]
    %vm28 = vcmask 1044484
    %v29 = vsel %vm28, %v27, %v25
    %vm30 = vcmask 261120
    %31 = vst.msk [vmem:[%s1] sm:$0x1f] %vm30, %v29
    %s32 = scalar_lea.vmem [#allocation0], 3
    %v33 = vld [vmem:[%s32] ss:$8 sm:$0xf]
    %s34 = scalar_lea.vmem [#allocation0], 31
    %v35 = vld [vmem:[%s34] sm:$0x10]
    %vm36 = vcmask 1044484
    %v37 = vsel %vm36, %v35, %v33
    %38 = vrot.lane.b32.xlu0 %v37, 96
    %v39 = vpop.permute.xlu0 %38
    %vm40 = vcmask 1048320
    %41 = vst.msk [vmem:[%s1] sm:$0x1f] %vm40, %v39
    %s42 = scalar_lea.vmem [#allocation0], 2
    %v43 = vld [vmem:[%s42] ss:$8 sm:$0xf]
    %s44 = scalar_lea.vmem [#allocation0], 30
    %v45 = vld [vmem:[%s44] sm:$0x10]
    %vm46 = vcmask 1044484
    %v47 = vsel %vm46, %v45, %v43
    %48 = vrot.lane.b32.xlu0 %v47, 64
    %v49 = vpop.permute.xlu0 %48
    %vm50 = vcmask 785920
    %51 = vst.msk [vmem:[%s1] sm:$0x1f] %vm50, %v49
    %s52 = scalar_lea.vmem [#allocation0], 1
    %v53 = vld [vmem:[%s52] ss:$8 sm:$0xf]
    %s54 = scalar_lea.vmem [#allocation0], 29
    %v55 = vld [vmem:[%s54] sm:$0x10]
    %vm56 = vcmask 1044484
    %v57 = vsel %vm56, %v55, %v53
    %58 = vrot.lane.b32.xlu0 %v57, 32
    %v59 = vpop.permute.xlu0 %58
    %vm60 = vcmask 523520
    %61 = vst.msk [vmem:[%s1] sm:$0x1f] %vm60, %v59

// kernel: deep_hgnn_forward.1
$region0: #{deep_hgnn_forward.1}
  #allocation0 [shape = 'u32[]', space=smem, size = 0x4, offset = 0x4, fixed_abs, tag = 'smem constant byte address 0x4 - core index']
  #allocation1 [shape = 'u32[144,128]{1,0:T(1,128)}', space=vmem, size = 0x12000, scoped, tag = 'internal scratch']
  %s0 = inlined_call_operand.vmem [shape: f32[16,16], index: 0, kind: input, shape index: {}]
  %s1 = inlined_call_operand.vmem [shape: f32[16,16], index: 1, kind: input, shape index: {}]
  %s2 = inlined_call_operand.vmem [shape: f32[2,16], index: 2, kind: input, shape index: {}]
  %s3 = inlined_call_operand.vmem [shape: f32[16,2], index: 3, kind: input, shape index: {}]
  %s4 = inlined_call_operand.vmem [shape: f32[16,16], index: 4, kind: input, shape index: {}]
  %s5 = inlined_call_operand.vmem [shape: f32[2,1], index: 5, kind: input, shape index: {}]
  %s6 = inlined_call_operand.vmem [shape: f32[5,16,1], index: 6, kind: input, shape index: {}]
  %s7 = inlined_call_operand.vmem [shape: f32[16,32], index: 7, kind: input, shape index: {}]
  %s8 = inlined_call_operand.vmem [shape: f32[1,32], index: 8, kind: input, shape index: {}]
  %s9 = inlined_call_operand.vmem [shape: f32[5,32,32], index: 9, kind: input, shape index: {}]
  %s10 = inlined_call_operand.vmem [shape: f32[5,1,32], index: 10, kind: input, shape index: {}]
  %s11 = inlined_call_operand.vmem [shape: f32[5,32,256], index: 11, kind: input, shape index: {}]
  %s12 = inlined_call_operand.vmem [shape: f32[5,1,256], index: 12, kind: input, shape index: {}]
  %s13 = inlined_call_operand.vmem [shape: f32[5,128,4], index: 13, kind: input, shape index: {}]
  %s14 = inlined_call_operand.vmem [shape: f32[5,1,32], index: 14, kind: input, shape index: {}]
  %s15 = inlined_call_operand.vmem [shape: f32[5,1,32], index: 15, kind: input, shape index: {}]
  %s16 = inlined_call_operand.vmem [shape: f32[32,16], index: 16, kind: input, shape index: {}]
  %s17 = inlined_call_operand.vmem [shape: f32[1,16], index: 17, kind: input, shape index: {}]
  %s18 = inlined_call_operand.vmem [shape: f32[16,4], index: 18, kind: input, shape index: {}]
  %s19 = inlined_call_operand.vmem [shape: f32[1,4], index: 19, kind: input, shape index: {}]
  %s20 = inlined_call_operand.hbm [shape: f32[2,4], index: 20, kind: output, shape index: {}]
  %s21 = sld [smem:[#allocation0]]
  $region97: #{deep_hgnn_forward.1} parent=0
    _
  %s23 = ssub.s32 1, %s21
  %s24 = scalar_select 0, %s23, %s21
  $region1: #{deep_hgnn_forward.1} parent=0
    #allocation2 [shape = 'u8[1024]{0}', space=vmem, size = 0x400, scoped, tag = 'output window, operand 0, single buffered']
    #allocation3 [shape = 's32[1]{0}', space=sflag, size = 0x4, scoped, tag = 'scoped memory for deep_hgnn_forward.1']
    %25 = vsyncpa [#allocation3], 0
    // Predicated region
    $region2: #{deep_hgnn_forward.1} parent=1 // pred_check
      _
    $region3: #{deep_hgnn_forward.1} parent=1 // pred_check_branch
      %27 = sbr.rel (0) target = $region5
    $region4: #{deep_hgnn_forward.1} parent=1 // pred_region
      _
    $region5: #{deep_hgnn_forward.1} parent=1 // pred_fallthru
      _
    // Predicated region
    $region6: #{deep_hgnn_forward.1} parent=1 // pred_check
      _
    $region7: #{deep_hgnn_forward.1} parent=1 // pred_check_branch
      %29 = sbr.rel (0) target = $region9
    $region8: #{deep_hgnn_forward.1} parent=1 // pred_region
      _
    $region9: #{deep_hgnn_forward.1} parent=1 // pred_fallthru
      _
    // Predicated region
    $region10: #{deep_hgnn_forward.1} parent=1 // pred_check
      _
    $region11: #{deep_hgnn_forward.1} parent=1 // pred_check_branch
      %31 = sbr.rel (0) target = $region13
    $region12: #{deep_hgnn_forward.1} parent=1 // pred_region
      _
    $region13: #{deep_hgnn_forward.1} parent=1 // pred_fallthru
      _
    // Predicated region
    $region14: #{deep_hgnn_forward.1} parent=1 // pred_check
      _
    $region15: #{deep_hgnn_forward.1} parent=1 // pred_check_branch
      %33 = sbr.rel (0) target = $region17
    $region16: #{deep_hgnn_forward.1} parent=1 // pred_region
      _
    $region17: #{deep_hgnn_forward.1} parent=1 // pred_fallthru
      _
    // Predicated region
    $region18: #{deep_hgnn_forward.1} parent=1 // pred_check
      _
    $region19: #{deep_hgnn_forward.1} parent=1 // pred_check_branch
      %35 = sbr.rel (0) target = $region21
    $region20: #{deep_hgnn_forward.1} parent=1 // pred_region
      _
    $region21: #{deep_hgnn_forward.1} parent=1 // pred_fallthru
      _
    // Predicated region
    $region22: #{deep_hgnn_forward.1} parent=1 // pred_check
      _
    $region23: #{deep_hgnn_forward.1} parent=1 // pred_check_branch
      %37 = sbr.rel (0) target = $region25
    $region24: #{deep_hgnn_forward.1} parent=1 // pred_region
      _
    $region25: #{deep_hgnn_forward.1} parent=1 // pred_fallthru
      _
    // Predicated region
    $region26: #{deep_hgnn_forward.1} parent=1 // pred_check
      _
    $region27: #{deep_hgnn_forward.1} parent=1 // pred_check_branch
      %39 = sbr.rel (0) target = $region29
    $region28: #{deep_hgnn_forward.1} parent=1 // pred_region
      _
    $region29: #{deep_hgnn_forward.1} parent=1 // pred_fallthru
      _
    // Predicated region
    $region30: #{deep_hgnn_forward.1} parent=1 // pred_check
      _
    $region31: #{deep_hgnn_forward.1} parent=1 // pred_check_branch
      %41 = sbr.rel (0) target = $region33
    $region32: #{deep_hgnn_forward.1} parent=1 // pred_region
      _
    $region33: #{deep_hgnn_forward.1} parent=1 // pred_fallthru
      _
    // Predicated region
    $region34: #{deep_hgnn_forward.1} parent=1 // pred_check
      _
    $region35: #{deep_hgnn_forward.1} parent=1 // pred_check_branch
      %43 = sbr.rel (0) target = $region37
    $region36: #{deep_hgnn_forward.1} parent=1 // pred_region
      _
    $region37: #{deep_hgnn_forward.1} parent=1 // pred_fallthru
      _
    // Predicated region
    $region38: #{deep_hgnn_forward.1} parent=1 // pred_check
      _
    $region39: #{deep_hgnn_forward.1} parent=1 // pred_check_branch
      %45 = sbr.rel (0) target = $region41
    $region40: #{deep_hgnn_forward.1} parent=1 // pred_region
      _
    $region41: #{deep_hgnn_forward.1} parent=1 // pred_fallthru
      _
    // Predicated region
    $region42: #{deep_hgnn_forward.1} parent=1 // pred_check
      _
    $region43: #{deep_hgnn_forward.1} parent=1 // pred_check_branch
      %47 = sbr.rel (0) target = $region45
    $region44: #{deep_hgnn_forward.1} parent=1 // pred_region
      _
    $region45: #{deep_hgnn_forward.1} parent=1 // pred_fallthru
      _
    // Predicated region
    $region46: #{deep_hgnn_forward.1} parent=1 // pred_check
      _
    $region47: #{deep_hgnn_forward.1} parent=1 // pred_check_branch
      %49 = sbr.rel (0) target = $region49
    $region48: #{deep_hgnn_forward.1} parent=1 // pred_region
      _
    $region49: #{deep_hgnn_forward.1} parent=1 // pred_fallthru
      _
    // Predicated region
    $region50: #{deep_hgnn_forward.1} parent=1 // pred_check
      _
    $region51: #{deep_hgnn_forward.1} parent=1 // pred_check_branch
      %51 = sbr.rel (0) target = $region53
    $region52: #{deep_hgnn_forward.1} parent=1 // pred_region
      _
    $region53: #{deep_hgnn_forward.1} parent=1 // pred_fallthru
      _
    // Predicated region
    $region54: #{deep_hgnn_forward.1} parent=1 // pred_check
      _
    $region55: #{deep_hgnn_forward.1} parent=1 // pred_check_branch
      %53 = sbr.rel (0) target = $region57
    $region56: #{deep_hgnn_forward.1} parent=1 // pred_region
      _
    $region57: #{deep_hgnn_forward.1} parent=1 // pred_fallthru
      _
    // Predicated region
    $region58: #{deep_hgnn_forward.1} parent=1 // pred_check
      _
    $region59: #{deep_hgnn_forward.1} parent=1 // pred_check_branch
      %55 = sbr.rel (0) target = $region61
    $region60: #{deep_hgnn_forward.1} parent=1 // pred_region
      _
    $region61: #{deep_hgnn_forward.1} parent=1 // pred_fallthru
      _
    // Predicated region
    $region62: #{deep_hgnn_forward.1} parent=1 // pred_check
      _
    $region63: #{deep_hgnn_forward.1} parent=1 // pred_check_branch
      %57 = sbr.rel (0) target = $region65
    $region64: #{deep_hgnn_forward.1} parent=1 // pred_region
      _
    $region65: #{deep_hgnn_forward.1} parent=1 // pred_fallthru
      _
    // Predicated region
    $region66: #{deep_hgnn_forward.1} parent=1 // pred_check
      _
    $region67: #{deep_hgnn_forward.1} parent=1 // pred_check_branch
      %59 = sbr.rel (0) target = $region69
    $region68: #{deep_hgnn_forward.1} parent=1 // pred_region
      _
    $region69: #{deep_hgnn_forward.1} parent=1 // pred_fallthru
      _
    // Predicated region
    $region70: #{deep_hgnn_forward.1} parent=1 // pred_check
      _
    $region71: #{deep_hgnn_forward.1} parent=1 // pred_check_branch
      %61 = sbr.rel (0) target = $region73
    $region72: #{deep_hgnn_forward.1} parent=1 // pred_region
      _
    $region73: #{deep_hgnn_forward.1} parent=1 // pred_fallthru
      _
    // Predicated region
    $region74: #{deep_hgnn_forward.1} parent=1 // pred_check
      _
    $region75: #{deep_hgnn_forward.1} parent=1 // pred_check_branch
      %63 = sbr.rel (0) target = $region77
    $region76: #{deep_hgnn_forward.1} parent=1 // pred_region
      _
    $region77: #{deep_hgnn_forward.1} parent=1 // pred_fallthru
      _
    // Predicated region
    $region78: #{deep_hgnn_forward.1} parent=1 // pred_check
      _
    $region79: #{deep_hgnn_forward.1} parent=1 // pred_check_branch
      %65 = sbr.rel (0) target = $region81
    $region80: #{deep_hgnn_forward.1} parent=1 // pred_region
      _
    $region81: #{deep_hgnn_forward.1} parent=1 // pred_fallthru
      _
    %v67 = vld [vmem:[%s0] sm:$0xff]
    %v68 = vld [vmem:[%s0 + $0x8] sm:$0xff]
    %v69 = vld [vmem:[%s1] sm:$0xff]
    %v70 = vld [vmem:[%s1 + $0x8] sm:$0xff]
    %v71 = vld [vmem:[%s7] sm:$0xff]
    %v72 = vld [vmem:[%s7 + $0x8] sm:$0xff]
    %v73 = vld [vmem:[%s8] sm:$0x1]
    %v74 = vlaneseq
    %v75 = vshrl.u32 %v74, 7
    %v76 = vadd.s32 %v75, 8
    %v77 = vlaneseq
    %v78 = vand.u32 %v77, 127
    %vm79 = vcmp.eq.s32.totalorder %v75, %v78
    %vm80 = vcmp.eq.s32.totalorder %v76, %v78
    %v81 = vsel %vm79, 1, 0
    %v82 = vsel %vm80, 1, 0
    %v83 = vcvt.s32.f32 %v81
    %v84 = vcvt.s32.f32 %v82
    %v85 = vadd.f32 %v69, %v83
    %v86 = vadd.f32 %v70, %v84
    %vm87 = vcmask 130048
    %v88 = vsel %vm87, %v85, 0.0
    %89 = vadd.xlane.f32.xlu0 %v88
    %v90 = vpop.xlane.xlu0 %89
    %v91 = vsel %vm87, %v86, 0.0
    %92 = vadd.xlane.f32.xlu0 %v91
    %v93 = vpop.xlane.xlu0 %92
    %v94 = vrsqrt.pop %v90
    %v95 = vrsqrt.pop %v93
    %v96 = vpack.c.bf16 %v68, %v67
    %v97 = vpack.c.bf16 %v72, %v71
    %v99 = vsel %vm87, %v96, 0
    %101 = vmatprep.subr.bf16.mxu0 0
    %102 = vmatpush1.bf16.msra.mxu0 %v97
    %103 = vmatprep.subr.bf16.mxu0 0
    %104 = vmatpush1.bf16.msra.mxu0 0
    %105 = vmatprep.subr.bf16.mxu0 0
    %106 = vmatpush1.bf16.msra.mxu0 0
    %107 = vmatprep.subr.bf16.mxu0 0
    %108 = vmatpush1.bf16.msra.mxu0 0
    %109 = vmatprep.subr.bf16.mxu0 0
    %110 = vmatpush1.bf16.msra.mxu0 0
    %111 = vmatprep.subr.bf16.mxu0 0
    %112 = vmatpush1.bf16.msra.mxu0 0
    %113 = vmatprep.subr.bf16.mxu0 0
    %114 = vmatpush1.bf16.msra.mxu0 0
    %115 = vmatprep.subr.bf16.mxu0 0
    %116 = vmatpush1.bf16.msra.mxu0 0
    %117 = vmatprep.subr.bf16.mxu0 0
    %118 = vmatpush1.bf16.msra.mxu0 0
    %119 = vmatprep.subr.bf16.mxu0 0
    %120 = vmatpush1.bf16.msra.mxu0 0
    %121 = vmatprep.subr.bf16.mxu0 0
    %122 = vmatpush1.bf16.msra.mxu0 0
    %123 = vmatprep.subr.bf16.mxu0 0
    %124 = vmatpush1.bf16.msra.mxu0 0
    %125 = vmatprep.subr.bf16.mxu0 0
    %126 = vmatpush1.bf16.msra.mxu0 0
    %127 = vmatprep.subr.bf16.mxu0 0
    %128 = vmatpush1.bf16.msra.mxu0 0
    %129 = vmatprep.subr.bf16.mxu0 0
    %130 = vmatpush1.bf16.msra.mxu0 0
    %131 = vmatprep.subr.bf16.mxu0 0
    %132 = vmatpush1.bf16.msra.mxu0 0
    %133 = vmatprep.mubr.bf16.mxu0 0
    %134 = vmatmul.mubr.bf16.gmra.mrb[0].mxu0 %v99
    %v135 = vpop.f32.mrb[0].mxu0
    %v136 = vadd.f32 0.0, %v135
    %v137 = vpop.f32.mrb[0].mxu0
    %v138 = vpop.f32.mrb[0].mxu0
    %v139 = vadd.f32 0.0, %v138
    %v140 = vpop.f32.mrb[0].mxu0
    %141 = vdwg.mxu0
    %v142 = vpack.c.bf16 %v86, %v85
    %v143 = vmul.f32 %v94, %v136
    %v144 = vmul.f32 %v95, %v139
    %v145 = vpack.c.bf16 %v144, %v143
    %v147 = vsel %vm87, %v142, 0
    %149 = vmatprep.subr.bf16.mxu0 0
    %150 = vmatpush1.bf16.msra.mxu0 %v145
    %151 = vmatprep.subr.bf16.mxu0 0
    %152 = vmatpush1.bf16.msra.mxu0 0
    %153 = vmatprep.subr.bf16.mxu0 0
    %154 = vmatpush1.bf16.msra.mxu0 0
    %155 = vmatprep.subr.bf16.mxu0 0
    %156 = vmatpush1.bf16.msra.mxu0 0
    %157 = vmatprep.subr.bf16.mxu0 0
    %158 = vmatpush1.bf16.msra.mxu0 0
    %159 = vmatprep.subr.bf16.mxu0 0
    %160 = vmatpush1.bf16.msra.mxu0 0
    %161 = vmatprep.subr.bf16.mxu0 0
    %162 = vmatpush1.bf16.msra.mxu0 0
    %163 = vmatprep.subr.bf16.mxu0 0
    %164 = vmatpush1.bf16.msra.mxu0 0
    %165 = vmatprep.subr.bf16.mxu0 0
    %166 = vmatpush1.bf16.msra.mxu0 0
    %167 = vmatprep.subr.bf16.mxu0 0
    %168 = vmatpush1.bf16.msra.mxu0 0
    %169 = vmatprep.subr.bf16.mxu0 0
    %170 = vmatpush1.bf16.msra.mxu0 0
    %171 = vmatprep.subr.bf16.mxu0 0
    %172 = vmatpush1.bf16.msra.mxu0 0
    %173 = vmatprep.subr.bf16.mxu0 0
    %174 = vmatpush1.bf16.msra.mxu0 0
    %175 = vmatprep.subr.bf16.mxu0 0
    %176 = vmatpush1.bf16.msra.mxu0 0
    %177 = vmatprep.subr.bf16.mxu0 0
    %178 = vmatpush1.bf16.msra.mxu0 0
    %179 = vmatprep.subr.bf16.mxu0 0
    %180 = vmatpush1.bf16.msra.mxu0 0
    %181 = vmatprep.mubr.bf16.mxu0 0
    %182 = vmatmul.mubr.bf16.gmra.mrb[0].mxu0 %v147
    %v183 = vpop.f32.mrb[0].mxu0
    %v184 = vadd.f32 0.0, %v183
    %v185 = vpop.f32.mrb[0].mxu0
    %v186 = vpop.f32.mrb[0].mxu0
    %v187 = vadd.f32 0.0, %v186
    %v188 = vpop.f32.mrb[0].mxu0
    %189 = vdwg.mxu0
    %v190 = vmul.f32 %v94, %v184
    %v191 = vmul.f32 %v95, %v187
    %v193 = vlaneseq
    %v194 = vshrl.u32 %v193, 7
    %v195 = vsub.s32 0, %v194
    %v196 = vrot.slane %v73, %v195
    %v198 = vadd.f32 %v190, %v196
    %v199 = vadd.f32 %v191, %v196
    %v200 = vmax.f32 %v198, 0.0
    %v201 = vmax.f32 %v199, 0.0
    loop: start=0, step=1, limit=5
    $region82: #{deep_hgnn_forward.1} parent=1 // loop_pre_header
      _
    $region83: #{deep_hgnn_forward.1} parent=1 // loop_header
      %s203 = sphi 0, %s207
      %p204 = scmp.ge.s32.totalorder %s203, 5
      %v208 = vphi %v200, %v2348
      %v209 = vphi %v201, %v2349
      %v210 = vphi %v69, %v318
      %v211 = vphi %v70, %v319
      %v212 = vphi 1.0, %v289
      %v213 = vphi 1.0, %v290
      %v214 = vphi 1.0, %v311
    $region84: #{deep_hgnn_forward.1} parent=1 // loop_header_branch
      %206 = sbr.rel (%p204) target = $region88
    $region85: #{deep_hgnn_forward.1} parent=1 // loop_body
      %s215 = scalar_lea.vmem %s15, %s203
      %v216 = vld [vmem:[%s215] sm:$0x1]
      %v218 = vlaneseq
      %v219 = vshrl.u32 %v218, 7
      %v220 = vsub.s32 0, %v219
      %v221 = vrot.slane %v216, %v220
      %v223 = vmul.f32 %v208, %v221
      %v224 = vmul.f32 %v209, %v221
      %vm225 = vcmask 261120
      %v226 = vsel %vm225, %v223, 0.0
      %227 = vadd.xlane.f32.xlu0 %v226
      %v228 = vpop.xlane.xlu0 %227
      %v229 = vsel %vm225, %v224, 0.0
      %230 = vadd.xlane.f32.xlu0 %v229
      %v231 = vpop.xlane.xlu0 %230
      %v232 = vtanh.pop %v228
      %v233 = vtanh.pop %v231
      %v234 = vmul.f32 %v83, %v232
      %v235 = vmul.f32 %v84, %v233
      %v236 = vsel %vm87, %v234, 0.0
      %v237 = vsel %vm87, %v235, 0.0
      %v238 = vadd.f32 %v236, %v237
      %v239 = vrot.slane %v238, 4
      %v240 = vadd.f32 %v238, %v239
      %v241 = vrot.slane %v240, 2
      %v242 = vadd.f32 %v240, %v241
      %v243 = vrot.slane %v242, 1
      %v244 = vadd.f32 %v242, %v243
      %vm245 = vcmp.gt.f32.partialorder %v244, %v232
      %vm246 = vcmp.gt.f32.partialorder %v244, %v233
      %v247 = vsel %vm245, 1, 0
      %v248 = vsel %vm246, 1, 0
      %v249 = vcvt.s32.f32 %v247
      %v250 = vcvt.s32.f32 %v248
      %vm251 = vcmp.eq.f32.partialorder %v244, %v232
      %vm252 = vcmp.eq.f32.partialorder %v244, %v233
      %v253 = vsel %vm251, 1, 0
      %v254 = vsel %vm252, 1, 0
      %v255 = vcvt.s32.f32 %v253
      %v256 = vcvt.s32.f32 %v254
      %vm257 = vcmp.lt.s32.totalorder %v78, %v75
      %vm258 = vcmp.lt.s32.totalorder %v78, %v76
      %v259 = vsel %vm257, 1, 0
      %v260 = vsel %vm258, 1, 0
      %v261 = vcvt.s32.f32 %v259
      %v262 = vcvt.s32.f32 %v260
      %v263 = vmul.f32 %v255, %v261
      %v264 = vmul.f32 %v256, %v262
      %v265 = vld [vmem:[%s4] sm:$0xff]
      %v266 = vld [vmem:[%s4 + $0x8] sm:$0xff]
      %v267 = vmul.f32 %v265, %v214
      %v268 = vmul.f32 %v266, %v214
      %v269 = vadd.f32 %v249, %v263
      %v270 = vadd.f32 %v250, %v264
      %v271 = vmul.f32 %v267, %v269
      %v272 = vmul.f32 %v268, %v270
      %v273 = vsel %vm87, %v271, 0.0
      %274 = vadd.xlane.f32.xlu0 %v273
      %v275 = vpop.xlane.xlu0 %274
      %v276 = vsel %vm87, %v272, 0.0
      %277 = vadd.xlane.f32.xlu0 %v276
      %v278 = vpop.xlane.xlu0 %277
      %s279 = smul.u32 %s203, 16
      %s280 = scalar_lea.vmem %s6, %s279
      %v281 = vld [vmem:[%s280] sm:$0xff]
      %v282 = vld [vmem:[%s280 + $0x8] sm:$0xff]
      %vm283 = vcmp.lt.f32.partialorder %v275, %v281
      %vm284 = vcmp.lt.f32.partialorder %v278, %v282
      %v285 = vsel %vm283, 1, 0
      %v286 = vsel %vm284, 1, 0
      %v287 = vcvt.s32.f32 %v285
      %v288 = vcvt.s32.f32 %v286
      %v289 = vmul.f32 %v212, %v287
      %v290 = vmul.f32 %v213, %v288
      %292 = vset.pattern.permute.xlu0 0
      %293 = vperm.xlu0 %292, %v289
      %v294 = vpop.permute.xlu0 %293
      %297 = vset.pattern.permute.xlu0 0
      %298 = vperm.xlu0 %297, %v290
      %v299 = vpop.permute.xlu0 %298
      %v301 = vmul.f32 %v83, %v294
      %v302 = vmul.f32 %v84, %v299
      %v303 = vsel %vm87, %v301, 0.0
      %v304 = vsel %vm87, %v302, 0.0
      %v305 = vadd.f32 %v303, %v304
      %v306 = vrot.slane %v305, 4
      %v307 = vadd.f32 %v305, %v306
      %v308 = vrot.slane %v307, 2
      %v309 = vadd.f32 %v307, %v308
      %v310 = vrot.slane %v309, 1
      %v311 = vadd.f32 %v309, %v310
      %v312 = vmul.f32 %v208, %v232
      %v313 = vmul.f32 %v209, %v233
      %v314 = vmul.f32 %v312, %v294
      %v315 = vmul.f32 %v313, %v299
      %v316 = vmul.f32 %v210, %v294
      %v317 = vmul.f32 %v211, %v299
      %v318 = vmul.f32 %v316, %v311
      %v319 = vmul.f32 %v317, %v311
      %v320 = vadd.f32 %v318, %v83
      %v321 = vadd.f32 %v319, %v84
      %v322 = vpack.c.bf16 %v315, %v314
      %s323 = smul.u32 %s203, 8
      %s324 = smul.addr %s323, 8
      %s325 = scalar_lea.vmem %s11, %s324
      %v326 = vld [vmem:[%s325] sm:$0xff]
      %v327 = vld [vmem:[%s325 + $0x8] sm:$0xff]
      %v328 = vld [vmem:[%s325 + $0x10] sm:$0xff]
      %v329 = vld [vmem:[%s325 + $0x18] sm:$0xff]
      %v330 = vld [vmem:[%s325 + $0x20] sm:$0xff]
      %v331 = vld [vmem:[%s325 + $0x28] sm:$0xff]
      %v332 = vld [vmem:[%s325 + $0x30] sm:$0xff]
      %v333 = vld [vmem:[%s325 + $0x38] sm:$0xff]
      %v334 = vpack.c.bf16 %v328, %v326
      %v335 = vpack.c.bf16 %v329, %v327
      %v336 = vpack.c.bf16 %v332, %v330
      %v337 = vpack.c.bf16 %v333, %v331
      %s338 = smul.u32 %s203, 2
      %s339 = scalar_lea.vmem %s12, %s338
      %v340 = vld [vmem:[%s339] sm:$0x3]
      %v342 = vlaneseq
      %v343 = vshrl.u32 %v342, 7
      %v344 = vsub.s32 0, %v343
      %v345 = vrot.slane %v340, %v344
      %v346 = vlaneseq
      %v347 = vshrl.u32 %v346, 7
      %v348 = vsub.s32 1, %v347
      %v349 = vrot.slane %v340, %v348
      %v353 = vsel %vm225, %v322, 0
      %355 = vmatprep.subr.bf16.mxu0 %v335
      %356 = vmatpush1.bf16.msra.mxu0 %v334
      %357 = vmatprep.subr.bf16.mxu0 %v337
      %358 = vmatpush1.bf16.msra.mxu0 %v336
      %359 = vmatprep.subr.bf16.mxu0 0
      %360 = vmatpush1.bf16.msra.mxu0 0
      %361 = vmatprep.subr.bf16.mxu0 0
      %362 = vmatpush1.bf16.msra.mxu0 0
      %363 = vmatprep.subr.bf16.mxu0 0
      %364 = vmatpush1.bf16.msra.mxu0 0
      %365 = vmatprep.subr.bf16.mxu0 0
      %366 = vmatpush1.bf16.msra.mxu0 0
      %367 = vmatprep.subr.bf16.mxu0 0
      %368 = vmatpush1.bf16.msra.mxu0 0
      %369 = vmatprep.subr.bf16.mxu0 0
      %370 = vmatpush1.bf16.msra.mxu0 0
      %371 = vmatprep.subr.bf16.mxu0 0
      %372 = vmatpush1.bf16.msra.mxu0 0
      %373 = vmatprep.subr.bf16.mxu0 0
      %374 = vmatpush1.bf16.msra.mxu0 0
      %375 = vmatprep.subr.bf16.mxu0 0
      %376 = vmatpush1.bf16.msra.mxu0 0
      %377 = vmatprep.subr.bf16.mxu0 0
      %378 = vmatpush1.bf16.msra.mxu0 0
      %379 = vmatprep.subr.bf16.mxu0 0
      %380 = vmatpush1.bf16.msra.mxu0 0
      %381 = vmatprep.subr.bf16.mxu0 0
      %382 = vmatpush1.bf16.msra.mxu0 0
      %383 = vmatprep.subr.bf16.mxu0 0
      %384 = vmatpush1.bf16.msra.mxu0 0
      %385 = vmatprep.subr.bf16.mxu0 0
      %386 = vmatpush1.bf16.msra.mxu0 0
      %387 = vmatprep.mubr.bf16.mxu0 0
      %388 = vmatmul.mubr.bf16.gmra.mrb[0].mxu0 %v353
      %v389 = vpop.f32.mrb[0].mxu0
      %v390 = vadd.f32 %v345, %v389
      %v391 = vpop.f32.mrb[0].mxu0
      %v392 = vadd.f32 %v349, %v391
      %v393 = vpop.f32.mrb[0].mxu0
      %v394 = vadd.f32 %v345, %v393
      %v395 = vpop.f32.mrb[0].mxu0
      %v396 = vadd.f32 %v349, %v395
      %397 = vdwg.mxu0
      %v400 = vcombine.high %v392, %v392
      %v402 = vunpack.c.l.s4 1966171168
      %v403 = vunpack.c.0.s8 %v402
      %v404 = vlaneseq
      %v405 = vshrl.u32 %v404, 7
      %v406 = vsub.s32 %v403, %v405
      %v407 = vrot.slane %v392, %v406
      %v409 = vunpack.c.l.s4 1966171168
      %v410 = vunpack.c.0.s8 %v409
      %v411 = vlaneseq
      %v412 = vshrl.u32 %v411, 7
      %v413 = vsub.s32 %v410, %v412
      %v414 = vrot.slane %v400, %v413
      %v415 = vcombine.high %v407, %v407
      %v416 = vcombine.high %v414, %v414
      %v418 = vunpack.c.l.s4 1966171168
      %v419 = vunpack.c.0.s8 %v418
      %v420 = vlaneseq
      %v421 = vshrl.u32 %v420, 7
      %v422 = vsub.s32 %v419, %v421
      %v423 = vrot.slane %v407, %v422
      %v425 = vunpack.c.l.s4 1966171168
      %v426 = vunpack.c.0.s8 %v425
      %v427 = vlaneseq
      %v428 = vshrl.u32 %v427, 7
      %v429 = vsub.s32 %v426, %v428
      %v430 = vrot.slane %v414, %v429
      %v432 = vunpack.c.l.s4 1966171168
      %v433 = vunpack.c.0.s8 %v432
      %v434 = vlaneseq
      %v435 = vshrl.u32 %v434, 7
      %v436 = vsub.s32 %v433, %v435
      %v437 = vrot.slane %v415, %v436
      %v439 = vunpack.c.l.s4 1966171168
      %v440 = vunpack.c.0.s8 %v439
      %v441 = vlaneseq
      %v442 = vshrl.u32 %v441, 7
      %v443 = vsub.s32 %v440, %v442
      %v444 = vrot.slane %v416, %v443
      %v445 = vcombine.high %v423, %v423
      %v446 = vcombine.high %v430, %v430
      %v447 = vcombine.high %v437, %v437
      %v448 = vcombine.high %v444, %v444
      %v449 = vcombine.high %v396, %v396
      %v451 = vunpack.c.l.s4 1966171168
      %v452 = vunpack.c.0.s8 %v451
      %v453 = vlaneseq
      %v454 = vshrl.u32 %v453, 7
      %v455 = vsub.s32 %v452, %v454
      %v456 = vrot.slane %v396, %v455
      %v458 = vunpack.c.l.s4 1966171168
      %v459 = vunpack.c.0.s8 %v458
      %v460 = vlaneseq
      %v461 = vshrl.u32 %v460, 7
      %v462 = vsub.s32 %v459, %v461
      %v463 = vrot.slane %v449, %v462
      %v464 = vcombine.high %v456, %v456
      %v465 = vcombine.high %v463, %v463
      %v467 = vunpack.c.l.s4 1966171168
      %v468 = vunpack.c.0.s8 %v467
      %v469 = vlaneseq
      %v470 = vshrl.u32 %v469, 7
      %v471 = vsub.s32 %v468, %v470
      %v472 = vrot.slane %v456, %v471
      %v474 = vunpack.c.l.s4 1966171168
      %v475 = vunpack.c.0.s8 %v474
      %v476 = vlaneseq
      %v477 = vshrl.u32 %v476, 7
      %v478 = vsub.s32 %v475, %v477
      %v479 = vrot.slane %v463, %v478
      %v481 = vunpack.c.l.s4 1966171168
      %v482 = vunpack.c.0.s8 %v481
      %v483 = vlaneseq
      %v484 = vshrl.u32 %v483, 7
      %v485 = vsub.s32 %v482, %v484
      %v486 = vrot.slane %v464, %v485
      %v488 = vunpack.c.l.s4 1966171168
      %v489 = vunpack.c.0.s8 %v488
      %v490 = vlaneseq
      %v491 = vshrl.u32 %v490, 7
      %v492 = vsub.s32 %v489, %v491
      %v493 = vrot.slane %v465, %v492
      %v494 = vcombine.high %v472, %v472
      %v495 = vcombine.high %v479, %v479
      %v496 = vcombine.high %v486, %v486
      %v497 = vcombine.high %v493, %v493
      %v498 = vlaneseq
      %v499 = vshrl.u32 %v498, 7
      %v500 = vsub.s32 0, %v499
      %v501 = vrot.slane %v423, %v500
      %v502 = vlaneseq
      %v503 = vshrl.u32 %v502, 7
      %v504 = vsub.s32 0, %v503
      %v505 = vrot.slane %v437, %v504
      %v506 = vlaneseq
      %v507 = vshrl.u32 %v506, 7
      %v508 = vsub.s32 0, %v507
      %v509 = vrot.slane %v445, %v508
      %v510 = vlaneseq
      %v511 = vshrl.u32 %v510, 7
      %v512 = vsub.s32 0, %v511
      %v513 = vrot.slane %v447, %v512
      %v514 = vlaneseq
      %v515 = vshrl.u32 %v514, 7
      %v516 = vsub.s32 0, %v515
      %v517 = vrot.slane %v430, %v516
      %v518 = vlaneseq
      %v519 = vshrl.u32 %v518, 7
      %v520 = vsub.s32 0, %v519
      %v521 = vrot.slane %v444, %v520
      %v522 = vlaneseq
      %v523 = vshrl.u32 %v522, 7
      %v524 = vsub.s32 0, %v523
      %v525 = vrot.slane %v446, %v524
      %v526 = vlaneseq
      %v527 = vshrl.u32 %v526, 7
      %v528 = vsub.s32 0, %v527
      %v529 = vrot.slane %v448, %v528
      %v530 = vlaneseq
      %v531 = vshrl.u32 %v530, 7
      %v532 = vsub.s32 0, %v531
      %v533 = vrot.slane %v472, %v532
      %v534 = vlaneseq
      %v535 = vshrl.u32 %v534, 7
      %v536 = vsub.s32 0, %v535
      %v537 = vrot.slane %v486, %v536
      %v538 = vlaneseq
      %v539 = vshrl.u32 %v538, 7
      %v540 = vsub.s32 0, %v539
      %v541 = vrot.slane %v494, %v540
      %v542 = vlaneseq
      %v543 = vshrl.u32 %v542, 7
      %v544 = vsub.s32 0, %v543
      %v545 = vrot.slane %v496, %v544
      %v546 = vlaneseq
      %v547 = vshrl.u32 %v546, 7
      %v548 = vsub.s32 0, %v547
      %v549 = vrot.slane %v479, %v548
      %v550 = vlaneseq
      %v551 = vshrl.u32 %v550, 7
      %v552 = vsub.s32 0, %v551
      %v553 = vrot.slane %v493, %v552
      %v554 = vlaneseq
      %v555 = vshrl.u32 %v554, 7
      %v556 = vsub.s32 0, %v555
      %v557 = vrot.slane %v495, %v556
      %v558 = vlaneseq
      %v559 = vshrl.u32 %v558, 7
      %v560 = vsub.s32 0, %v559
      %v561 = vrot.slane %v497, %v560
      %v578 = vadd.f32 %v501, %v390
      %v579 = vadd.f32 %v501, %v394
      %v580 = vadd.f32 %v505, %v390
      %v581 = vadd.f32 %v505, %v394
      %v582 = vadd.f32 %v509, %v390
      %v583 = vadd.f32 %v509, %v394
      %v584 = vadd.f32 %v513, %v390
      %v585 = vadd.f32 %v513, %v394
      %v586 = vadd.f32 %v517, %v390
      %v587 = vadd.f32 %v517, %v394
      %v588 = vadd.f32 %v521, %v390
      %v589 = vadd.f32 %v521, %v394
      %v590 = vadd.f32 %v525, %v390
      %v591 = vadd.f32 %v525, %v394
      %v592 = vadd.f32 %v529, %v390
      %v593 = vadd.f32 %v529, %v394
      %v594 = vadd.f32 %v533, %v390
      %v595 = vadd.f32 %v533, %v394
      %v596 = vadd.f32 %v537, %v390
      %v597 = vadd.f32 %v537, %v394
      %v598 = vadd.f32 %v541, %v390
      %v599 = vadd.f32 %v541, %v394
      %v600 = vadd.f32 %v545, %v390
      %v601 = vadd.f32 %v545, %v394
      %v602 = vadd.f32 %v549, %v390
      %v603 = vadd.f32 %v549, %v394
      %v604 = vadd.f32 %v553, %v390
      %v605 = vadd.f32 %v553, %v394
      %v606 = vadd.f32 %v557, %v390
      %v607 = vadd.f32 %v557, %v394
      %v608 = vadd.f32 %v561, %v390
      %v609 = vadd.f32 %v561, %v394
      %vm610 = vcmp.ge.f32.partialorder %v578, 0.0
      %vm611 = vcmp.ge.f32.partialorder %v579, 0.0
      %vm612 = vcmp.ge.f32.partialorder %v580, 0.0
      %vm613 = vcmp.ge.f32.partialorder %v581, 0.0
      %vm614 = vcmp.ge.f32.partialorder %v582, 0.0
      %vm615 = vcmp.ge.f32.partialorder %v583, 0.0
      %vm616 = vcmp.ge.f32.partialorder %v584, 0.0
      %vm617 = vcmp.ge.f32.partialorder %v585, 0.0
      %vm618 = vcmp.ge.f32.partialorder %v586, 0.0
      %vm619 = vcmp.ge.f32.partialorder %v587, 0.0
      %vm620 = vcmp.ge.f32.partialorder %v588, 0.0
      %vm621 = vcmp.ge.f32.partialorder %v589, 0.0
      %vm622 = vcmp.ge.f32.partialorder %v590, 0.0
      %vm623 = vcmp.ge.f32.partialorder %v591, 0.0
      %vm624 = vcmp.ge.f32.partialorder %v592, 0.0
      %vm625 = vcmp.ge.f32.partialorder %v593, 0.0
      %vm626 = vcmp.ge.f32.partialorder %v594, 0.0
      %vm627 = vcmp.ge.f32.partialorder %v595, 0.0
      %vm628 = vcmp.ge.f32.partialorder %v596, 0.0
      %vm629 = vcmp.ge.f32.partialorder %v597, 0.0
      %vm630 = vcmp.ge.f32.partialorder %v598, 0.0
      %vm631 = vcmp.ge.f32.partialorder %v599, 0.0
      %vm632 = vcmp.ge.f32.partialorder %v600, 0.0
      %vm633 = vcmp.ge.f32.partialorder %v601, 0.0
      %vm634 = vcmp.ge.f32.partialorder %v602, 0.0
      %vm635 = vcmp.ge.f32.partialorder %v603, 0.0
      %vm636 = vcmp.ge.f32.partialorder %v604, 0.0
      %vm637 = vcmp.ge.f32.partialorder %v605, 0.0
      %vm638 = vcmp.ge.f32.partialorder %v606, 0.0
      %vm639 = vcmp.ge.f32.partialorder %v607, 0.0
      %vm640 = vcmp.ge.f32.partialorder %v608, 0.0
      %vm641 = vcmp.ge.f32.partialorder %v609, 0.0
      %v642 = vmul.f32 %v578, 0.2
      %v643 = vmul.f32 %v579, 0.2
      %v644 = vmul.f32 %v580, 0.2
      %v645 = vmul.f32 %v581, 0.2
      %v646 = vmul.f32 %v582, 0.2
      %v647 = vmul.f32 %v583, 0.2
      %v648 = vmul.f32 %v584, 0.2
      %v649 = vmul.f32 %v585, 0.2
      %v650 = vmul.f32 %v586, 0.2
      %v651 = vmul.f32 %v587, 0.2
      %v652 = vmul.f32 %v588, 0.2
      %v653 = vmul.f32 %v589, 0.2
      %v654 = vmul.f32 %v590, 0.2
      %v655 = vmul.f32 %v591, 0.2
      %v656 = vmul.f32 %v592, 0.2
      %v657 = vmul.f32 %v593, 0.2
      %v658 = vmul.f32 %v594, 0.2
      %v659 = vmul.f32 %v595, 0.2
      %v660 = vmul.f32 %v596, 0.2
      %v661 = vmul.f32 %v597, 0.2
      %v662 = vmul.f32 %v598, 0.2
      %v663 = vmul.f32 %v599, 0.2
      %v664 = vmul.f32 %v600, 0.2
      %v665 = vmul.f32 %v601, 0.2
      %v666 = vmul.f32 %v602, 0.2
      %v667 = vmul.f32 %v603, 0.2
      %v668 = vmul.f32 %v604, 0.2
      %v669 = vmul.f32 %v605, 0.2
      %v670 = vmul.f32 %v606, 0.2
      %v671 = vmul.f32 %v607, 0.2
      %v672 = vmul.f32 %v608, 0.2
      %v673 = vmul.f32 %v609, 0.2
      %v674 = vsel %vm610, %v578, %v642
      %v675 = vsel %vm611, %v579, %v643
      %v676 = vsel %vm612, %v580, %v644
      %v677 = vsel %vm613, %v581, %v645
      %v678 = vsel %vm614, %v582, %v646
      %v679 = vsel %vm615, %v583, %v647
      %v680 = vsel %vm616, %v584, %v648
      %v681 = vsel %vm617, %v585, %v649
      %v682 = vsel %vm618, %v586, %v650
      %v683 = vsel %vm619, %v587, %v651
      %v684 = vsel %vm620, %v588, %v652
      %v685 = vsel %vm621, %v589, %v653
      %v686 = vsel %vm622, %v590, %v654
      %v687 = vsel %vm623, %v591, %v655
      %v688 = vsel %vm624, %v592, %v656
      %v689 = vsel %vm625, %v593, %v657
      %v690 = vsel %vm626, %v594, %v658
      %v691 = vsel %vm627, %v595, %v659
      %v692 = vsel %vm628, %v596, %v660
      %v693 = vsel %vm629, %v597, %v661
      %v694 = vsel %vm630, %v598, %v662
      %v695 = vsel %vm631, %v599, %v663
      %v696 = vsel %vm632, %v600, %v664
      %v697 = vsel %vm633, %v601, %v665
      %v698 = vsel %vm634, %v602, %v666
      %v699 = vsel %vm635, %v603, %v667
      %v700 = vsel %vm636, %v604, %v668
      %v701 = vsel %vm637, %v605, %v669
      %v702 = vsel %vm638, %v606, %v670
      %v703 = vsel %vm639, %v607, %v671
      %v704 = vsel %vm640, %v608, %v672
      %v705 = vsel %vm641, %v609, %v673
      %v706 = vpack.c.bf16 %v675, %v674
      %v707 = vpack.c.bf16 %v677, %v676
      %v708 = vpack.c.bf16 %v679, %v678
      %v709 = vpack.c.bf16 %v681, %v680
      %v710 = vpack.c.bf16 %v683, %v682
      %v711 = vpack.c.bf16 %v685, %v684
      %v712 = vpack.c.bf16 %v687, %v686
      %v713 = vpack.c.bf16 %v689, %v688
      %v714 = vpack.c.bf16 %v691, %v690
      %v715 = vpack.c.bf16 %v693, %v692
      %v716 = vpack.c.bf16 %v695, %v694
      %v717 = vpack.c.bf16 %v697, %v696
      %v718 = vpack.c.bf16 %v699, %v698
      %v719 = vpack.c.bf16 %v701, %v700
      %v720 = vpack.c.bf16 %v703, %v702
      %v721 = vpack.c.bf16 %v705, %v704
      %s722 = smul.u32 %s203, 128
      %s723 = scalar_lea.vmem %s13, %s722
      %v724 = vld [vmem:[%s723] sm:$0xff]
      %v725 = vld [vmem:[%s723 + $0x8] sm:$0xff]
      %v726 = vld [vmem:[%s723 + $0x10] sm:$0xff]
      %v727 = vld [vmem:[%s723 + $0x18] sm:$0xff]
      %v728 = vld [vmem:[%s723 + $0x20] sm:$0xff]
      %v729 = vld [vmem:[%s723 + $0x28] sm:$0xff]
      %v730 = vld [vmem:[%s723 + $0x30] sm:$0xff]
      %v731 = vld [vmem:[%s723 + $0x38] sm:$0xff]
      %v732 = vld [vmem:[%s723 + $0x40] sm:$0xff]
      %v733 = vld [vmem:[%s723 + $0x48] sm:$0xff]
      %v734 = vld [vmem:[%s723 + $0x50] sm:$0xff]
      %v735 = vld [vmem:[%s723 + $0x58] sm:$0xff]
      %v736 = vld [vmem:[%s723 + $0x60] sm:$0xff]
      %v737 = vld [vmem:[%s723 + $0x68] sm:$0xff]
      %v738 = vld [vmem:[%s723 + $0x70] sm:$0xff]
      %v739 = vld [vmem:[%s723 + $0x78] sm:$0xff]
      %v740 = vpack.c.bf16 %v725, %v724
      %v741 = vpack.c.bf16 %v727, %v726
      %v742 = vpack.c.bf16 %v729, %v728
      %v743 = vpack.c.bf16 %v731, %v730
      %v744 = vpack.c.bf16 %v733, %v732
      %v745 = vpack.c.bf16 %v735, %v734
      %v746 = vpack.c.bf16 %v737, %v736
      %v747 = vpack.c.bf16 %v739, %v738
      %748 = vmatprep.subr.bf16.mxu0 0
      %749 = vmatpush1.bf16.msra.mxu0 %v740
      %750 = vmatprep.subr.bf16.mxu0 0
      %751 = vmatpush1.bf16.msra.mxu0 %v741
      %752 = vmatprep.subr.bf16.mxu0 0
      %753 = vmatpush1.bf16.msra.mxu0 %v742
      %754 = vmatprep.subr.bf16.mxu0 0
      %755 = vmatpush1.bf16.msra.mxu0 %v743
      %756 = vmatprep.subr.bf16.mxu0 0
      %757 = vmatpush1.bf16.msra.mxu0 %v744
      %758 = vmatprep.subr.bf16.mxu0 0
      %759 = vmatpush1.bf16.msra.mxu0 %v745
      %760 = vmatprep.subr.bf16.mxu0 0
      %761 = vmatpush1.bf16.msra.mxu0 %v746
      %762 = vmatprep.subr.bf16.mxu0 0
      %763 = vmatpush1.bf16.msra.mxu0 %v747
      %764 = vmatprep.subr.bf16.mxu0 0
      %765 = vmatpush1.bf16.msra.mxu0 0
      %766 = vmatprep.subr.bf16.mxu0 0
      %767 = vmatpush1.bf16.msra.mxu0 0
      %768 = vmatprep.subr.bf16.mxu0 0
      %769 = vmatpush1.bf16.msra.mxu0 0
      %770 = vmatprep.subr.bf16.mxu0 0
      %771 = vmatpush1.bf16.msra.mxu0 0
      %772 = vmatprep.subr.bf16.mxu0 0
      %773 = vmatpush1.bf16.msra.mxu0 0
      %774 = vmatprep.subr.bf16.mxu0 0
      %775 = vmatpush1.bf16.msra.mxu0 0
      %776 = vmatprep.subr.bf16.mxu0 0
      %777 = vmatpush1.bf16.msra.mxu0 0
      %778 = vmatprep.subr.bf16.mxu0 0
      %779 = vmatpush1.bf16.msra.mxu0 0
      %780 = vmatprep.mubr.bf16.mxu0 0
      %781 = vmatmul.mubr.bf16.gmra.mrb[0].mxu0 %v706
      %v782 = vpop.f32.mrb[0].mxu0
      %v783 = vadd.f32 0.0, %v782
      %v784 = vpop.f32.mrb[0].mxu0
      %v785 = vpop.f32.mrb[0].mxu0
      %v786 = vadd.f32 0.0, %v785
      %v787 = vpop.f32.mrb[0].mxu0
      %788 = vmatprep.mubr.bf16.mxu0 0
      %789 = vmatmul.mubr.bf16.gmra.mrb[0].mxu0 %v707
      %v790 = vpop.f32.mrb[0].mxu0
      %v791 = vadd.f32 0.0, %v790
      %v792 = vpop.f32.mrb[0].mxu0
      %v793 = vpop.f32.mrb[0].mxu0
      %v794 = vadd.f32 0.0, %v793
      %v795 = vpop.f32.mrb[0].mxu0
      %796 = vmatprep.mubr.bf16.mxu0 0
      %797 = vmatmul.mubr.bf16.gmra.mrb[0].mxu0 %v708
      %v798 = vpop.f32.mrb[0].mxu0
      %v799 = vadd.f32 0.0, %v798
      %v800 = vpop.f32.mrb[0].mxu0
      %v801 = vpop.f32.mrb[0].mxu0
      %v802 = vadd.f32 0.0, %v801
      %v803 = vpop.f32.mrb[0].mxu0
      %804 = vmatprep.mubr.bf16.mxu0 0
      %805 = vmatmul.mubr.bf16.gmra.mrb[0].mxu0 %v709
      %v806 = vpop.f32.mrb[0].mxu0
      %v807 = vadd.f32 0.0, %v806
      %v808 = vpop.f32.mrb[0].mxu0
      %v809 = vpop.f32.mrb[0].mxu0
      %v810 = vadd.f32 0.0, %v809
      %v811 = vpop.f32.mrb[0].mxu0
      %812 = vmatprep.mubr.bf16.mxu0 0
      %813 = vmatmul.mubr.bf16.gmra.mrb[0].mxu0 %v710
      %v814 = vpop.f32.mrb[0].mxu0
      %v815 = vadd.f32 0.0, %v814
      %v816 = vpop.f32.mrb[0].mxu0
      %v817 = vpop.f32.mrb[0].mxu0
      %v818 = vadd.f32 0.0, %v817
      %v819 = vpop.f32.mrb[0].mxu0
      %820 = vmatprep.mubr.bf16.mxu0 0
      %821 = vmatmul.mubr.bf16.gmra.mrb[0].mxu0 %v711
      %v822 = vpop.f32.mrb[0].mxu0
      %v823 = vadd.f32 0.0, %v822
      %v824 = vpop.f32.mrb[0].mxu0
      %v825 = vpop.f32.mrb[0].mxu0
      %v826 = vadd.f32 0.0, %v825
      %v827 = vpop.f32.mrb[0].mxu0
      %828 = vmatprep.mubr.bf16.mxu0 0
      %829 = vmatmul.mubr.bf16.gmra.mrb[0].mxu0 %v712
      %v830 = vpop.f32.mrb[0].mxu0
      %v831 = vadd.f32 0.0, %v830
      %v832 = vpop.f32.mrb[0].mxu0
      %v833 = vpop.f32.mrb[0].mxu0
      %v834 = vadd.f32 0.0, %v833
      %v835 = vpop.f32.mrb[0].mxu0
      %836 = vmatprep.mubr.bf16.mxu0 0
      %837 = vmatmul.mubr.bf16.gmra.mrb[0].mxu0 %v713
      %v838 = vpop.f32.mrb[0].mxu0
      %v839 = vadd.f32 0.0, %v838
      %v840 = vpop.f32.mrb[0].mxu0
      %v841 = vpop.f32.mrb[0].mxu0
      %v842 = vadd.f32 0.0, %v841
      %v843 = vpop.f32.mrb[0].mxu0
      %844 = vmatprep.mubr.bf16.mxu0 0
      %845 = vmatmul.mubr.bf16.gmra.mrb[0].mxu0 %v714
      %v846 = vpop.f32.mrb[0].mxu0
      %v847 = vadd.f32 0.0, %v846
      %v848 = vpop.f32.mrb[0].mxu0
      %v849 = vpop.f32.mrb[0].mxu0
      %v850 = vadd.f32 0.0, %v849
      %v851 = vpop.f32.mrb[0].mxu0
      %852 = vmatprep.mubr.bf16.mxu0 0
      %853 = vmatmul.mubr.bf16.gmra.mrb[0].mxu0 %v715
      %v854 = vpop.f32.mrb[0].mxu0
      %v855 = vadd.f32 0.0, %v854
      %v856 = vpop.f32.mrb[0].mxu0
      %v857 = vpop.f32.mrb[0].mxu0
      %v858 = vadd.f32 0.0, %v857
      %v859 = vpop.f32.mrb[0].mxu0
      %860 = vmatprep.mubr.bf16.mxu0 0
      %861 = vmatmul.mubr.bf16.gmra.mrb[0].mxu0 %v716
      %v862 = vpop.f32.mrb[0].mxu0
      %v863 = vadd.f32 0.0, %v862
      %v864 = vpop.f32.mrb[0].mxu0
      %v865 = vpop.f32.mrb[0].mxu0
      %v866 = vadd.f32 0.0, %v865
      %v867 = vpop.f32.mrb[0].mxu0
      %868 = vmatprep.mubr.bf16.mxu0 0
      %869 = vmatmul.mubr.bf16.gmra.mrb[0].mxu0 %v717
      %v870 = vpop.f32.mrb[0].mxu0
      %v871 = vadd.f32 0.0, %v870
      %v872 = vpop.f32.mrb[0].mxu0
      %v873 = vpop.f32.mrb[0].mxu0
      %v874 = vadd.f32 0.0, %v873
      %v875 = vpop.f32.mrb[0].mxu0
      %876 = vmatprep.mubr.bf16.mxu0 0
      %877 = vmatmul.mubr.bf16.gmra.mrb[0].mxu0 %v718
      %v878 = vpop.f32.mrb[0].mxu0
      %v879 = vadd.f32 0.0, %v878
      %v880 = vpop.f32.mrb[0].mxu0
      %v881 = vpop.f32.mrb[0].mxu0
      %v882 = vadd.f32 0.0, %v881
      %v883 = vpop.f32.mrb[0].mxu0
      %884 = vmatprep.mubr.bf16.mxu0 0
      %885 = vmatmul.mubr.bf16.gmra.mrb[0].mxu0 %v719
      %v886 = vpop.f32.mrb[0].mxu0
      %v887 = vadd.f32 0.0, %v886
      %v888 = vpop.f32.mrb[0].mxu0
      %v889 = vpop.f32.mrb[0].mxu0
      %v890 = vadd.f32 0.0, %v889
      %v891 = vpop.f32.mrb[0].mxu0
      %892 = vmatprep.mubr.bf16.mxu0 0
      %893 = vmatmul.mubr.bf16.gmra.mrb[0].mxu0 %v720
      %v894 = vpop.f32.mrb[0].mxu0
      %v895 = vadd.f32 0.0, %v894
      %v896 = vpop.f32.mrb[0].mxu0
      %v897 = vpop.f32.mrb[0].mxu0
      %v898 = vadd.f32 0.0, %v897
      %v899 = vpop.f32.mrb[0].mxu0
      %900 = vmatprep.mubr.bf16.mxu0 0
      %901 = vmatmul.mubr.bf16.gmra.mrb[0].mxu0 %v721
      %v902 = vpop.f32.mrb[0].mxu0
      %v903 = vadd.f32 0.0, %v902
      %v904 = vpop.f32.mrb[0].mxu0
      %v905 = vpop.f32.mrb[0].mxu0
      %v906 = vadd.f32 0.0, %v905
      %v907 = vpop.f32.mrb[0].mxu0
      %908 = vdwg.mxu0
      %v909 = vadd.f32 %v783, 0.0
      %v910 = vadd.f32 %v786, 0.0
      %v911 = vadd.f32 %v791, 0.0
      %v912 = vadd.f32 %v794, 0.0
      %v913 = vadd.f32 %v799, 0.0
      %v914 = vadd.f32 %v802, 0.0
      %v915 = vadd.f32 %v807, 0.0
      %v916 = vadd.f32 %v810, 0.0
      %v917 = vadd.f32 %v815, 0.0
      %v918 = vadd.f32 %v818, 0.0
      %v919 = vadd.f32 %v823, 0.0
      %v920 = vadd.f32 %v826, 0.0
      %v921 = vadd.f32 %v831, 0.0
      %v922 = vadd.f32 %v834, 0.0
      %v923 = vadd.f32 %v839, 0.0
      %v924 = vadd.f32 %v842, 0.0
      %v925 = vadd.f32 %v847, 0.0
      %v926 = vadd.f32 %v850, 0.0
      %v927 = vadd.f32 %v855, 0.0
      %v928 = vadd.f32 %v858, 0.0
      %v929 = vadd.f32 %v863, 0.0
      %v930 = vadd.f32 %v866, 0.0
      %v931 = vadd.f32 %v871, 0.0
      %v932 = vadd.f32 %v874, 0.0
      %v933 = vadd.f32 %v879, 0.0
      %v934 = vadd.f32 %v882, 0.0
      %v935 = vadd.f32 %v887, 0.0
      %v936 = vadd.f32 %v890, 0.0
      %v937 = vadd.f32 %v895, 0.0
      %v938 = vadd.f32 %v898, 0.0
      %v939 = vadd.f32 %v903, 0.0
      %v940 = vadd.f32 %v906, 0.0
      %vm941 = vcmp.gt.f32.partialorder %v320, 0.0
      %vm942 = vcmp.gt.f32.partialorder %v321, 0.0
      %975 = vset.pattern.permute.xlu0 0
      %976 = vperm.xlu0 %975, %v909
      %v977 = vpop.permute.xlu0 %976
      %978 = vset.pattern.permute.xlu0 0
      %979 = vperm.xlu0 %978, %v910
      %v980 = vpop.permute.xlu0 %979
      %981 = vset.pattern.permute.xlu0 0
      %982 = vperm.xlu0 %981, %v911
      %v983 = vpop.permute.xlu0 %982
      %984 = vset.pattern.permute.xlu0 0
      %985 = vperm.xlu0 %984, %v912
      %v986 = vpop.permute.xlu0 %985
      %987 = vset.pattern.permute.xlu0 0
      %988 = vperm.xlu0 %987, %v913
      %v989 = vpop.permute.xlu0 %988
      %990 = vset.pattern.permute.xlu0 0
      %991 = vperm.xlu0 %990, %v914
      %v992 = vpop.permute.xlu0 %991
      %993 = vset.pattern.permute.xlu0 0
      %994 = vperm.xlu0 %993, %v915
      %v995 = vpop.permute.xlu0 %994
      %996 = vset.pattern.permute.xlu0 0
      %997 = vperm.xlu0 %996, %v916
      %v998 = vpop.permute.xlu0 %997
      %999 = vset.pattern.permute.xlu0 0
      %1000 = vperm.xlu0 %999, %v917
      %v1001 = vpop.permute.xlu0 %1000
      %1002 = vset.pattern.permute.xlu0 0
      %1003 = vperm.xlu0 %1002, %v918
      %v1004 = vpop.permute.xlu0 %1003
      %1005 = vset.pattern.permute.xlu0 0
      %1006 = vperm.xlu0 %1005, %v919
      %v1007 = vpop.permute.xlu0 %1006
      %1008 = vset.pattern.permute.xlu0 0
      %1009 = vperm.xlu0 %1008, %v920
      %v1010 = vpop.permute.xlu0 %1009
      %1011 = vset.pattern.permute.xlu0 0
      %1012 = vperm.xlu0 %1011, %v921
      %v1013 = vpop.permute.xlu0 %1012
      %1014 = vset.pattern.permute.xlu0 0
      %1015 = vperm.xlu0 %1014, %v922
      %v1016 = vpop.permute.xlu0 %1015
      %1017 = vset.pattern.permute.xlu0 0
      %1018 = vperm.xlu0 %1017, %v923
      %v1019 = vpop.permute.xlu0 %1018
      %1020 = vset.pattern.permute.xlu0 0
      %1021 = vperm.xlu0 %1020, %v924
      %v1022 = vpop.permute.xlu0 %1021
      %1023 = vset.pattern.permute.xlu0 0
      %1024 = vperm.xlu0 %1023, %v925
      %v1025 = vpop.permute.xlu0 %1024
      %1026 = vset.pattern.permute.xlu0 0
      %1027 = vperm.xlu0 %1026, %v926
      %v1028 = vpop.permute.xlu0 %1027
      %1029 = vset.pattern.permute.xlu0 0
      %1030 = vperm.xlu0 %1029, %v927
      %v1031 = vpop.permute.xlu0 %1030
      %1032 = vset.pattern.permute.xlu0 0
      %1033 = vperm.xlu0 %1032, %v928
      %v1034 = vpop.permute.xlu0 %1033
      %1035 = vset.pattern.permute.xlu0 0
      %1036 = vperm.xlu0 %1035, %v929
      %v1037 = vpop.permute.xlu0 %1036
      %1038 = vset.pattern.permute.xlu0 0
      %1039 = vperm.xlu0 %1038, %v930
      %v1040 = vpop.permute.xlu0 %1039
      %1041 = vset.pattern.permute.xlu0 0
      %1042 = vperm.xlu0 %1041, %v931
      %v1043 = vpop.permute.xlu0 %1042
      %1044 = vset.pattern.permute.xlu0 0
      %1045 = vperm.xlu0 %1044, %v932
      %v1046 = vpop.permute.xlu0 %1045
      %1047 = vset.pattern.permute.xlu0 0
      %1048 = vperm.xlu0 %1047, %v933
      %v1049 = vpop.permute.xlu0 %1048
      %1050 = vset.pattern.permute.xlu0 0
      %1051 = vperm.xlu0 %1050, %v934
      %v1052 = vpop.permute.xlu0 %1051
      %1053 = vset.pattern.permute.xlu0 0
      %1054 = vperm.xlu0 %1053, %v935
      %v1055 = vpop.permute.xlu0 %1054
      %1056 = vset.pattern.permute.xlu0 0
      %1057 = vperm.xlu0 %1056, %v936
      %v1058 = vpop.permute.xlu0 %1057
      %1059 = vset.pattern.permute.xlu0 0
      %1060 = vperm.xlu0 %1059, %v937
      %v1061 = vpop.permute.xlu0 %1060
      %1062 = vset.pattern.permute.xlu0 0
      %1063 = vperm.xlu0 %1062, %v938
      %v1064 = vpop.permute.xlu0 %1063
      %1065 = vset.pattern.permute.xlu0 0
      %1066 = vperm.xlu0 %1065, %v939
      %v1067 = vpop.permute.xlu0 %1066
      %1068 = vset.pattern.permute.xlu0 0
      %1069 = vperm.xlu0 %1068, %v940
      %v1070 = vpop.permute.xlu0 %1069
      %v1071 = vlaneseq
      %v1072 = vshrl.u32 %v1071, 7
      %v1073 = vsub.s32 %v78, %v1072
      %v1074 = vrot.slane %v977, %v1073
      %v1075 = vadd.s32 %v78, 4294967288
      %v1076 = vlaneseq
      %v1077 = vshrl.u32 %v1076, 7
      %v1078 = vsub.s32 %v1075, %v1077
      %v1079 = vrot.slane %v980, %v1078
      %vm1080 = vcmask 130112
      %v1081 = vsel %vm1080, %v1079, %v1074
      %v1082 = vlaneseq
      %v1083 = vshrl.u32 %v1082, 7
      %v1084 = vsub.s32 %v78, %v1083
      %v1085 = vrot.slane %v983, %v1084
      %v1086 = vlaneseq
      %v1087 = vshrl.u32 %v1086, 7
      %v1088 = vsub.s32 %v1075, %v1087
      %v1089 = vrot.slane %v986, %v1088
      %v1090 = vsel %vm1080, %v1089, %v1085
      %v1091 = vlaneseq
      %v1092 = vshrl.u32 %v1091, 7
      %v1093 = vsub.s32 %v78, %v1092
      %v1094 = vrot.slane %v989, %v1093
      %v1095 = vlaneseq
      %v1096 = vshrl.u32 %v1095, 7
      %v1097 = vsub.s32 %v1075, %v1096
      %v1098 = vrot.slane %v992, %v1097
      %v1099 = vsel %vm1080, %v1098, %v1094
      %v1100 = vlaneseq
      %v1101 = vshrl.u32 %v1100, 7
      %v1102 = vsub.s32 %v78, %v1101
      %v1103 = vrot.slane %v995, %v1102
      %v1104 = vlaneseq
      %v1105 = vshrl.u32 %v1104, 7
      %v1106 = vsub.s32 %v1075, %v1105
      %v1107 = vrot.slane %v998, %v1106
      %v1108 = vsel %vm1080, %v1107, %v1103
      %v1109 = vlaneseq
      %v1110 = vshrl.u32 %v1109, 7
      %v1111 = vsub.s32 %v78, %v1110
      %v1112 = vrot.slane %v1001, %v1111
      %v1113 = vlaneseq
      %v1114 = vshrl.u32 %v1113, 7
      %v1115 = vsub.s32 %v1075, %v1114
      %v1116 = vrot.slane %v1004, %v1115
      %v1117 = vsel %vm1080, %v1116, %v1112
      %v1118 = vlaneseq
      %v1119 = vshrl.u32 %v1118, 7
      %v1120 = vsub.s32 %v78, %v1119
      %v1121 = vrot.slane %v1007, %v1120
      %v1122 = vlaneseq
      %v1123 = vshrl.u32 %v1122, 7
      %v1124 = vsub.s32 %v1075, %v1123
      %v1125 = vrot.slane %v1010, %v1124
      %v1126 = vsel %vm1080, %v1125, %v1121
      %v1127 = vlaneseq
      %v1128 = vshrl.u32 %v1127, 7
      %v1129 = vsub.s32 %v78, %v1128
      %v1130 = vrot.slane %v1013, %v1129
      %v1131 = vlaneseq
      %v1132 = vshrl.u32 %v1131, 7
      %v1133 = vsub.s32 %v1075, %v1132
      %v1134 = vrot.slane %v1016, %v1133
      %v1135 = vsel %vm1080, %v1134, %v1130
      %v1136 = vlaneseq
      %v1137 = vshrl.u32 %v1136, 7
      %v1138 = vsub.s32 %v78, %v1137
      %v1139 = vrot.slane %v1019, %v1138
      %v1140 = vlaneseq
      %v1141 = vshrl.u32 %v1140, 7
      %v1142 = vsub.s32 %v1075, %v1141
      %v1143 = vrot.slane %v1022, %v1142
      %v1144 = vsel %vm1080, %v1143, %v1139
      %v1145 = vlaneseq
      %v1146 = vshrl.u32 %v1145, 7
      %v1147 = vsub.s32 %v78, %v1146
      %v1148 = vrot.slane %v1025, %v1147
      %v1149 = vlaneseq
      %v1150 = vshrl.u32 %v1149, 7
      %v1151 = vsub.s32 %v1075, %v1150
      %v1152 = vrot.slane %v1028, %v1151
      %v1153 = vsel %vm1080, %v1152, %v1148
      %v1154 = vlaneseq
      %v1155 = vshrl.u32 %v1154, 7
      %v1156 = vsub.s32 %v78, %v1155
      %v1157 = vrot.slane %v1031, %v1156
      %v1158 = vlaneseq
      %v1159 = vshrl.u32 %v1158, 7
      %v1160 = vsub.s32 %v1075, %v1159
      %v1161 = vrot.slane %v1034, %v1160
      %v1162 = vsel %vm1080, %v1161, %v1157
      %v1163 = vlaneseq
      %v1164 = vshrl.u32 %v1163, 7
      %v1165 = vsub.s32 %v78, %v1164
      %v1166 = vrot.slane %v1037, %v1165
      %v1167 = vlaneseq
      %v1168 = vshrl.u32 %v1167, 7
      %v1169 = vsub.s32 %v1075, %v1168
      %v1170 = vrot.slane %v1040, %v1169
      %v1171 = vsel %vm1080, %v1170, %v1166
      %v1172 = vlaneseq
      %v1173 = vshrl.u32 %v1172, 7
      %v1174 = vsub.s32 %v78, %v1173
      %v1175 = vrot.slane %v1043, %v1174
      %v1176 = vlaneseq
      %v1177 = vshrl.u32 %v1176, 7
      %v1178 = vsub.s32 %v1075, %v1177
      %v1179 = vrot.slane %v1046, %v1178
      %v1180 = vsel %vm1080, %v1179, %v1175
      %v1181 = vlaneseq
      %v1182 = vshrl.u32 %v1181, 7
      %v1183 = vsub.s32 %v78, %v1182
      %v1184 = vrot.slane %v1049, %v1183
      %v1185 = vlaneseq
      %v1186 = vshrl.u32 %v1185, 7
      %v1187 = vsub.s32 %v1075, %v1186
      %v1188 = vrot.slane %v1052, %v1187
      %v1189 = vsel %vm1080, %v1188, %v1184
      %v1190 = vlaneseq
      %v1191 = vshrl.u32 %v1190, 7
      %v1192 = vsub.s32 %v78, %v1191
      %v1193 = vrot.slane %v1055, %v1192
      %v1194 = vlaneseq
      %v1195 = vshrl.u32 %v1194, 7
      %v1196 = vsub.s32 %v1075, %v1195
      %v1197 = vrot.slane %v1058, %v1196
      %v1198 = vsel %vm1080, %v1197, %v1193
      %v1199 = vlaneseq
      %v1200 = vshrl.u32 %v1199, 7
      %v1201 = vsub.s32 %v78, %v1200
      %v1202 = vrot.slane %v1061, %v1201
      %v1203 = vlaneseq
      %v1204 = vshrl.u32 %v1203, 7
      %v1205 = vsub.s32 %v1075, %v1204
      %v1206 = vrot.slane %v1064, %v1205
      %v1207 = vsel %vm1080, %v1206, %v1202
      %v1208 = vlaneseq
      %v1209 = vshrl.u32 %v1208, 7
      %v1210 = vsub.s32 %v78, %v1209
      %v1211 = vrot.slane %v1067, %v1210
      %v1212 = vlaneseq
      %v1213 = vshrl.u32 %v1212, 7
      %v1214 = vsub.s32 %v1075, %v1213
      %v1215 = vrot.slane %v1070, %v1214
      %v1216 = vsel %vm1080, %v1215, %v1211
      %vm1217 = vcmask 1041409
      %v1218 = vsel %vm1217, %v1090, %v1081
      %vm1219 = vcmask 1042434
      %v1220 = vsel %vm1219, %v1099, %v1218
      %vm1221 = vcmask 1043459
      %v1222 = vsel %vm1221, %v1108, %v1220
      %vm1223 = vcmask 1044484
      %v1224 = vsel %vm1223, %v1117, %v1222
      %vm1225 = vcmask 1045509
      %v1226 = vsel %vm1225, %v1126, %v1224
      %vm1227 = vcmask 1046534
      %v1228 = vsel %vm1227, %v1135, %v1226
      %vm1229 = vcmask 1047559
      %v1230 = vsel %vm1229, %v1144, %v1228
      %v1231 = vsel %vm1217, %v1162, %v1153
      %v1232 = vsel %vm1219, %v1171, %v1231
      %v1233 = vsel %vm1221, %v1180, %v1232
      %v1234 = vsel %vm1223, %v1189, %v1233
      %v1235 = vsel %vm1225, %v1198, %v1234
      %v1236 = vsel %vm1227, %v1207, %v1235
      %v1237 = vsel %vm1229, %v1216, %v1236
      %v1240 = vsel %vm941, %v1230, -1e+30
      %v1241 = vsel %vm942, %v1237, -1e+30
      %v1242 = vsel %vm87, %v1240, -inf
      %1243 = vmax.xlane.f32.xlu0 %v1242
      %v1244 = vpop.xlane.xlu0 %1243
      %v1245 = vsel %vm87, %v1241, -inf
      %1246 = vmax.xlane.f32.xlu0 %v1245
      %v1247 = vpop.xlane.xlu0 %1246
      %v1248 = vsub.f32 %v1240, %v1244
      %v1249 = vsub.f32 %v1241, %v1247
      %v1250 = vmul.f32 %v1248, 1.442695
      %v1251 = vpow.pop %v1250
      %v1252 = vmul.f32 %v1249, 1.442695
      %v1253 = vpow.pop %v1252
      %v1254 = vmul.f32 %v1251, %v320
      %v1255 = vmul.f32 %v1253, %v321
      %v1256 = vsel %vm87, %v1254, 0.0
      %1257 = vadd.xlane.f32.xlu0 %v1256
      %v1258 = vpop.xlane.xlu0 %1257
      %v1259 = vsel %vm87, %v1255, 0.0
      %1260 = vadd.xlane.f32.xlu0 %v1259
      %v1261 = vpop.xlane.xlu0 %1260
      %v1262 = vrcp.pop %v1258
      %v1263 = vrcp.pop %v1261
      %v1264 = vmul.f32 %v1254, %v1262
      %v1265 = vmul.f32 %v1255, %v1263
      %1266 = vset.pattern.permute.xlu0 1
      %1267 = vperm.xlu0 %1266, %v909
      %v1268 = vpop.permute.xlu0 %1267
      %1269 = vset.pattern.permute.xlu0 1
      %1270 = vperm.xlu0 %1269, %v910
      %v1271 = vpop.permute.xlu0 %1270
      %1272 = vset.pattern.permute.xlu0 1
      %1273 = vperm.xlu0 %1272, %v911
      %v1274 = vpop.permute.xlu0 %1273
      %1275 = vset.pattern.permute.xlu0 1
      %1276 = vperm.xlu0 %1275, %v912
      %v1277 = vpop.permute.xlu0 %1276
      %1278 = vset.pattern.permute.xlu0 1
      %1279 = vperm.xlu0 %1278, %v913
      %v1280 = vpop.permute.xlu0 %1279
      %1281 = vset.pattern.permute.xlu0 1
      %1282 = vperm.xlu0 %1281, %v914
      %v1283 = vpop.permute.xlu0 %1282
      %1284 = vset.pattern.permute.xlu0 1
      %1285 = vperm.xlu0 %1284, %v915
      %v1286 = vpop.permute.xlu0 %1285
      %1287 = vset.pattern.permute.xlu0 1
      %1288 = vperm.xlu0 %1287, %v916
      %v1289 = vpop.permute.xlu0 %1288
      %1290 = vset.pattern.permute.xlu0 1
      %1291 = vperm.xlu0 %1290, %v917
      %v1292 = vpop.permute.xlu0 %1291
      %1293 = vset.pattern.permute.xlu0 1
      %1294 = vperm.xlu0 %1293, %v918
      %v1295 = vpop.permute.xlu0 %1294
      %1296 = vset.pattern.permute.xlu0 1
      %1297 = vperm.xlu0 %1296, %v919
      %v1298 = vpop.permute.xlu0 %1297
      %1299 = vset.pattern.permute.xlu0 1
      %1300 = vperm.xlu0 %1299, %v920
      %v1301 = vpop.permute.xlu0 %1300
      %1302 = vset.pattern.permute.xlu0 1
      %1303 = vperm.xlu0 %1302, %v921
      %v1304 = vpop.permute.xlu0 %1303
      %1305 = vset.pattern.permute.xlu0 1
      %1306 = vperm.xlu0 %1305, %v922
      %v1307 = vpop.permute.xlu0 %1306
      %1308 = vset.pattern.permute.xlu0 1
      %1309 = vperm.xlu0 %1308, %v923
      %v1310 = vpop.permute.xlu0 %1309
      %1311 = vset.pattern.permute.xlu0 1
      %1312 = vperm.xlu0 %1311, %v924
      %v1313 = vpop.permute.xlu0 %1312
      %1314 = vset.pattern.permute.xlu0 1
      %1315 = vperm.xlu0 %1314, %v925
      %v1316 = vpop.permute.xlu0 %1315
      %1317 = vset.pattern.permute.xlu0 1
      %1318 = vperm.xlu0 %1317, %v926
      %v1319 = vpop.permute.xlu0 %1318
      %1320 = vset.pattern.permute.xlu0 1
      %1321 = vperm.xlu0 %1320, %v927
      %v1322 = vpop.permute.xlu0 %1321
      %1323 = vset.pattern.permute.xlu0 1
      %1324 = vperm.xlu0 %1323, %v928
      %v1325 = vpop.permute.xlu0 %1324
      %1326 = vset.pattern.permute.xlu0 1
      %1327 = vperm.xlu0 %1326, %v929
      %v1328 = vpop.permute.xlu0 %1327
      %1329 = vset.pattern.permute.xlu0 1
      %1330 = vperm.xlu0 %1329, %v930
      %v1331 = vpop.permute.xlu0 %1330
      %1332 = vset.pattern.permute.xlu0 1
      %1333 = vperm.xlu0 %1332, %v931
      %v1334 = vpop.permute.xlu0 %1333
      %1335 = vset.pattern.permute.xlu0 1
      %1336 = vperm.xlu0 %1335, %v932
      %v1337 = vpop.permute.xlu0 %1336
      %1338 = vset.pattern.permute.xlu0 1
      %1339 = vperm.xlu0 %1338, %v933
      %v1340 = vpop.permute.xlu0 %1339
      %1341 = vset.pattern.permute.xlu0 1
      %1342 = vperm.xlu0 %1341, %v934
      %v1343 = vpop.permute.xlu0 %1342
      %1344 = vset.pattern.permute.xlu0 1
      %1345 = vperm.xlu0 %1344, %v935
      %v1346 = vpop.permute.xlu0 %1345
      %1347 = vset.pattern.permute.xlu0 1
      %1348 = vperm.xlu0 %1347, %v936
      %v1349 = vpop.permute.xlu0 %1348
      %1350 = vset.pattern.permute.xlu0 1
      %1351 = vperm.xlu0 %1350, %v937
      %v1352 = vpop.permute.xlu0 %1351
      %1353 = vset.pattern.permute.xlu0 1
      %1354 = vperm.xlu0 %1353, %v938
      %v1355 = vpop.permute.xlu0 %1354
      %1356 = vset.pattern.permute.xlu0 1
      %1357 = vperm.xlu0 %1356, %v939
      %v1358 = vpop.permute.xlu0 %1357
      %1359 = vset.pattern.permute.xlu0 1
      %1360 = vperm.xlu0 %1359, %v940
      %v1361 = vpop.permute.xlu0 %1360
      %v1362 = vlaneseq
      %v1363 = vshrl.u32 %v1362, 7
      %v1364 = vsub.s32 %v78, %v1363
      %v1365 = vrot.slane %v1268, %v1364
      %v1366 = vlaneseq
      %v1367 = vshrl.u32 %v1366, 7
      %v1368 = vsub.s32 %v1075, %v1367
      %v1369 = vrot.slane %v1271, %v1368
      %v1370 = vsel %vm1080, %v1369, %v1365
      %v1371 = vlaneseq
      %v1372 = vshrl.u32 %v1371, 7
      %v1373 = vsub.s32 %v78, %v1372
      %v1374 = vrot.slane %v1274, %v1373
      %v1375 = vlaneseq
      %v1376 = vshrl.u32 %v1375, 7
      %v1377 = vsub.s32 %v1075, %v1376
      %v1378 = vrot.slane %v1277, %v1377
      %v1379 = vsel %vm1080, %v1378, %v1374
      %v1380 = vlaneseq
      %v1381 = vshrl.u32 %v1380, 7
      %v1382 = vsub.s32 %v78, %v1381
      %v1383 = vrot.slane %v1280, %v1382
      %v1384 = vlaneseq
      %v1385 = vshrl.u32 %v1384, 7
      %v1386 = vsub.s32 %v1075, %v1385
      %v1387 = vrot.slane %v1283, %v1386
      %v1388 = vsel %vm1080, %v1387, %v1383
      %v1389 = vlaneseq
      %v1390 = vshrl.u32 %v1389, 7
      %v1391 = vsub.s32 %v78, %v1390
      %v1392 = vrot.slane %v1286, %v1391
      %v1393 = vlaneseq
      %v1394 = vshrl.u32 %v1393, 7
      %v1395 = vsub.s32 %v1075, %v1394
      %v1396 = vrot.slane %v1289, %v1395
      %v1397 = vsel %vm1080, %v1396, %v1392
      %v1398 = vlaneseq
      %v1399 = vshrl.u32 %v1398, 7
      %v1400 = vsub.s32 %v78, %v1399
      %v1401 = vrot.slane %v1292, %v1400
      %v1402 = vlaneseq
      %v1403 = vshrl.u32 %v1402, 7
      %v1404 = vsub.s32 %v1075, %v1403
      %v1405 = vrot.slane %v1295, %v1404
      %v1406 = vsel %vm1080, %v1405, %v1401
      %v1407 = vlaneseq
      %v1408 = vshrl.u32 %v1407, 7
      %v1409 = vsub.s32 %v78, %v1408
      %v1410 = vrot.slane %v1298, %v1409
      %v1411 = vlaneseq
      %v1412 = vshrl.u32 %v1411, 7
      %v1413 = vsub.s32 %v1075, %v1412
      %v1414 = vrot.slane %v1301, %v1413
      %v1415 = vsel %vm1080, %v1414, %v1410
      %v1416 = vlaneseq
      %v1417 = vshrl.u32 %v1416, 7
      %v1418 = vsub.s32 %v78, %v1417
      %v1419 = vrot.slane %v1304, %v1418
      %v1420 = vlaneseq
      %v1421 = vshrl.u32 %v1420, 7
      %v1422 = vsub.s32 %v1075, %v1421
      %v1423 = vrot.slane %v1307, %v1422
      %v1424 = vsel %vm1080, %v1423, %v1419
      %v1425 = vlaneseq
      %v1426 = vshrl.u32 %v1425, 7
      %v1427 = vsub.s32 %v78, %v1426
      %v1428 = vrot.slane %v1310, %v1427
      %v1429 = vlaneseq
      %v1430 = vshrl.u32 %v1429, 7
      %v1431 = vsub.s32 %v1075, %v1430
      %v1432 = vrot.slane %v1313, %v1431
      %v1433 = vsel %vm1080, %v1432, %v1428
      %v1434 = vlaneseq
      %v1435 = vshrl.u32 %v1434, 7
      %v1436 = vsub.s32 %v78, %v1435
      %v1437 = vrot.slane %v1316, %v1436
      %v1438 = vlaneseq
      %v1439 = vshrl.u32 %v1438, 7
      %v1440 = vsub.s32 %v1075, %v1439
      %v1441 = vrot.slane %v1319, %v1440
      %v1442 = vsel %vm1080, %v1441, %v1437
      %v1443 = vlaneseq
      %v1444 = vshrl.u32 %v1443, 7
      %v1445 = vsub.s32 %v78, %v1444
      %v1446 = vrot.slane %v1322, %v1445
      %v1447 = vlaneseq
      %v1448 = vshrl.u32 %v1447, 7
      %v1449 = vsub.s32 %v1075, %v1448
      %v1450 = vrot.slane %v1325, %v1449
      %v1451 = vsel %vm1080, %v1450, %v1446
      %v1452 = vlaneseq
      %v1453 = vshrl.u32 %v1452, 7
      %v1454 = vsub.s32 %v78, %v1453
      %v1455 = vrot.slane %v1328, %v1454
      %v1456 = vlaneseq
      %v1457 = vshrl.u32 %v1456, 7
      %v1458 = vsub.s32 %v1075, %v1457
      %v1459 = vrot.slane %v1331, %v1458
      %v1460 = vsel %vm1080, %v1459, %v1455
      %v1461 = vlaneseq
      %v1462 = vshrl.u32 %v1461, 7
      %v1463 = vsub.s32 %v78, %v1462
      %v1464 = vrot.slane %v1334, %v1463
      %v1465 = vlaneseq
      %v1466 = vshrl.u32 %v1465, 7
      %v1467 = vsub.s32 %v1075, %v1466
      %v1468 = vrot.slane %v1337, %v1467
      %v1469 = vsel %vm1080, %v1468, %v1464
      %v1470 = vlaneseq
      %v1471 = vshrl.u32 %v1470, 7
      %v1472 = vsub.s32 %v78, %v1471
      %v1473 = vrot.slane %v1340, %v1472
      %v1474 = vlaneseq
      %v1475 = vshrl.u32 %v1474, 7
      %v1476 = vsub.s32 %v1075, %v1475
      %v1477 = vrot.slane %v1343, %v1476
      %v1478 = vsel %vm1080, %v1477, %v1473
      %v1479 = vlaneseq
      %v1480 = vshrl.u32 %v1479, 7
      %v1481 = vsub.s32 %v78, %v1480
      %v1482 = vrot.slane %v1346, %v1481
      %v1483 = vlaneseq
      %v1484 = vshrl.u32 %v1483, 7
      %v1485 = vsub.s32 %v1075, %v1484
      %v1486 = vrot.slane %v1349, %v1485
      %v1487 = vsel %vm1080, %v1486, %v1482
      %v1488 = vlaneseq
      %v1489 = vshrl.u32 %v1488, 7
      %v1490 = vsub.s32 %v78, %v1489
      %v1491 = vrot.slane %v1352, %v1490
      %v1492 = vlaneseq
      %v1493 = vshrl.u32 %v1492, 7
      %v1494 = vsub.s32 %v1075, %v1493
      %v1495 = vrot.slane %v1355, %v1494
      %v1496 = vsel %vm1080, %v1495, %v1491
      %v1497 = vlaneseq
      %v1498 = vshrl.u32 %v1497, 7
      %v1499 = vsub.s32 %v78, %v1498
      %v1500 = vrot.slane %v1358, %v1499
      %v1501 = vlaneseq
      %v1502 = vshrl.u32 %v1501, 7
      %v1503 = vsub.s32 %v1075, %v1502
      %v1504 = vrot.slane %v1361, %v1503
      %v1505 = vsel %vm1080, %v1504, %v1500
      %v1506 = vsel %vm1217, %v1379, %v1370
      %v1507 = vsel %vm1219, %v1388, %v1506
      %v1508 = vsel %vm1221, %v1397, %v1507
      %v1509 = vsel %vm1223, %v1406, %v1508
      %v1510 = vsel %vm1225, %v1415, %v1509
      %v1511 = vsel %vm1227, %v1424, %v1510
      %v1512 = vsel %vm1229, %v1433, %v1511
      %v1513 = vsel %vm1217, %v1451, %v1442
      %v1514 = vsel %vm1219, %v1460, %v1513
      %v1515 = vsel %vm1221, %v1469, %v1514
      %v1516 = vsel %vm1223, %v1478, %v1515
      %v1517 = vsel %vm1225, %v1487, %v1516
      %v1518 = vsel %vm1227, %v1496, %v1517
      %v1519 = vsel %vm1229, %v1505, %v1518
      %v1522 = vsel %vm941, %v1512, -1e+30
      %v1523 = vsel %vm942, %v1519, -1e+30
      %v1524 = vsel %vm87, %v1522, -inf
      %1525 = vmax.xlane.f32.xlu0 %v1524
      %v1526 = vpop.xlane.xlu0 %1525
      %v1527 = vsel %vm87, %v1523, -inf
      %1528 = vmax.xlane.f32.xlu0 %v1527
      %v1529 = vpop.xlane.xlu0 %1528
      %v1530 = vsub.f32 %v1522, %v1526
      %v1531 = vsub.f32 %v1523, %v1529
      %v1532 = vmul.f32 %v1530, 1.442695
      %v1533 = vpow.pop %v1532
      %v1534 = vmul.f32 %v1531, 1.442695
      %v1535 = vpow.pop %v1534
      %v1536 = vmul.f32 %v1533, %v320
      %v1537 = vmul.f32 %v1535, %v321
      %v1538 = vsel %vm87, %v1536, 0.0
      %1539 = vadd.xlane.f32.xlu0 %v1538
      %v1540 = vpop.xlane.xlu0 %1539
      %v1541 = vsel %vm87, %v1537, 0.0
      %1542 = vadd.xlane.f32.xlu0 %v1541
      %v1543 = vpop.xlane.xlu0 %1542
      %v1544 = vrcp.pop %v1540
      %v1545 = vrcp.pop %v1543
      %v1546 = vmul.f32 %v1536, %v1544
      %v1547 = vmul.f32 %v1537, %v1545
      %1548 = vset.pattern.permute.xlu0 2
      %1549 = vperm.xlu0 %1548, %v909
      %v1550 = vpop.permute.xlu0 %1549
      %1551 = vset.pattern.permute.xlu0 2
      %1552 = vperm.xlu0 %1551, %v910
      %v1553 = vpop.permute.xlu0 %1552
      %1554 = vset.pattern.permute.xlu0 2
      %1555 = vperm.xlu0 %1554, %v911
      %v1556 = vpop.permute.xlu0 %1555
      %1557 = vset.pattern.permute.xlu0 2
      %1558 = vperm.xlu0 %1557, %v912
      %v1559 = vpop.permute.xlu0 %1558
      %1560 = vset.pattern.permute.xlu0 2
      %1561 = vperm.xlu0 %1560, %v913
      %v1562 = vpop.permute.xlu0 %1561
      %1563 = vset.pattern.permute.xlu0 2
      %1564 = vperm.xlu0 %1563, %v914
      %v1565 = vpop.permute.xlu0 %1564
      %1566 = vset.pattern.permute.xlu0 2
      %1567 = vperm.xlu0 %1566, %v915
      %v1568 = vpop.permute.xlu0 %1567
      %1569 = vset.pattern.permute.xlu0 2
      %1570 = vperm.xlu0 %1569, %v916
      %v1571 = vpop.permute.xlu0 %1570
      %1572 = vset.pattern.permute.xlu0 2
      %1573 = vperm.xlu0 %1572, %v917
      %v1574 = vpop.permute.xlu0 %1573
      %1575 = vset.pattern.permute.xlu0 2
      %1576 = vperm.xlu0 %1575, %v918
      %v1577 = vpop.permute.xlu0 %1576
      %1578 = vset.pattern.permute.xlu0 2
      %1579 = vperm.xlu0 %1578, %v919
      %v1580 = vpop.permute.xlu0 %1579
      %1581 = vset.pattern.permute.xlu0 2
      %1582 = vperm.xlu0 %1581, %v920
      %v1583 = vpop.permute.xlu0 %1582
      %1584 = vset.pattern.permute.xlu0 2
      %1585 = vperm.xlu0 %1584, %v921
      %v1586 = vpop.permute.xlu0 %1585
      %1587 = vset.pattern.permute.xlu0 2
      %1588 = vperm.xlu0 %1587, %v922
      %v1589 = vpop.permute.xlu0 %1588
      %1590 = vset.pattern.permute.xlu0 2
      %1591 = vperm.xlu0 %1590, %v923
      %v1592 = vpop.permute.xlu0 %1591
      %1593 = vset.pattern.permute.xlu0 2
      %1594 = vperm.xlu0 %1593, %v924
      %v1595 = vpop.permute.xlu0 %1594
      %1596 = vset.pattern.permute.xlu0 2
      %1597 = vperm.xlu0 %1596, %v925
      %v1598 = vpop.permute.xlu0 %1597
      %1599 = vset.pattern.permute.xlu0 2
      %1600 = vperm.xlu0 %1599, %v926
      %v1601 = vpop.permute.xlu0 %1600
      %1602 = vset.pattern.permute.xlu0 2
      %1603 = vperm.xlu0 %1602, %v927
      %v1604 = vpop.permute.xlu0 %1603
      %1605 = vset.pattern.permute.xlu0 2
      %1606 = vperm.xlu0 %1605, %v928
      %v1607 = vpop.permute.xlu0 %1606
      %1608 = vset.pattern.permute.xlu0 2
      %1609 = vperm.xlu0 %1608, %v929
      %v1610 = vpop.permute.xlu0 %1609
      %1611 = vset.pattern.permute.xlu0 2
      %1612 = vperm.xlu0 %1611, %v930
      %v1613 = vpop.permute.xlu0 %1612
      %1614 = vset.pattern.permute.xlu0 2
      %1615 = vperm.xlu0 %1614, %v931
      %v1616 = vpop.permute.xlu0 %1615
      %1617 = vset.pattern.permute.xlu0 2
      %1618 = vperm.xlu0 %1617, %v932
      %v1619 = vpop.permute.xlu0 %1618
      %1620 = vset.pattern.permute.xlu0 2
      %1621 = vperm.xlu0 %1620, %v933
      %v1622 = vpop.permute.xlu0 %1621
      %1623 = vset.pattern.permute.xlu0 2
      %1624 = vperm.xlu0 %1623, %v934
      %v1625 = vpop.permute.xlu0 %1624
      %1626 = vset.pattern.permute.xlu0 2
      %1627 = vperm.xlu0 %1626, %v935
      %v1628 = vpop.permute.xlu0 %1627
      %1629 = vset.pattern.permute.xlu0 2
      %1630 = vperm.xlu0 %1629, %v936
      %v1631 = vpop.permute.xlu0 %1630
      %1632 = vset.pattern.permute.xlu0 2
      %1633 = vperm.xlu0 %1632, %v937
      %v1634 = vpop.permute.xlu0 %1633
      %1635 = vset.pattern.permute.xlu0 2
      %1636 = vperm.xlu0 %1635, %v938
      %v1637 = vpop.permute.xlu0 %1636
      %1638 = vset.pattern.permute.xlu0 2
      %1639 = vperm.xlu0 %1638, %v939
      %v1640 = vpop.permute.xlu0 %1639
      %1641 = vset.pattern.permute.xlu0 2
      %1642 = vperm.xlu0 %1641, %v940
      %v1643 = vpop.permute.xlu0 %1642
      %v1644 = vlaneseq
      %v1645 = vshrl.u32 %v1644, 7
      %v1646 = vsub.s32 %v78, %v1645
      %v1647 = vrot.slane %v1550, %v1646
      %v1648 = vlaneseq
      %v1649 = vshrl.u32 %v1648, 7
      %v1650 = vsub.s32 %v1075, %v1649
      %v1651 = vrot.slane %v1553, %v1650
      %v1652 = vsel %vm1080, %v1651, %v1647
      %v1653 = vlaneseq
      %v1654 = vshrl.u32 %v1653, 7
      %v1655 = vsub.s32 %v78, %v1654
      %v1656 = vrot.slane %v1556, %v1655
      %v1657 = vlaneseq
      %v1658 = vshrl.u32 %v1657, 7
      %v1659 = vsub.s32 %v1075, %v1658
      %v1660 = vrot.slane %v1559, %v1659
      %v1661 = vsel %vm1080, %v1660, %v1656
      %v1662 = vlaneseq
      %v1663 = vshrl.u32 %v1662, 7
      %v1664 = vsub.s32 %v78, %v1663
      %v1665 = vrot.slane %v1562, %v1664
      %v1666 = vlaneseq
      %v1667 = vshrl.u32 %v1666, 7
      %v1668 = vsub.s32 %v1075, %v1667
      %v1669 = vrot.slane %v1565, %v1668
      %v1670 = vsel %vm1080, %v1669, %v1665
      %v1671 = vlaneseq
      %v1672 = vshrl.u32 %v1671, 7
      %v1673 = vsub.s32 %v78, %v1672
      %v1674 = vrot.slane %v1568, %v1673
      %v1675 = vlaneseq
      %v1676 = vshrl.u32 %v1675, 7
      %v1677 = vsub.s32 %v1075, %v1676
      %v1678 = vrot.slane %v1571, %v1677
      %v1679 = vsel %vm1080, %v1678, %v1674
      %v1680 = vlaneseq
      %v1681 = vshrl.u32 %v1680, 7
      %v1682 = vsub.s32 %v78, %v1681
      %v1683 = vrot.slane %v1574, %v1682
      %v1684 = vlaneseq
      %v1685 = vshrl.u32 %v1684, 7
      %v1686 = vsub.s32 %v1075, %v1685
      %v1687 = vrot.slane %v1577, %v1686
      %v1688 = vsel %vm1080, %v1687, %v1683
      %v1689 = vlaneseq
      %v1690 = vshrl.u32 %v1689, 7
      %v1691 = vsub.s32 %v78, %v1690
      %v1692 = vrot.slane %v1580, %v1691
      %v1693 = vlaneseq
      %v1694 = vshrl.u32 %v1693, 7
      %v1695 = vsub.s32 %v1075, %v1694
      %v1696 = vrot.slane %v1583, %v1695
      %v1697 = vsel %vm1080, %v1696, %v1692
      %v1698 = vlaneseq
      %v1699 = vshrl.u32 %v1698, 7
      %v1700 = vsub.s32 %v78, %v1699
      %v1701 = vrot.slane %v1586, %v1700
      %v1702 = vlaneseq
      %v1703 = vshrl.u32 %v1702, 7
      %v1704 = vsub.s32 %v1075, %v1703
      %v1705 = vrot.slane %v1589, %v1704
      %v1706 = vsel %vm1080, %v1705, %v1701
      %v1707 = vlaneseq
      %v1708 = vshrl.u32 %v1707, 7
      %v1709 = vsub.s32 %v78, %v1708
      %v1710 = vrot.slane %v1592, %v1709
      %v1711 = vlaneseq
      %v1712 = vshrl.u32 %v1711, 7
      %v1713 = vsub.s32 %v1075, %v1712
      %v1714 = vrot.slane %v1595, %v1713
      %v1715 = vsel %vm1080, %v1714, %v1710
      %v1716 = vlaneseq
      %v1717 = vshrl.u32 %v1716, 7
      %v1718 = vsub.s32 %v78, %v1717
      %v1719 = vrot.slane %v1598, %v1718
      %v1720 = vlaneseq
      %v1721 = vshrl.u32 %v1720, 7
      %v1722 = vsub.s32 %v1075, %v1721
      %v1723 = vrot.slane %v1601, %v1722
      %v1724 = vsel %vm1080, %v1723, %v1719
      %v1725 = vlaneseq
      %v1726 = vshrl.u32 %v1725, 7
      %v1727 = vsub.s32 %v78, %v1726
      %v1728 = vrot.slane %v1604, %v1727
      %v1729 = vlaneseq
      %v1730 = vshrl.u32 %v1729, 7
      %v1731 = vsub.s32 %v1075, %v1730
      %v1732 = vrot.slane %v1607, %v1731
      %v1733 = vsel %vm1080, %v1732, %v1728
      %v1734 = vlaneseq
      %v1735 = vshrl.u32 %v1734, 7
      %v1736 = vsub.s32 %v78, %v1735
      %v1737 = vrot.slane %v1610, %v1736
      %v1738 = vlaneseq
      %v1739 = vshrl.u32 %v1738, 7
      %v1740 = vsub.s32 %v1075, %v1739
      %v1741 = vrot.slane %v1613, %v1740
      %v1742 = vsel %vm1080, %v1741, %v1737
      %v1743 = vlaneseq
      %v1744 = vshrl.u32 %v1743, 7
      %v1745 = vsub.s32 %v78, %v1744
      %v1746 = vrot.slane %v1616, %v1745
      %v1747 = vlaneseq
      %v1748 = vshrl.u32 %v1747, 7
      %v1749 = vsub.s32 %v1075, %v1748
      %v1750 = vrot.slane %v1619, %v1749
      %v1751 = vsel %vm1080, %v1750, %v1746
      %v1752 = vlaneseq
      %v1753 = vshrl.u32 %v1752, 7
      %v1754 = vsub.s32 %v78, %v1753
      %v1755 = vrot.slane %v1622, %v1754
      %v1756 = vlaneseq
      %v1757 = vshrl.u32 %v1756, 7
      %v1758 = vsub.s32 %v1075, %v1757
      %v1759 = vrot.slane %v1625, %v1758
      %v1760 = vsel %vm1080, %v1759, %v1755
      %v1761 = vlaneseq
      %v1762 = vshrl.u32 %v1761, 7
      %v1763 = vsub.s32 %v78, %v1762
      %v1764 = vrot.slane %v1628, %v1763
      %v1765 = vlaneseq
      %v1766 = vshrl.u32 %v1765, 7
      %v1767 = vsub.s32 %v1075, %v1766
      %v1768 = vrot.slane %v1631, %v1767
      %v1769 = vsel %vm1080, %v1768, %v1764
      %v1770 = vlaneseq
      %v1771 = vshrl.u32 %v1770, 7
      %v1772 = vsub.s32 %v78, %v1771
      %v1773 = vrot.slane %v1634, %v1772
      %v1774 = vlaneseq
      %v1775 = vshrl.u32 %v1774, 7
      %v1776 = vsub.s32 %v1075, %v1775
      %v1777 = vrot.slane %v1637, %v1776
      %v1778 = vsel %vm1080, %v1777, %v1773
      %v1779 = vlaneseq
      %v1780 = vshrl.u32 %v1779, 7
      %v1781 = vsub.s32 %v78, %v1780
      %v1782 = vrot.slane %v1640, %v1781
      %v1783 = vlaneseq
      %v1784 = vshrl.u32 %v1783, 7
      %v1785 = vsub.s32 %v1075, %v1784
      %v1786 = vrot.slane %v1643, %v1785
      %v1787 = vsel %vm1080, %v1786, %v1782
      %v1788 = vsel %vm1217, %v1661, %v1652
      %v1789 = vsel %vm1219, %v1670, %v1788
      %v1790 = vsel %vm1221, %v1679, %v1789
      %v1791 = vsel %vm1223, %v1688, %v1790
      %v1792 = vsel %vm1225, %v1697, %v1791
      %v1793 = vsel %vm1227, %v1706, %v1792
      %v1794 = vsel %vm1229, %v1715, %v1793
      %v1795 = vsel %vm1217, %v1733, %v1724
      %v1796 = vsel %vm1219, %v1742, %v1795
      %v1797 = vsel %vm1221, %v1751, %v1796
      %v1798 = vsel %vm1223, %v1760, %v1797
      %v1799 = vsel %vm1225, %v1769, %v1798
      %v1800 = vsel %vm1227, %v1778, %v1799
      %v1801 = vsel %vm1229, %v1787, %v1800
      %v1804 = vsel %vm941, %v1794, -1e+30
      %v1805 = vsel %vm942, %v1801, -1e+30
      %v1806 = vsel %vm87, %v1804, -inf
      %1807 = vmax.xlane.f32.xlu0 %v1806
      %v1808 = vpop.xlane.xlu0 %1807
      %v1809 = vsel %vm87, %v1805, -inf
      %1810 = vmax.xlane.f32.xlu0 %v1809
      %v1811 = vpop.xlane.xlu0 %1810
      %v1812 = vsub.f32 %v1804, %v1808
      %v1813 = vsub.f32 %v1805, %v1811
      %v1814 = vmul.f32 %v1812, 1.442695
      %v1815 = vpow.pop %v1814
      %v1816 = vmul.f32 %v1813, 1.442695
      %v1817 = vpow.pop %v1816
      %v1818 = vmul.f32 %v1815, %v320
      %v1819 = vmul.f32 %v1817, %v321
      %v1820 = vsel %vm87, %v1818, 0.0
      %1821 = vadd.xlane.f32.xlu0 %v1820
      %v1822 = vpop.xlane.xlu0 %1821
      %v1823 = vsel %vm87, %v1819, 0.0
      %1824 = vadd.xlane.f32.xlu0 %v1823
      %v1825 = vpop.xlane.xlu0 %1824
      %v1826 = vrcp.pop %v1822
      %v1827 = vrcp.pop %v1825
      %v1828 = vmul.f32 %v1818, %v1826
      %v1829 = vmul.f32 %v1819, %v1827
      %1830 = vset.pattern.permute.xlu0 3
      %1831 = vperm.xlu0 %1830, %v909
      %v1832 = vpop.permute.xlu0 %1831
      %1833 = vset.pattern.permute.xlu0 3
      %1834 = vperm.xlu0 %1833, %v910
      %v1835 = vpop.permute.xlu0 %1834
      %1836 = vset.pattern.permute.xlu0 3
      %1837 = vperm.xlu0 %1836, %v911
      %v1838 = vpop.permute.xlu0 %1837
      %1839 = vset.pattern.permute.xlu0 3
      %1840 = vperm.xlu0 %1839, %v912
      %v1841 = vpop.permute.xlu0 %1840
      %1842 = vset.pattern.permute.xlu0 3
      %1843 = vperm.xlu0 %1842, %v913
      %v1844 = vpop.permute.xlu0 %1843
      %1845 = vset.pattern.permute.xlu0 3
      %1846 = vperm.xlu0 %1845, %v914
      %v1847 = vpop.permute.xlu0 %1846
      %1848 = vset.pattern.permute.xlu0 3
      %1849 = vperm.xlu0 %1848, %v915
      %v1850 = vpop.permute.xlu0 %1849
      %1851 = vset.pattern.permute.xlu0 3
      %1852 = vperm.xlu0 %1851, %v916
      %v1853 = vpop.permute.xlu0 %1852
      %1854 = vset.pattern.permute.xlu0 3
      %1855 = vperm.xlu0 %1854, %v917
      %v1856 = vpop.permute.xlu0 %1855
      %1857 = vset.pattern.permute.xlu0 3
      %1858 = vperm.xlu0 %1857, %v918
      %v1859 = vpop.permute.xlu0 %1858
      %1860 = vset.pattern.permute.xlu0 3
      %1861 = vperm.xlu0 %1860, %v919
      %v1862 = vpop.permute.xlu0 %1861
      %1863 = vset.pattern.permute.xlu0 3
      %1864 = vperm.xlu0 %1863, %v920
      %v1865 = vpop.permute.xlu0 %1864
      %1866 = vset.pattern.permute.xlu0 3
      %1867 = vperm.xlu0 %1866, %v921
      %v1868 = vpop.permute.xlu0 %1867
      %1869 = vset.pattern.permute.xlu0 3
      %1870 = vperm.xlu0 %1869, %v922
      %v1871 = vpop.permute.xlu0 %1870
      %1872 = vset.pattern.permute.xlu0 3
      %1873 = vperm.xlu0 %1872, %v923
      %v1874 = vpop.permute.xlu0 %1873
      %1875 = vset.pattern.permute.xlu0 3
      %1876 = vperm.xlu0 %1875, %v924
      %v1877 = vpop.permute.xlu0 %1876
      %1878 = vset.pattern.permute.xlu0 3
      %1879 = vperm.xlu0 %1878, %v925
      %v1880 = vpop.permute.xlu0 %1879
      %1881 = vset.pattern.permute.xlu0 3
      %1882 = vperm.xlu0 %1881, %v926
      %v1883 = vpop.permute.xlu0 %1882
      %1884 = vset.pattern.permute.xlu0 3
      %1885 = vperm.xlu0 %1884, %v927
      %v1886 = vpop.permute.xlu0 %1885
      %1887 = vset.pattern.permute.xlu0 3
      %1888 = vperm.xlu0 %1887, %v928
      %v1889 = vpop.permute.xlu0 %1888
      %1890 = vset.pattern.permute.xlu0 3
      %1891 = vperm.xlu0 %1890, %v929
      %v1892 = vpop.permute.xlu0 %1891
      %1893 = vset.pattern.permute.xlu0 3
      %1894 = vperm.xlu0 %1893, %v930
      %v1895 = vpop.permute.xlu0 %1894
      %1896 = vset.pattern.permute.xlu0 3
      %1897 = vperm.xlu0 %1896, %v931
      %v1898 = vpop.permute.xlu0 %1897
      %1899 = vset.pattern.permute.xlu0 3
      %1900 = vperm.xlu0 %1899, %v932
      %v1901 = vpop.permute.xlu0 %1900
      %1902 = vset.pattern.permute.xlu0 3
      %1903 = vperm.xlu0 %1902, %v933
      %v1904 = vpop.permute.xlu0 %1903
      %1905 = vset.pattern.permute.xlu0 3
      %1906 = vperm.xlu0 %1905, %v934
      %v1907 = vpop.permute.xlu0 %1906
      %1908 = vset.pattern.permute.xlu0 3
      %1909 = vperm.xlu0 %1908, %v935
      %v1910 = vpop.permute.xlu0 %1909
      %1911 = vset.pattern.permute.xlu0 3
      %1912 = vperm.xlu0 %1911, %v936
      %v1913 = vpop.permute.xlu0 %1912
      %1914 = vset.pattern.permute.xlu0 3
      %1915 = vperm.xlu0 %1914, %v937
      %v1916 = vpop.permute.xlu0 %1915
      %1917 = vset.pattern.permute.xlu0 3
      %1918 = vperm.xlu0 %1917, %v938
      %v1919 = vpop.permute.xlu0 %1918
      %1920 = vset.pattern.permute.xlu0 3
      %1921 = vperm.xlu0 %1920, %v939
      %v1922 = vpop.permute.xlu0 %1921
      %1923 = vset.pattern.permute.xlu0 3
      %1924 = vperm.xlu0 %1923, %v940
      %v1925 = vpop.permute.xlu0 %1924
      %v1926 = vlaneseq
      %v1927 = vshrl.u32 %v1926, 7
      %v1928 = vsub.s32 %v78, %v1927
      %v1929 = vrot.slane %v1832, %v1928
      %v1930 = vlaneseq
      %v1931 = vshrl.u32 %v1930, 7
      %v1932 = vsub.s32 %v1075, %v1931
      %v1933 = vrot.slane %v1835, %v1932
      %v1934 = vsel %vm1080, %v1933, %v1929
      %v1935 = vlaneseq
      %v1936 = vshrl.u32 %v1935, 7
      %v1937 = vsub.s32 %v78, %v1936
      %v1938 = vrot.slane %v1838, %v1937
      %v1939 = vlaneseq
      %v1940 = vshrl.u32 %v1939, 7
      %v1941 = vsub.s32 %v1075, %v1940
      %v1942 = vrot.slane %v1841, %v1941
      %v1943 = vsel %vm1080, %v1942, %v1938
      %v1944 = vlaneseq
      %v1945 = vshrl.u32 %v1944, 7
      %v1946 = vsub.s32 %v78, %v1945
      %v1947 = vrot.slane %v1844, %v1946
      %v1948 = vlaneseq
      %v1949 = vshrl.u32 %v1948, 7
      %v1950 = vsub.s32 %v1075, %v1949
      %v1951 = vrot.slane %v1847, %v1950
      %v1952 = vsel %vm1080, %v1951, %v1947
      %v1953 = vlaneseq
      %v1954 = vshrl.u32 %v1953, 7
      %v1955 = vsub.s32 %v78, %v1954
      %v1956 = vrot.slane %v1850, %v1955
      %v1957 = vlaneseq
      %v1958 = vshrl.u32 %v1957, 7
      %v1959 = vsub.s32 %v1075, %v1958
      %v1960 = vrot.slane %v1853, %v1959
      %v1961 = vsel %vm1080, %v1960, %v1956
      %v1962 = vlaneseq
      %v1963 = vshrl.u32 %v1962, 7
      %v1964 = vsub.s32 %v78, %v1963
      %v1965 = vrot.slane %v1856, %v1964
      %v1966 = vlaneseq
      %v1967 = vshrl.u32 %v1966, 7
      %v1968 = vsub.s32 %v1075, %v1967
      %v1969 = vrot.slane %v1859, %v1968
      %v1970 = vsel %vm1080, %v1969, %v1965
      %v1971 = vlaneseq
      %v1972 = vshrl.u32 %v1971, 7
      %v1973 = vsub.s32 %v78, %v1972
      %v1974 = vrot.slane %v1862, %v1973
      %v1975 = vlaneseq
      %v1976 = vshrl.u32 %v1975, 7
      %v1977 = vsub.s32 %v1075, %v1976
      %v1978 = vrot.slane %v1865, %v1977
      %v1979 = vsel %vm1080, %v1978, %v1974
      %v1980 = vlaneseq
      %v1981 = vshrl.u32 %v1980, 7
      %v1982 = vsub.s32 %v78, %v1981
      %v1983 = vrot.slane %v1868, %v1982
      %v1984 = vlaneseq
      %v1985 = vshrl.u32 %v1984, 7
      %v1986 = vsub.s32 %v1075, %v1985
      %v1987 = vrot.slane %v1871, %v1986
      %v1988 = vsel %vm1080, %v1987, %v1983
      %v1989 = vlaneseq
      %v1990 = vshrl.u32 %v1989, 7
      %v1991 = vsub.s32 %v78, %v1990
      %v1992 = vrot.slane %v1874, %v1991
      %v1993 = vlaneseq
      %v1994 = vshrl.u32 %v1993, 7
      %v1995 = vsub.s32 %v1075, %v1994
      %v1996 = vrot.slane %v1877, %v1995
      %v1997 = vsel %vm1080, %v1996, %v1992
      %v1998 = vlaneseq
      %v1999 = vshrl.u32 %v1998, 7
      %v2000 = vsub.s32 %v78, %v1999
      %v2001 = vrot.slane %v1880, %v2000
      %v2002 = vlaneseq
      %v2003 = vshrl.u32 %v2002, 7
      %v2004 = vsub.s32 %v1075, %v2003
      %v2005 = vrot.slane %v1883, %v2004
      %v2006 = vsel %vm1080, %v2005, %v2001
      %v2007 = vlaneseq
      %v2008 = vshrl.u32 %v2007, 7
      %v2009 = vsub.s32 %v78, %v2008
      %v2010 = vrot.slane %v1886, %v2009
      %v2011 = vlaneseq
      %v2012 = vshrl.u32 %v2011, 7
      %v2013 = vsub.s32 %v1075, %v2012
      %v2014 = vrot.slane %v1889, %v2013
      %v2015 = vsel %vm1080, %v2014, %v2010
      %v2016 = vlaneseq
      %v2017 = vshrl.u32 %v2016, 7
      %v2018 = vsub.s32 %v78, %v2017
      %v2019 = vrot.slane %v1892, %v2018
      %v2020 = vlaneseq
      %v2021 = vshrl.u32 %v2020, 7
      %v2022 = vsub.s32 %v1075, %v2021
      %v2023 = vrot.slane %v1895, %v2022
      %v2024 = vsel %vm1080, %v2023, %v2019
      %v2025 = vlaneseq
      %v2026 = vshrl.u32 %v2025, 7
      %v2027 = vsub.s32 %v78, %v2026
      %v2028 = vrot.slane %v1898, %v2027
      %v2029 = vlaneseq
      %v2030 = vshrl.u32 %v2029, 7
      %v2031 = vsub.s32 %v1075, %v2030
      %v2032 = vrot.slane %v1901, %v2031
      %v2033 = vsel %vm1080, %v2032, %v2028
      %v2034 = vlaneseq
      %v2035 = vshrl.u32 %v2034, 7
      %v2036 = vsub.s32 %v78, %v2035
      %v2037 = vrot.slane %v1904, %v2036
      %v2038 = vlaneseq
      %v2039 = vshrl.u32 %v2038, 7
      %v2040 = vsub.s32 %v1075, %v2039
      %v2041 = vrot.slane %v1907, %v2040
      %v2042 = vsel %vm1080, %v2041, %v2037
      %v2043 = vlaneseq
      %v2044 = vshrl.u32 %v2043, 7
      %v2045 = vsub.s32 %v78, %v2044
      %v2046 = vrot.slane %v1910, %v2045
      %v2047 = vlaneseq
      %v2048 = vshrl.u32 %v2047, 7
      %v2049 = vsub.s32 %v1075, %v2048
      %v2050 = vrot.slane %v1913, %v2049
      %v2051 = vsel %vm1080, %v2050, %v2046
      %v2052 = vlaneseq
      %v2053 = vshrl.u32 %v2052, 7
      %v2054 = vsub.s32 %v78, %v2053
      %v2055 = vrot.slane %v1916, %v2054
      %v2056 = vlaneseq
      %v2057 = vshrl.u32 %v2056, 7
      %v2058 = vsub.s32 %v1075, %v2057
      %v2059 = vrot.slane %v1919, %v2058
      %v2060 = vsel %vm1080, %v2059, %v2055
      %v2061 = vlaneseq
      %v2062 = vshrl.u32 %v2061, 7
      %v2063 = vsub.s32 %v78, %v2062
      %v2064 = vrot.slane %v1922, %v2063
      %v2065 = vlaneseq
      %v2066 = vshrl.u32 %v2065, 7
      %v2067 = vsub.s32 %v1075, %v2066
      %v2068 = vrot.slane %v1925, %v2067
      %v2069 = vsel %vm1080, %v2068, %v2064
      %v2070 = vsel %vm1217, %v1943, %v1934
      %v2071 = vsel %vm1219, %v1952, %v2070
      %v2072 = vsel %vm1221, %v1961, %v2071
      %v2073 = vsel %vm1223, %v1970, %v2072
      %v2074 = vsel %vm1225, %v1979, %v2073
      %v2075 = vsel %vm1227, %v1988, %v2074
      %v2076 = vsel %vm1229, %v1997, %v2075
      %v2077 = vsel %vm1217, %v2015, %v2006
      %v2078 = vsel %vm1219, %v2024, %v2077
      %v2079 = vsel %vm1221, %v2033, %v2078
      %v2080 = vsel %vm1223, %v2042, %v2079
      %v2081 = vsel %vm1225, %v2051, %v2080
      %v2082 = vsel %vm1227, %v2060, %v2081
      %v2083 = vsel %vm1229, %v2069, %v2082
      %v2086 = vsel %vm941, %v2076, -1e+30
      %v2087 = vsel %vm942, %v2083, -1e+30
      %v2088 = vsel %vm87, %v2086, -inf
      %2089 = vmax.xlane.f32.xlu0 %v2088
      %v2090 = vpop.xlane.xlu0 %2089
      %v2091 = vsel %vm87, %v2087, -inf
      %2092 = vmax.xlane.f32.xlu0 %v2091
      %v2093 = vpop.xlane.xlu0 %2092
      %v2094 = vsub.f32 %v2086, %v2090
      %v2095 = vsub.f32 %v2087, %v2093
      %v2096 = vmul.f32 %v2094, 1.442695
      %v2097 = vpow.pop %v2096
      %v2098 = vmul.f32 %v2095, 1.442695
      %v2099 = vpow.pop %v2098
      %v2100 = vmul.f32 %v2097, %v320
      %v2101 = vmul.f32 %v2099, %v321
      %v2102 = vsel %vm87, %v2100, 0.0
      %2103 = vadd.xlane.f32.xlu0 %v2102
      %v2104 = vpop.xlane.xlu0 %2103
      %v2105 = vsel %vm87, %v2101, 0.0
      %2106 = vadd.xlane.f32.xlu0 %v2105
      %v2107 = vpop.xlane.xlu0 %2106
      %v2108 = vrcp.pop %v2104
      %v2109 = vrcp.pop %v2107
      %v2110 = vmul.f32 %v2100, %v2108
      %v2111 = vmul.f32 %v2101, %v2109
      %2114 = vrot.lane.b32.xlu0 %v1546, 16
      %v2115 = vpop.permute.xlu0 %2114
      %2116 = vrot.lane.b32.xlu0 %v1547, 16
      %v2117 = vpop.permute.xlu0 %2116
      %2122 = vrot.lane.b32.xlu0 %v1828, 32
      %v2123 = vpop.permute.xlu0 %2122
      %2124 = vrot.lane.b32.xlu0 %v1829, 32
      %v2125 = vpop.permute.xlu0 %2124
      %2130 = vrot.lane.b32.xlu0 %v2110, 48
      %v2131 = vpop.permute.xlu0 %2130
      %2132 = vrot.lane.b32.xlu0 %v2111, 48
      %v2133 = vpop.permute.xlu0 %2132
      %v2136 = vsel %vm87, %v1264, %v2115
      %v2137 = vsel %vm87, %v1265, %v2117
      %v2138 = vsel %vm225, %v2136, %v2123
      %v2139 = vsel %vm225, %v2137, %v2125
      %vm2140 = vcmask 392192
      %v2141 = vsel %vm2140, %v2138, %v2131
      %v2142 = vsel %vm2140, %v2139, %v2133
      %2145 = vrot.lane.b32.xlu0 %v390, 96
      %v2146 = vpop.permute.xlu0 %2145
      %2147 = vrot.lane.b32.xlu0 %v394, 96
      %v2148 = vpop.permute.xlu0 %2147
      %2151 = vrot.lane.b32.xlu0 %v390, 64
      %v2152 = vpop.permute.xlu0 %2151
      %2153 = vrot.lane.b32.xlu0 %v394, 64
      %v2154 = vpop.permute.xlu0 %2153
      %2157 = vrot.lane.b32.xlu0 %v390, 32
      %v2158 = vpop.permute.xlu0 %2157
      %2159 = vrot.lane.b32.xlu0 %v394, 32
      %v2160 = vpop.permute.xlu0 %2159
      %v2163 = vpack.c.bf16 %v2142, %v2141
      %v2164 = vpack.c.bf16 %v394, %v390
      %v2165 = vpack.c.bf16 %v2148, %v2146
      %v2166 = vpack.c.bf16 %v2154, %v2152
      %v2167 = vpack.c.bf16 %v2160, %v2158
      %vm2168 = vcmask 523264
      %v2170 = vsel %vm2168, %v2163, 0
      %2172 = vmatprep.subr.bf16.mxu0 0
      %2173 = vmatpush1.bf16.msra.mxu0 %v2164
      %2174 = vmatprep.subr.bf16.mxu0 0
      %2175 = vmatpush1.bf16.msra.mxu0 %v2165
      %2176 = vmatprep.subr.bf16.mxu0 0
      %2177 = vmatpush1.bf16.msra.mxu0 %v2166
      %2178 = vmatprep.subr.bf16.mxu0 0
      %2179 = vmatpush1.bf16.msra.mxu0 %v2167
      %2180 = vmatprep.subr.bf16.mxu0 0
      %2181 = vmatpush1.bf16.msra.mxu0 0
      %2182 = vmatprep.subr.bf16.mxu0 0
      %2183 = vmatpush1.bf16.msra.mxu0 0
      %2184 = vmatprep.subr.bf16.mxu0 0
      %2185 = vmatpush1.bf16.msra.mxu0 0
      %2186 = vmatprep.subr.bf16.mxu0 0
      %2187 = vmatpush1.bf16.msra.mxu0 0
      %2188 = vmatprep.subr.bf16.mxu0 0
      %2189 = vmatpush1.bf16.msra.mxu0 0
      %2190 = vmatprep.subr.bf16.mxu0 0
      %2191 = vmatpush1.bf16.msra.mxu0 0
      %2192 = vmatprep.subr.bf16.mxu0 0
      %2193 = vmatpush1.bf16.msra.mxu0 0
      %2194 = vmatprep.subr.bf16.mxu0 0
      %2195 = vmatpush1.bf16.msra.mxu0 0
      %2196 = vmatprep.subr.bf16.mxu0 0
      %2197 = vmatpush1.bf16.msra.mxu0 0
      %2198 = vmatprep.subr.bf16.mxu0 0
      %2199 = vmatpush1.bf16.msra.mxu0 0
      %2200 = vmatprep.subr.bf16.mxu0 0
      %2201 = vmatpush1.bf16.msra.mxu0 0
      %2202 = vmatprep.subr.bf16.mxu0 0
      %2203 = vmatpush1.bf16.msra.mxu0 0
      %2204 = vmatprep.mubr.bf16.mxu0 0
      %2205 = vmatmul.mubr.bf16.gmra.mrb[0].mxu0 %v2170
      %v2206 = vpop.f32.mrb[0].mxu0
      %v2207 = vadd.f32 0.0, %v2206
      %v2208 = vpop.f32.mrb[0].mxu0
      %v2209 = vpop.f32.mrb[0].mxu0
      %v2210 = vadd.f32 0.0, %v2209
      %v2211 = vpop.f32.mrb[0].mxu0
      %2212 = vdwg.mxu0
      %v2213 = vmul.f32 %v2207, 0.25
      %v2214 = vmul.f32 %v2210, 0.25
      %s2215 = scalar_lea.vmem %s14, %s203
      %v2216 = vld [vmem:[%s2215] sm:$0x1]
      %v2218 = vlaneseq
      %v2219 = vshrl.u32 %v2218, 7
      %v2220 = vsub.s32 0, %v2219
      %v2221 = vrot.slane %v2216, %v2220
      %v2223 = vadd.f32 %v2213, %v2221
      %v2224 = vadd.f32 %v2214, %v2221
      %v2225 = vmax.f32 %v2223, 0.0
      %v2226 = vmax.f32 %v2224, 0.0
      %s2227 = smul.u32 %s203, 32
      %s2228 = scalar_lea.vmem %s9, %s2227
      %v2229 = vld [vmem:[%s2228] sm:$0xff]
      %v2230 = vld [vmem:[%s2228 + $0x8] sm:$0xff]
      %v2231 = vld [vmem:[%s2228 + $0x10] sm:$0xff]
      %v2232 = vld [vmem:[%s2228 + $0x18] sm:$0xff]
      %s2233 = scalar_lea.vmem %s10, %s203
      %v2234 = vld [vmem:[%s2233] sm:$0x1]
      %v2235 = vsel %vm87, %v320, 0.0
      %2236 = vadd.xlane.f32.xlu0 %v2235
      %v2237 = vpop.xlane.xlu0 %2236
      %v2238 = vsel %vm87, %v321, 0.0
      %2239 = vadd.xlane.f32.xlu0 %v2238
      %v2240 = vpop.xlane.xlu0 %2239
      %v2241 = vrsqrt.pop %v2237
      %v2242 = vrsqrt.pop %v2240
      %v2243 = vpack.c.bf16 %v2226, %v2225
      %v2244 = vpack.c.bf16 %v2230, %v2229
      %v2245 = vpack.c.bf16 %v2232, %v2231
      %v2247 = vsel %vm225, %v2243, 0
      %2249 = vmatprep.subr.bf16.mxu0 0
      %2250 = vmatpush1.bf16.msra.mxu0 %v2244
      %2251 = vmatprep.subr.bf16.mxu0 0
      %2252 = vmatpush1.bf16.msra.mxu0 %v2245
      %2253 = vmatprep.subr.bf16.mxu0 0
      %2254 = vmatpush1.bf16.msra.mxu0 0
      %2255 = vmatprep.subr.bf16.mxu0 0
      %2256 = vmatpush1.bf16.msra.mxu0 0
      %2257 = vmatprep.subr.bf16.mxu0 0
      %2258 = vmatpush1.bf16.msra.mxu0 0
      %2259 = vmatprep.subr.bf16.mxu0 0
      %2260 = vmatpush1.bf16.msra.mxu0 0
      %2261 = vmatprep.subr.bf16.mxu0 0
      %2262 = vmatpush1.bf16.msra.mxu0 0
      %2263 = vmatprep.subr.bf16.mxu0 0
      %2264 = vmatpush1.bf16.msra.mxu0 0
      %2265 = vmatprep.subr.bf16.mxu0 0
      %2266 = vmatpush1.bf16.msra.mxu0 0
      %2267 = vmatprep.subr.bf16.mxu0 0
      %2268 = vmatpush1.bf16.msra.mxu0 0
      %2269 = vmatprep.subr.bf16.mxu0 0
      %2270 = vmatpush1.bf16.msra.mxu0 0
      %2271 = vmatprep.subr.bf16.mxu0 0
      %2272 = vmatpush1.bf16.msra.mxu0 0
      %2273 = vmatprep.subr.bf16.mxu0 0
      %2274 = vmatpush1.bf16.msra.mxu0 0
      %2275 = vmatprep.subr.bf16.mxu0 0
      %2276 = vmatpush1.bf16.msra.mxu0 0
      %2277 = vmatprep.subr.bf16.mxu0 0
      %2278 = vmatpush1.bf16.msra.mxu0 0
      %2279 = vmatprep.subr.bf16.mxu0 0
      %2280 = vmatpush1.bf16.msra.mxu0 0
      %2281 = vmatprep.mubr.bf16.mxu0 0
      %2282 = vmatmul.mubr.bf16.gmra.mrb[0].mxu0 %v2247
      %v2283 = vpop.f32.mrb[0].mxu0
      %v2284 = vadd.f32 0.0, %v2283
      %v2285 = vpop.f32.mrb[0].mxu0
      %v2286 = vpop.f32.mrb[0].mxu0
      %v2287 = vadd.f32 0.0, %v2286
      %v2288 = vpop.f32.mrb[0].mxu0
      %2289 = vdwg.mxu0
      %v2290 = vpack.c.bf16 %v321, %v320
      %v2291 = vmul.f32 %v2241, %v2284
      %v2292 = vmul.f32 %v2242, %v2287
      %v2293 = vpack.c.bf16 %v2292, %v2291
      %v2295 = vsel %vm87, %v2290, 0
      %2297 = vmatprep.subr.bf16.mxu0 0
      %2298 = vmatpush1.bf16.msra.mxu0 %v2293
      %2299 = vmatprep.subr.bf16.mxu0 0
      %2300 = vmatpush1.bf16.msra.mxu0 0
      %2301 = vmatprep.subr.bf16.mxu0 0
      %2302 = vmatpush1.bf16.msra.mxu0 0
      %2303 = vmatprep.subr.bf16.mxu0 0
      %2304 = vmatpush1.bf16.msra.mxu0 0
      %2305 = vmatprep.subr.bf16.mxu0 0
      %2306 = vmatpush1.bf16.msra.mxu0 0
      %2307 = vmatprep.subr.bf16.mxu0 0
      %2308 = vmatpush1.bf16.msra.mxu0 0
      %2309 = vmatprep.subr.bf16.mxu0 0
      %2310 = vmatpush1.bf16.msra.mxu0 0
      %2311 = vmatprep.subr.bf16.mxu0 0
      %2312 = vmatpush1.bf16.msra.mxu0 0
      %2313 = vmatprep.subr.bf16.mxu0 0
      %2314 = vmatpush1.bf16.msra.mxu0 0
      %2315 = vmatprep.subr.bf16.mxu0 0
      %2316 = vmatpush1.bf16.msra.mxu0 0
      %2317 = vmatprep.subr.bf16.mxu0 0
      %2318 = vmatpush1.bf16.msra.mxu0 0
      %2319 = vmatprep.subr.bf16.mxu0 0
      %2320 = vmatpush1.bf16.msra.mxu0 0
      %2321 = vmatprep.subr.bf16.mxu0 0
      %2322 = vmatpush1.bf16.msra.mxu0 0
      %2323 = vmatprep.subr.bf16.mxu0 0
      %2324 = vmatpush1.bf16.msra.mxu0 0
      %2325 = vmatprep.subr.bf16.mxu0 0
      %2326 = vmatpush1.bf16.msra.mxu0 0
      %2327 = vmatprep.subr.bf16.mxu0 0
      %2328 = vmatpush1.bf16.msra.mxu0 0
      %2329 = vmatprep.mubr.bf16.mxu0 0
      %2330 = vmatmul.mubr.bf16.gmra.mrb[0].mxu0 %v2295
      %v2331 = vpop.f32.mrb[0].mxu0
      %v2332 = vadd.f32 0.0, %v2331
      %v2333 = vpop.f32.mrb[0].mxu0
      %v2334 = vpop.f32.mrb[0].mxu0
      %v2335 = vadd.f32 0.0, %v2334
      %v2336 = vpop.f32.mrb[0].mxu0
      %2337 = vdwg.mxu0
      %v2338 = vmul.f32 %v2241, %v2332
      %v2339 = vmul.f32 %v2242, %v2335
      %v2341 = vlaneseq
      %v2342 = vshrl.u32 %v2341, 7
      %v2343 = vsub.s32 0, %v2342
      %v2344 = vrot.slane %v2234, %v2343
      %v2346 = vadd.f32 %v2338, %v2344
      %v2347 = vadd.f32 %v2339, %v2344
      %v2348 = vmax.f32 %v2346, 0.0
      %v2349 = vmax.f32 %v2347, 0.0
    $region86: #{deep_hgnn_forward.1} parent=1 // loop_footer
      %s207 = sadd.s32 1, %s203
    $region87: #{deep_hgnn_forward.1} parent=1 // loop_footer_branch
      %202 = sbr.rel target = $region83
    $region88: #{deep_hgnn_forward.1} parent=1 // loop_exit
      _
    %v2350 = vld [vmem:[%s2] sm:$0x3]
    %v2351 = vmul.f32 %v2350, %v214
    %v2353 = vsel %vm87, %v2351, 0
    %2355 = vmatprep.subr.mxu0 0.0
    %2356 = vmatpush1.msra.mxu0 %v208
    %2357 = vmatprep.subr.mxu0 0.0
    %2358 = vmatpush1.msra.mxu0 %v209
    %2359 = vmatprep.subr.mxu0 0.0
    %2360 = vmatpush1.msra.mxu0 0.0
    %2361 = vmatprep.subr.mxu0 0.0
    %2362 = vmatpush1.msra.mxu0 0.0
    %2363 = vmatprep.subr.mxu0 0.0
    %2364 = vmatpush1.msra.mxu0 0.0
    %2365 = vmatprep.subr.mxu0 0.0
    %2366 = vmatpush1.msra.mxu0 0.0
    %2367 = vmatprep.subr.mxu0 0.0
    %2368 = vmatpush1.msra.mxu0 0.0
    %2369 = vmatprep.subr.mxu0 0.0
    %2370 = vmatpush1.msra.mxu0 0.0
    %2371 = vmatprep.subr.mxu0 0.0
    %2372 = vmatpush1.msra.mxu0 0.0
    %2373 = vmatprep.subr.mxu0 0.0
    %2374 = vmatpush1.msra.mxu0 0.0
    %2375 = vmatprep.subr.mxu0 0.0
    %2376 = vmatpush1.msra.mxu0 0.0
    %2377 = vmatprep.subr.mxu0 0.0
    %2378 = vmatpush1.msra.mxu0 0.0
    %2379 = vmatprep.subr.mxu0 0.0
    %2380 = vmatpush1.msra.mxu0 0.0
    %2381 = vmatprep.subr.mxu0 0.0
    %2382 = vmatpush1.msra.mxu0 0.0
    %2383 = vmatprep.subr.mxu0 0.0
    %2384 = vmatpush1.msra.mxu0 0.0
    %2385 = vmatprep.subr.mxu0 0.0
    %2386 = vmatpush1.msra.mxu0 0.0
    %2387 = vmatprep.subr.mxu0 0.0
    %2388 = vmatpush1.msra.mxu0 0.0
    %2389 = vmatprep.subr.mxu0 0.0
    %2390 = vmatpush1.msra.mxu0 0.0
    %2391 = vmatprep.subr.mxu0 0.0
    %2392 = vmatpush1.msra.mxu0 0.0
    %2393 = vmatprep.subr.mxu0 0.0
    %2394 = vmatpush1.msra.mxu0 0.0
    %2395 = vmatprep.subr.mxu0 0.0
    %2396 = vmatpush1.msra.mxu0 0.0
    %2397 = vmatprep.subr.mxu0 0.0
    %2398 = vmatpush1.msra.mxu0 0.0
    %2399 = vmatprep.subr.mxu0 0.0
    %2400 = vmatpush1.msra.mxu0 0.0
    %2401 = vmatprep.subr.mxu0 0.0
    %2402 = vmatpush1.msra.mxu0 0.0
    %2403 = vmatprep.subr.mxu0 0.0
    %2404 = vmatpush1.msra.mxu0 0.0
    %2405 = vmatprep.subr.mxu0 0.0
    %2406 = vmatpush1.msra.mxu0 0.0
    %2407 = vmatprep.subr.mxu0 0.0
    %2408 = vmatpush1.msra.mxu0 0.0
    %2409 = vmatprep.subr.mxu0 0.0
    %2410 = vmatpush1.msra.mxu0 0.0
    %2411 = vmatprep.subr.mxu0 0.0
    %2412 = vmatpush1.msra.mxu0 0.0
    %2413 = vmatprep.subr.mxu0 0.0
    %2414 = vmatpush1.msra.mxu0 0.0
    %2415 = vmatprep.subr.mxu0 0.0
    %2416 = vmatpush1.msra.mxu0 0.0
    %2417 = vmatprep.subr.mxu0 0.0
    %2418 = vmatpush1.msra.mxu0 0.0
    %2419 = vmatprep.mubr.f32.mxu0 0.0
    %2420 = vmatmul.mubr.f32.gmra.mrb[0].mxu0 %v2353
    %v2421 = vpop.f32.mrb[0].mxu0
    %v2422 = vadd.f32 0.0, %v2421
    %v2423 = vpop.f32.mrb[0].mxu0
    %2424 = vdwg.mxu0
    %v2425 = vld [vmem:[%s5] sm:$0x3]
    %2427 = vset.pattern.permute.xlu0 0
    %2428 = vperm.xlu0 %2427, %v2425
    %v2429 = vpop.permute.xlu0 %2428
    %v2431 = vmul.f32 %v2422, %v2429
    %v2432 = vld [vmem:[%s3] sm:$0xff]
    %v2433 = vld [vmem:[%s3 + $0x8] sm:$0xff]
    %v2434 = vmul.f32 %v212, %v2432
    %v2435 = vmul.f32 %v213, %v2433
    %vm2436 = vcmp.gt.f32.partialorder %v2434, 0.0
    %vm2437 = vcmp.gt.f32.partialorder %v2435, 0.0
    %v2438 = vsel %vm2436, 1, 0
    %v2439 = vsel %vm2437, 1, 0
    %2440 = vset.pattern.permute.xlu0 0
    %2441 = vperm.xlu0 %2440, %v2438
    %v2442 = vpop.permute.xlu0 %2441
    %2443 = vset.pattern.permute.xlu0 0
    %2444 = vperm.xlu0 %2443, %v2439
    %v2445 = vpop.permute.xlu0 %2444
    %vm2446 = vcmp.eq.s32.totalorder %v2442, 1
    %vm2447 = vcmp.eq.s32.totalorder %v2445, 1
    %v2448 = vsel %vm2446, %v208, -1e+30
    %v2449 = vsel %vm2447, %v209, -1e+30
    %vm2450 = vcmask 261120
    %v2451 = vsel %vm2450, %v2448, -inf
    %v2452 = vsel %vm2450, %v2449, -inf
    %v2453 = vmax.f32 %v2451, %v2452
    %v2454 = vrot.slane %v2453, 4
    %v2455 = vmax.f32 %v2453, %v2454
    %v2456 = vrot.slane %v2455, 2
    %v2457 = vmax.f32 %v2455, %v2456
    %v2458 = vrot.slane %v2457, 1
    %v2459 = vmax.f32 %v2457, %v2458
    %2462 = vrot.lane.b32.xlu0 %v2432, 127
    %v2463 = vpop.permute.xlu0 %2462
    %2464 = vrot.lane.b32.xlu0 %v2433, 127
    %v2465 = vpop.permute.xlu0 %2464
    %v2468 = vmul.f32 %v212, %v2463
    %v2469 = vmul.f32 %v213, %v2465
    %vm2470 = vcmp.gt.f32.partialorder %v2468, 0.0
    %vm2471 = vcmp.gt.f32.partialorder %v2469, 0.0
    %v2472 = vsel %vm2470, 1, 0
    %v2473 = vsel %vm2471, 1, 0
    %2474 = vset.pattern.permute.xlu0 0
    %2475 = vperm.xlu0 %2474, %v2472
    %v2476 = vpop.permute.xlu0 %2475
    %2477 = vset.pattern.permute.xlu0 0
    %2478 = vperm.xlu0 %2477, %v2473
    %v2479 = vpop.permute.xlu0 %2478
    %vm2480 = vcmp.eq.s32.totalorder %v2476, 1
    %vm2481 = vcmp.eq.s32.totalorder %v2479, 1
    %v2482 = vsel %vm2480, %v208, -1e+30
    %v2483 = vsel %vm2481, %v209, -1e+30
    %v2484 = vsel %vm2450, %v2482, -inf
    %v2485 = vsel %vm2450, %v2483, -inf
    %v2486 = vmax.f32 %v2484, %v2485
    %v2487 = vrot.slane %v2486, 4
    %v2488 = vmax.f32 %v2486, %v2487
    %v2489 = vrot.slane %v2488, 2
    %v2490 = vmax.f32 %v2488, %v2489
    %v2491 = vrot.slane %v2490, 1
    %v2492 = vmax.f32 %v2490, %v2491
    %vm2493 = vcmask 1040384
    %v2494 = vsel %vm2493, %v2459, %v2492
    %v2495 = vadd.f32 %v2431, %v2494
    %v2496 = vadd.f32 %v2495, %v2422
    %v2497 = vld [vmem:[%s16] sm:$0xff]
    %v2498 = vld [vmem:[%s16 + $0x8] sm:$0xff]
    %v2499 = vld [vmem:[%s16 + $0x10] sm:$0xff]
    %v2500 = vld [vmem:[%s16 + $0x18] sm:$0xff]
    %v2501 = vld [vmem:[%s17] sm:$0x1]
    %v2503 = vlaneseq
    %v2504 = vshrl.u32 %v2503, 7
    %v2505 = vsub.s32 0, %v2504
    %v2506 = vrot.slane %v2501, %v2505
    %v2509 = vsel %vm2450, %v2496, 0
    %2511 = vmatprep.subr.mxu0 0.0
    %2512 = vmatpush1.msra.mxu0 %v2497
    %2513 = vmatprep.subr.mxu0 0.0
    %2514 = vmatpush1.msra.mxu0 %v2498
    %2515 = vmatprep.subr.mxu0 0.0
    %2516 = vmatpush1.msra.mxu0 %v2499
    %2517 = vmatprep.subr.mxu0 0.0
    %2518 = vmatpush1.msra.mxu0 %v2500
    %2519 = vmatprep.subr.mxu0 0.0
    %2520 = vmatpush1.msra.mxu0 0.0
    %2521 = vmatprep.subr.mxu0 0.0
    %2522 = vmatpush1.msra.mxu0 0.0
    %2523 = vmatprep.subr.mxu0 0.0
    %2524 = vmatpush1.msra.mxu0 0.0
    %2525 = vmatprep.subr.mxu0 0.0
    %2526 = vmatpush1.msra.mxu0 0.0
    %2527 = vmatprep.subr.mxu0 0.0
    %2528 = vmatpush1.msra.mxu0 0.0
    %2529 = vmatprep.subr.mxu0 0.0
    %2530 = vmatpush1.msra.mxu0 0.0
    %2531 = vmatprep.subr.mxu0 0.0
    %2532 = vmatpush1.msra.mxu0 0.0
    %2533 = vmatprep.subr.mxu0 0.0
    %2534 = vmatpush1.msra.mxu0 0.0
    %2535 = vmatprep.subr.mxu0 0.0
    %2536 = vmatpush1.msra.mxu0 0.0
    %2537 = vmatprep.subr.mxu0 0.0
    %2538 = vmatpush1.msra.mxu0 0.0
    %2539 = vmatprep.subr.mxu0 0.0
    %2540 = vmatpush1.msra.mxu0 0.0
    %2541 = vmatprep.subr.mxu0 0.0
    %2542 = vmatpush1.msra.mxu0 0.0
    %2543 = vmatprep.subr.mxu0 0.0
    %2544 = vmatpush1.msra.mxu0 0.0
    %2545 = vmatprep.subr.mxu0 0.0
    %2546 = vmatpush1.msra.mxu0 0.0
    %2547 = vmatprep.subr.mxu0 0.0
    %2548 = vmatpush1.msra.mxu0 0.0
    %2549 = vmatprep.subr.mxu0 0.0
    %2550 = vmatpush1.msra.mxu0 0.0
    %2551 = vmatprep.subr.mxu0 0.0
    %2552 = vmatpush1.msra.mxu0 0.0
    %2553 = vmatprep.subr.mxu0 0.0
    %2554 = vmatpush1.msra.mxu0 0.0
    %2555 = vmatprep.subr.mxu0 0.0
    %2556 = vmatpush1.msra.mxu0 0.0
    %2557 = vmatprep.subr.mxu0 0.0
    %2558 = vmatpush1.msra.mxu0 0.0
    %2559 = vmatprep.subr.mxu0 0.0
    %2560 = vmatpush1.msra.mxu0 0.0
    %2561 = vmatprep.subr.mxu0 0.0
    %2562 = vmatpush1.msra.mxu0 0.0
    %2563 = vmatprep.subr.mxu0 0.0
    %2564 = vmatpush1.msra.mxu0 0.0
    %2565 = vmatprep.subr.mxu0 0.0
    %2566 = vmatpush1.msra.mxu0 0.0
    %2567 = vmatprep.subr.mxu0 0.0
    %2568 = vmatpush1.msra.mxu0 0.0
    %2569 = vmatprep.subr.mxu0 0.0
    %2570 = vmatpush1.msra.mxu0 0.0
    %2571 = vmatprep.subr.mxu0 0.0
    %2572 = vmatpush1.msra.mxu0 0.0
    %2573 = vmatprep.subr.mxu0 0.0
    %2574 = vmatpush1.msra.mxu0 0.0
    %2575 = vmatprep.mubr.f32.mxu0 0.0
    %2576 = vmatmul.mubr.f32.gmra.mrb[0].mxu0 %v2509
    %v2577 = vpop.f32.mrb[0].mxu0
    %v2578 = vadd.f32 %v2506, %v2577
    %v2579 = vpop.f32.mrb[0].mxu0
    %2580 = vdwg.mxu0
    %v2581 = vmax.f32 %v2578, 0.0
    %v2582 = vld [vmem:[%s18] sm:$0xff]
    %v2583 = vld [vmem:[%s18 + $0x8] sm:$0xff]
    %v2584 = vld [vmem:[%s19] sm:$0x1]
    %v2586 = vlaneseq
    %v2587 = vshrl.u32 %v2586, 7
    %v2588 = vsub.s32 0, %v2587
    %v2589 = vrot.slane %v2584, %v2588
    %v2592 = vsel %vm87, %v2581, 0
    %2594 = vmatprep.subr.mxu0 0.0
    %2595 = vmatpush1.msra.mxu0 %v2582
    %2596 = vmatprep.subr.mxu0 0.0
    %2597 = vmatpush1.msra.mxu0 %v2583
    %2598 = vmatprep.subr.mxu0 0.0
    %2599 = vmatpush1.msra.mxu0 0.0
    %2600 = vmatprep.subr.mxu0 0.0
    %2601 = vmatpush1.msra.mxu0 0.0
    %2602 = vmatprep.subr.mxu0 0.0
    %2603 = vmatpush1.msra.mxu0 0.0
    %2604 = vmatprep.subr.mxu0 0.0
    %2605 = vmatpush1.msra.mxu0 0.0
    %2606 = vmatprep.subr.mxu0 0.0
    %2607 = vmatpush1.msra.mxu0 0.0
    %2608 = vmatprep.subr.mxu0 0.0
    %2609 = vmatpush1.msra.mxu0 0.0
    %2610 = vmatprep.subr.mxu0 0.0
    %2611 = vmatpush1.msra.mxu0 0.0
    %2612 = vmatprep.subr.mxu0 0.0
    %2613 = vmatpush1.msra.mxu0 0.0
    %2614 = vmatprep.subr.mxu0 0.0
    %2615 = vmatpush1.msra.mxu0 0.0
    %2616 = vmatprep.subr.mxu0 0.0
    %2617 = vmatpush1.msra.mxu0 0.0
    %2618 = vmatprep.subr.mxu0 0.0
    %2619 = vmatpush1.msra.mxu0 0.0
    %2620 = vmatprep.subr.mxu0 0.0
    %2621 = vmatpush1.msra.mxu0 0.0
    %2622 = vmatprep.subr.mxu0 0.0
    %2623 = vmatpush1.msra.mxu0 0.0
    %2624 = vmatprep.subr.mxu0 0.0
    %2625 = vmatpush1.msra.mxu0 0.0
    %2626 = vmatprep.subr.mxu0 0.0
    %2627 = vmatpush1.msra.mxu0 0.0
    %2628 = vmatprep.subr.mxu0 0.0
    %2629 = vmatpush1.msra.mxu0 0.0
    %2630 = vmatprep.subr.mxu0 0.0
    %2631 = vmatpush1.msra.mxu0 0.0
    %2632 = vmatprep.subr.mxu0 0.0
    %2633 = vmatpush1.msra.mxu0 0.0
    %2634 = vmatprep.subr.mxu0 0.0
    %2635 = vmatpush1.msra.mxu0 0.0
    %2636 = vmatprep.subr.mxu0 0.0
    %2637 = vmatpush1.msra.mxu0 0.0
    %2638 = vmatprep.subr.mxu0 0.0
    %2639 = vmatpush1.msra.mxu0 0.0
    %2640 = vmatprep.subr.mxu0 0.0
    %2641 = vmatpush1.msra.mxu0 0.0
    %2642 = vmatprep.subr.mxu0 0.0
    %2643 = vmatpush1.msra.mxu0 0.0
    %2644 = vmatprep.subr.mxu0 0.0
    %2645 = vmatpush1.msra.mxu0 0.0
    %2646 = vmatprep.subr.mxu0 0.0
    %2647 = vmatpush1.msra.mxu0 0.0
    %2648 = vmatprep.subr.mxu0 0.0
    %2649 = vmatpush1.msra.mxu0 0.0
    %2650 = vmatprep.subr.mxu0 0.0
    %2651 = vmatpush1.msra.mxu0 0.0
    %2652 = vmatprep.subr.mxu0 0.0
    %2653 = vmatpush1.msra.mxu0 0.0
    %2654 = vmatprep.subr.mxu0 0.0
    %2655 = vmatpush1.msra.mxu0 0.0
    %2656 = vmatprep.subr.mxu0 0.0
    %2657 = vmatpush1.msra.mxu0 0.0
    %2658 = vmatprep.mubr.f32.mxu0 0.0
    %2659 = vmatmul.mubr.f32.gmra.mrb[0].mxu0 %v2592
    %v2660 = vpop.f32.mrb[0].mxu0
    %v2661 = vadd.f32 %v2589, %v2660
    %v2662 = vpop.f32.mrb[0].mxu0
    %2663 = vdwg.mxu0
    %vm2664 = vcmask 25600
    %2665 = vst.msk [vmem:[#allocation2] sm:$0x3] %vm2664, %v2661
    // Predicated region
    $region89: #{deep_hgnn_forward.1} parent=1 // pred_check
      _
    $region90: #{deep_hgnn_forward.1} parent=1 // pred_check_branch
      %2667 = sbr.rel (0) target = $region92
    $region91: #{deep_hgnn_forward.1} parent=1 // pred_region
      %s2669 = ssub.s32 32, 32
      %2670 = vsyncadd [#allocation3], %s2669
      %s2672 = sshll.u32 [#allocation2], 4
      %s2673 = int_to_ptr.vmem [resolvable:$true] %s2672
      %2675 = dma.vmem_to_hbm [thread:$0]  %s2673, 32, %s20, [#allocation3]
    $region92: #{deep_hgnn_forward.1} parent=1 // pred_fallthru
      _
    // Predicated region
    $region93: #{deep_hgnn_forward.1} parent=1 // pred_check
      _
    $region94: #{deep_hgnn_forward.1} parent=1 // pred_check_branch
      %2677 = sbr.rel (0) target = $region96
    $region95: #{deep_hgnn_forward.1} parent=1 // pred_region
      %2678 = dma.done [#allocation3], 32
    $region96: #{deep_hgnn_forward.1} parent=1 // pred_fallthru
      _
    %2679 = vsyncpa [#allocation3], 1

</llo_original>
